<compile_context>
chip_gen: v7x
topology: tpu7x:2x2x1
jax: 0.10.0
libtpu: 0.0.40
codegen_flags: <defaults>
</compile_context>

<pallas_src>
import functools

import numpy as np
import jax
import jax.numpy as jnp
from jax import lax
from jax.experimental import pallas as pl
from jax.experimental.pallas import tpu as pltpu


# --------------------------------------------------------------------------- constants
def _rotary_tables(S, H, theta=10000.0):
    # rotary-embedding-torch convention: freqs repeated pairwise [f0,f0,f1,f1,...]
    inv_freq = 1.0 / (theta ** (np.arange(0, H, 2, dtype=np.float32) / H))
    pos = np.arange(S, dtype=np.float32)
    freqs = pos[:, None] * inv_freq[None, :]
    freqs = np.repeat(freqs, 2, axis=-1)                       # (S, H)
    return jnp.asarray(np.cos(freqs)), jnp.asarray(np.sin(freqs))


def _rotate_half_matrix(H):
    # rotate_half(x) == x @ R with interleaved pairs: out[2i] = -x[2i+1], out[2i+1] = x[2i]
    r = np.zeros((H, H), np.float32)
    idx = np.arange(0, H, 2)
    r[idx + 1, idx] = -1.0
    r[idx, idx + 1] = 1.0
    return jnp.asarray(r)


# --------------------------------------------------------------------------- fused kernel
def _encoder_kernel(a_ref, wemb_ref, cos_ref, sin_ref, rot_ref, wout_ref, bout_ref,
                    wq_ref, bq_ref, wk_ref, bk_ref, wv_ref, bv_ref, wo_ref, bo_ref,
                    g1_ref, be1_ref, w1_ref, b1_ref, w3_ref, b3_ref, w2_ref, b2_ref,
                    g2_ref, be2_ref, out_ref, h_s, *, nheads):
    f32 = jnp.float32
    l = pl.program_id(1)
    nl = pl.num_programs(1)

    # ---- embeddings + rotary PE: only on the first layer step of each batch element ----
    @pl.when(l == 0)
    def _embed():
        # one matmul implements emb_in(x)+emb_t(t) for token rows and emb_y(one_hot(y))
        # for the class-token row (augmented-input packing, see wrapper).
        h0 = jnp.dot(a_ref[0], wemb_ref[...], preferred_element_type=f32)     # (S, H)
        h_s[...] = (h0 * cos_ref[...]
                    + jnp.dot(h0, rot_ref[...], preferred_element_type=f32) * sin_ref[...])

    x = h_s[...]                                                              # (S, H)

    # ---- multi-head self-attention (heads unrolled, out-proj accumulated per head) ----
    # wq/bq arrive pre-scaled by 1/sqrt(dh) (folded at parameter-packing time).
    attn = bo_ref[0]                                                          # (1, H)
    for hh in range(nheads):
        q = jnp.dot(x, wq_ref[0, hh], preferred_element_type=f32) + bq_ref[0, hh]
        k = jnp.dot(x, wk_ref[0, hh], preferred_element_type=f32) + bk_ref[0, hh]
        v = jnp.dot(x, wv_ref[0, hh], preferred_element_type=f32) + bv_ref[0, hh]
        # q @ k^T without an explicit transpose (contract last dims of both operands)
        s = lax.dot_general(q, k, (((1,), (1,)), ((), ())),
                            preferred_element_type=f32)                       # (S, S)
        s = s - jnp.max(s, axis=-1, keepdims=True)
        p = jnp.exp(s)
        p = p * pl.reciprocal(jnp.sum(p, axis=-1, keepdims=True), approx=True)
        o = jnp.dot(p, v, preferred_element_type=f32)                         # (S, dh)
        attn = attn + jnp.dot(o, wo_ref[0, hh], preferred_element_type=f32)   # (S, H)

    # ---- GroupNorm(1, S): normalize over all (S, H), affine per sequence position ----
    def _group_norm(v, g, be):
        mean = jnp.mean(v)
        var = jnp.mean(jnp.square(v - mean))
        return (v - mean) * lax.rsqrt(var + 1e-5) * g + be

    h1 = _group_norm(x + attn, g1_ref[0], be1_ref[0])

    # ---- SwiGLU feed-forward: w2(silu(w1(x)) * w3(x))  (dropout2 = identity, eval) ----
    a1 = jnp.dot(h1, w1_ref[0], preferred_element_type=f32) + b1_ref[0]
    a3 = jnp.dot(h1, w3_ref[0], preferred_element_type=f32) + b3_ref[0]
    ff = jnp.dot(a1 * jax.nn.sigmoid(a1) * a3, w2_ref[0],
                 preferred_element_type=f32) + b2_ref[0]

    h2 = _group_norm(h1 + ff, g2_ref[0], be2_ref[0])
    h_s[...] = h2                                                             # carry to next layer

    # ---- final output projection (class-token row dropped outside, a free XLA slice) ----
    @pl.when(l == nl - 1)
    def _final():
        out_ref[0] = jnp.dot(h2, wout_ref[...], preferred_element_type=f32) + bout_ref[...]


# --------------------------------------------------------------------------- forward wrapper
def make_forward(nheads):
    def forward(params, t, x, y):
        b, seq_len, pt, d = x.shape
        n_tok = seq_len * pt
        S = n_tok + 1
        F, H = params["w_emb"].shape
        nc = F - d - 3
        L = params["wq"].shape[0]

        # --- augmented embedding input (cheap one-time XLA glue):
        # columns = [x (d) | one_hot(y) (nc) | is_y (1) | is_x (1) | t (1)]
        x2 = x.reshape(b, n_tok, d).astype(jnp.float32)
        t_col = jnp.broadcast_to(t.astype(jnp.float32).reshape(b, 1, 1), (b, n_tok, 1))
        rows_x = jnp.concatenate(
            [x2,
             jnp.zeros((b, n_tok, nc + 1), jnp.float32),
             jnp.ones((b, n_tok, 1), jnp.float32),
             t_col], axis=-1)
        y_oh = jax.nn.one_hot(y, nc, dtype=jnp.float32).reshape(b, 1, nc)
        row_y = jnp.concatenate(
            [jnp.zeros((b, 1, d), jnp.float32), y_oh,
             jnp.ones((b, 1, 1), jnp.float32),
             jnp.zeros((b, 1, 2), jnp.float32)], axis=-1)
        a_in = jnp.concatenate([row_y, rows_x], axis=1)                        # (b, S, F)

        cos_t, sin_t = _rotary_tables(S, H)
        rot_m = _rotate_half_matrix(H)

        def batch_spec(arr):
            n = arr.ndim
            return pl.BlockSpec((1,) + tuple(arr.shape[1:]),
                                lambda bb, ll: (bb,) + (0,) * (n - 1))

        def shared_spec(arr):
            n = arr.ndim
            return pl.BlockSpec(tuple(arr.shape), lambda bb, ll: (0,) * n)

        def layer_spec(arr):
            n = arr.ndim
            return pl.BlockSpec((1,) + tuple(arr.shape[1:]),
                                lambda bb, ll: (ll,) + (0,) * (n - 1))

        layer_keys = ("wq", "bq", "wk", "bk", "wv", "bv", "wo", "bo",
                      "gn1_g", "gn1_b", "w1", "b1", "w3", "b3", "w2", "b2",
                      "gn2_g", "gn2_b")

        inputs = (a_in, params["w_emb"], cos_t, sin_t, rot_m,
                  params["emb_out_w"], params["emb_out_b"]) + tuple(params[k] for k in layer_keys)

        in_specs = ([batch_spec(a_in),
                     shared_spec(params["w_emb"]), shared_spec(cos_t), shared_spec(sin_t),
                     shared_spec(rot_m), shared_spec(params["emb_out_w"]),
                     shared_spec(params["emb_out_b"])]
                    + [layer_spec(params[k]) for k in layer_keys])

        out = pl.pallas_call(
            functools.partial(_encoder_kernel, nheads=nheads),
            grid=(b, L),
            in_specs=in_specs,
            out_specs=pl.BlockSpec((1, S, d), lambda bb, ll: (bb, 0, 0)),
            out_shape=jax.ShapeDtypeStruct((b, S, d), jnp.float32),
            scratch_shapes=[pltpu.VMEM((S, H), jnp.float32)],
            compiler_params=pltpu.CompilerParams(
                dimension_semantics=("parallel", "arbitrary")),
        )(*inputs)

        # drop class token, restore skeleton layout
        return out[:, 1:, :].reshape(b, seq_len, pt, d)

    return jax.jit(forward)


# --------------------------------------------------------------------------- parameters
def init_params(key, hidden, nheads, nlayers, n_clusters, skel_size, seq_len):
    pt, d = skel_size
    S = seq_len * pt + 1
    hd = int(hidden * 4 * (2 / 3))
    dh = hidden // nheads
    scale = 1.0 / (dh ** 0.5)

    def dense(k, fi, fo):
        kw, kb = jax.random.split(k)
        w = jax.random.normal(kw, (fi, fo), jnp.float32) * 0.02
        b_ = jax.random.normal(kb, (1, fo), jnp.float32) * 0.02
        return w, b_

    key, k0, k1, k2, k3 = jax.random.split(key, 5)
    emb_t_w, emb_t_b = dense(k0, 1, hidden)
    emb_y_w, emb_y_b = dense(k1, n_clusters, hidden)
    emb_in_w, emb_in_b = dense(k2, d, hidden)
    emb_out_w, emb_out_b = dense(k3, hidden, d)

    params = {
        # packed embedding weight for the augmented-input matmul:
        # rows = [emb_in_w (d) | emb_y_w (nc) | emb_y_b | emb_in_b + emb_t_b | emb_t_w]
        "w_emb": jnp.concatenate(
            [emb_in_w, emb_y_w, emb_y_b, emb_in_b + emb_t_b, emb_t_w], axis=0),
        "emb_out_w": emb_out_w,
        "emb_out_b": emb_out_b,
    }

    wq, bq, wk, bk, wv, bv, wo, bo = ([] for _ in range(8))
    w1, b1, w3, b3, w2, b2 = ([] for _ in range(6))
    for _ in range(nlayers):
        key, ka, kb_, kc, kd, ke = jax.random.split(key, 6)
        in_w, in_b = dense(ka, hidden, 3 * hidden)              # fused in_proj (H, 3H)
        qw, kw_, vw = jnp.split(in_w, 3, axis=1)
        qb, kb2, vb = jnp.split(in_b, 3, axis=1)
        # fold the attention scale 1/sqrt(dh) into the query projection (one-time, free)
        qw = qw * scale
        qb = qb * scale
        # pre-split per head: (H, H) -> (nheads, H, dh); biases -> (nheads, 1, dh)
        wq.append(qw.reshape(hidden, nheads, dh).transpose(1, 0, 2))
        wk.append(kw_.reshape(hidden, nheads, dh).transpose(1, 0, 2))
        wv.append(vw.reshape(hidden, nheads, dh).transpose(1, 0, 2))
        bq.append(qb.reshape(1, nheads, dh).transpose(1, 0, 2))
        bk.append(kb2.reshape(1, nheads, dh).transpose(1, 0, 2))
        bv.append(vb.reshape(1, nheads, dh).transpose(1, 0, 2))
        ow, ob = dense(kb_, hidden, hidden)                     # out_proj (H, H)
        wo.append(ow.reshape(nheads, dh, hidden))               # per-head (dh, H) blocks
        bo.append(ob)
        w1_, b1_ = dense(kc, hidden, hd); w1.append(w1_); b1.append(b1_)
        w3_, b3_ = dense(kd, hidden, hd); w3.append(w3_); b3.append(b3_)
        w2_, b2_ = dense(ke, hd, hidden); w2.append(w2_); b2.append(b2_)

    params.update(
        wq=jnp.stack(wq), bq=jnp.stack(bq), wk=jnp.stack(wk), bk=jnp.stack(bk),
        wv=jnp.stack(wv), bv=jnp.stack(bv), wo=jnp.stack(wo), bo=jnp.stack(bo),
        w1=jnp.stack(w1), b1=jnp.stack(b1), w3=jnp.stack(w3), b3=jnp.stack(b3),
        w2=jnp.stack(w2), b2=jnp.stack(b2),
        gn1_g=jnp.ones((nlayers, S, 1), jnp.float32),
        gn1_b=jnp.zeros((nlayers, S, 1), jnp.float32),
        gn2_g=jnp.ones((nlayers, S, 1), jnp.float32),
        gn2_b=jnp.zeros((nlayers, S, 1), jnp.float32),
    )
    return params


# --------------------------------------------------------------------------- main
if __name__ == "__main__":
    hidden_ndim = 32
    nheads = 4
    nlayers = 2
    cfg_seq_len = 5                 # config.seq_len -> model seq_len = 4
    n_clusters = 6
    skel_size = (4, 3)              # (pt, d)
    batch = 2
    seq_len = cfg_seq_len - 1

    key = jax.random.PRNGKey(0)
    kp, kt, kx, ky = jax.random.split(key, 4)
    params = init_params(kp, hidden_ndim, nheads, nlayers, n_clusters, skel_size, seq_len)

    t = jax.random.uniform(kt, (batch,), jnp.float32)
    x = jax.random.normal(kx, (batch, seq_len, skel_size[0], skel_size[1]), jnp.float32)
    y = jax.random.randint(ky, (batch,), 0, n_clusters)

    forward = make_forward(nheads)
    out = jax.block_until_ready(forward(params, t, x, y))
    assert out.shape == (batch, seq_len, skel_size[0], skel_size[1]), out.shape
    assert bool(jnp.all(jnp.isfinite(out)))
    print("KERNEL_OK")
</pallas_src>

<mosaic_0001>
module attributes {stable_mosaic.version = 11 : i64} {
  func.func @_encoder_kernel(%arg0: i32, %arg1: i32, %arg2: memref<1x17x12xf32, #tpu.memory_space<vmem>>, %arg3: memref<12x32xf32, #tpu.memory_space<vmem>>, %arg4: memref<17x32xf32, #tpu.memory_space<vmem>>, %arg5: memref<17x32xf32, #tpu.memory_space<vmem>>, %arg6: memref<32x32xf32, #tpu.memory_space<vmem>>, %arg7: memref<32x3xf32, #tpu.memory_space<vmem>>, %arg8: memref<1x3xf32, #tpu.memory_space<vmem>>, %arg9: memref<1x4x32x8xf32, #tpu.memory_space<vmem>>, %arg10: memref<1x4x1x8xf32, #tpu.memory_space<vmem>>, %arg11: memref<1x4x32x8xf32, #tpu.memory_space<vmem>>, %arg12: memref<1x4x1x8xf32, #tpu.memory_space<vmem>>, %arg13: memref<1x4x32x8xf32, #tpu.memory_space<vmem>>, %arg14: memref<1x4x1x8xf32, #tpu.memory_space<vmem>>, %arg15: memref<1x4x8x32xf32, #tpu.memory_space<vmem>>, %arg16: memref<1x1x32xf32, #tpu.memory_space<vmem>>, %arg17: memref<1x17x1xf32, #tpu.memory_space<vmem>>, %arg18: memref<1x17x1xf32, #tpu.memory_space<vmem>>, %arg19: memref<1x32x85xf32, #tpu.memory_space<vmem>>, %arg20: memref<1x1x85xf32, #tpu.memory_space<vmem>>, %arg21: memref<1x32x85xf32, #tpu.memory_space<vmem>>, %arg22: memref<1x1x85xf32, #tpu.memory_space<vmem>>, %arg23: memref<1x85x32xf32, #tpu.memory_space<vmem>>, %arg24: memref<1x1x32xf32, #tpu.memory_space<vmem>>, %arg25: memref<1x17x1xf32, #tpu.memory_space<vmem>>, %arg26: memref<1x17x1xf32, #tpu.memory_space<vmem>>, %arg27: memref<1x17x3xf32, #tpu.memory_space<vmem>>, %arg28: memref<17x32xf32, #tpu.memory_space<vmem>>) attributes {dimension_semantics = [#tpu.dimension_semantics<parallel>, #tpu.dimension_semantics<arbitrary>], iteration_bounds = array<i64: 2, 2>, scalar_prefetch = 0 : i64, scratch_operands = 1 : i64, tpu.core_type = #tpu.core_type<tc>, window_params = [{transform_indices = @transform_0, window_bounds = array<i64: 1, 17, 12>}, {pipeline_mode = #tpu.pipeline_mode<synchronous>, transform_indices = @transform_1, window_bounds = array<i64: 12, 32>}, {pipeline_mode = #tpu.pipeline_mode<synchronous>, transform_indices = @transform_2, window_bounds = array<i64: 17, 32>}, {pipeline_mode = #tpu.pipeline_mode<synchronous>, transform_indices = @transform_3, window_bounds = array<i64: 17, 32>}, {pipeline_mode = #tpu.pipeline_mode<synchronous>, transform_indices = @transform_4, window_bounds = array<i64: 32, 32>}, {pipeline_mode = #tpu.pipeline_mode<synchronous>, transform_indices = @transform_5, window_bounds = array<i64: 32, 3>}, {pipeline_mode = #tpu.pipeline_mode<synchronous>, transform_indices = @transform_6, window_bounds = array<i64: 1, 3>}, {transform_indices = @transform_7, window_bounds = array<i64: 1, 4, 32, 8>}, {transform_indices = @transform_8, window_bounds = array<i64: 1, 4, 1, 8>}, {transform_indices = @transform_9, window_bounds = array<i64: 1, 4, 32, 8>}, {transform_indices = @transform_10, window_bounds = array<i64: 1, 4, 1, 8>}, {transform_indices = @transform_11, window_bounds = array<i64: 1, 4, 32, 8>}, {transform_indices = @transform_12, window_bounds = array<i64: 1, 4, 1, 8>}, {transform_indices = @transform_13, window_bounds = array<i64: 1, 4, 8, 32>}, {transform_indices = @transform_14, window_bounds = array<i64: 1, 1, 32>}, {transform_indices = @transform_15, window_bounds = array<i64: 1, 17, 1>}, {transform_indices = @transform_16, window_bounds = array<i64: 1, 17, 1>}, {transform_indices = @transform_17, window_bounds = array<i64: 1, 32, 85>}, {transform_indices = @transform_18, window_bounds = array<i64: 1, 1, 85>}, {transform_indices = @transform_19, window_bounds = array<i64: 1, 32, 85>}, {transform_indices = @transform_20, window_bounds = array<i64: 1, 1, 85>}, {transform_indices = @transform_21, window_bounds = array<i64: 1, 85, 32>}, {transform_indices = @transform_22, window_bounds = array<i64: 1, 1, 32>}, {transform_indices = @transform_23, window_bounds = array<i64: 1, 17, 1>}, {transform_indices = @transform_24, window_bounds = array<i64: 1, 17, 1>}, {transform_indices = @transform_25, window_bounds = array<i64: 1, 17, 3>}]} {
    %c0_i32 = arith.constant 0 : i32
    %0 = arith.cmpi eq, %arg1, %c0_i32 : i32
    %1 = arith.extui %0 : i1 to i32
    %c0_i32_0 = arith.constant 0 : i32
    %2 = arith.cmpi ne, %1, %c0_i32_0 : i32
    scf.if %2 {
      %c0_192 = arith.constant 0 : index
      %c0_193 = arith.constant 0 : index
      %c0_194 = arith.constant 0 : index
      %243 = vector.load %arg2[%c0_192, %c0_193, %c0_194] : memref<1x17x12xf32, #tpu.memory_space<vmem>>, vector<1x17x12xf32>
      %244 = vector.shape_cast %243 : vector<1x17x12xf32> to vector<17x12xf32>
      %c0_195 = arith.constant 0 : index
      %c0_196 = arith.constant 0 : index
      %245 = vector.load %arg3[%c0_195, %c0_196] : memref<12x32xf32, #tpu.memory_space<vmem>>, vector<12x32xf32>
      %cst_197 = arith.constant dense<0.000000e+00> : vector<17x32xf32>
      %246 = tpu.matmul %244, %245, %cst_197 {dimension_numbers = #tpu.dot_dimension_numbers<[1], [0], [0], [1], [0, 0, 1, 1], [], []>} : vector<17x12xf32>, vector<12x32xf32>, vector<17x32xf32> -> vector<17x32xf32>
      %c0_198 = arith.constant 0 : index
      %c0_199 = arith.constant 0 : index
      %247 = vector.load %arg4[%c0_198, %c0_199] : memref<17x32xf32, #tpu.memory_space<vmem>>, vector<17x32xf32>
      %248 = arith.mulf %246, %247 : vector<17x32xf32>
      %c0_200 = arith.constant 0 : index
      %c0_201 = arith.constant 0 : index
      %249 = vector.load %arg6[%c0_200, %c0_201] : memref<32x32xf32, #tpu.memory_space<vmem>>, vector<32x32xf32>
      %cst_202 = arith.constant dense<0.000000e+00> : vector<17x32xf32>
      %250 = tpu.matmul %246, %249, %cst_202 {dimension_numbers = #tpu.dot_dimension_numbers<[1], [0], [0], [1], [0, 0, 1, 1], [], []>} : vector<17x32xf32>, vector<32x32xf32>, vector<17x32xf32> -> vector<17x32xf32>
      %c0_203 = arith.constant 0 : index
      %c0_204 = arith.constant 0 : index
      %251 = vector.load %arg5[%c0_203, %c0_204] : memref<17x32xf32, #tpu.memory_space<vmem>>, vector<17x32xf32>
      %252 = arith.mulf %250, %251 : vector<17x32xf32>
      %253 = arith.addf %248, %252 : vector<17x32xf32>
      %c0_205 = arith.constant 0 : index
      %c0_206 = arith.constant 0 : index
      %254 = vector.load %arg28[%c0_205, %c0_206] : memref<17x32xf32, #tpu.memory_space<vmem>>, vector<17x32xf32>
      tpu.vector_store %arg28[%c0_205, %c0_206], %253 {strides = array<i32>} : memref<17x32xf32, #tpu.memory_space<vmem>>, vector<17x32xf32>,
    } else {
    }
    %c0 = arith.constant 0 : index
    %c0_1 = arith.constant 0 : index
    %3 = vector.load %arg28[%c0, %c0_1] : memref<17x32xf32, #tpu.memory_space<vmem>>, vector<17x32xf32>
    %c0_2 = arith.constant 0 : index
    %c0_3 = arith.constant 0 : index
    %c0_4 = arith.constant 0 : index
    %4 = vector.load %arg16[%c0_2, %c0_3, %c0_4] : memref<1x1x32xf32, #tpu.memory_space<vmem>>, vector<1x1x32xf32>
    %5 = vector.shape_cast %4 : vector<1x1x32xf32> to vector<1x32xf32>
    %c0_5 = arith.constant 0 : index
    %c0_6 = arith.constant 0 : index
    %c0_7 = arith.constant 0 : index
    %c0_8 = arith.constant 0 : index
    %6 = vector.load %arg9[%c0_5, %c0_6, %c0_7, %c0_8] : memref<1x4x32x8xf32, #tpu.memory_space<vmem>>, vector<1x1x32x8xf32>
    %7 = vector.shape_cast %6 : vector<1x1x32x8xf32> to vector<32x8xf32>
    %cst = arith.constant dense<0.000000e+00> : vector<17x8xf32>
    %8 = tpu.matmul %3, %7, %cst {dimension_numbers = #tpu.dot_dimension_numbers<[1], [0], [0], [1], [0, 0, 1, 1], [], []>} : vector<17x32xf32>, vector<32x8xf32>, vector<17x8xf32> -> vector<17x8xf32>
    %c0_9 = arith.constant 0 : index
    %c0_10 = arith.constant 0 : index
    %c0_11 = arith.constant 0 : index
    %c0_12 = arith.constant 0 : index
    %9 = vector.load %arg10[%c0_9, %c0_10, %c0_11, %c0_12] : memref<1x4x1x8xf32, #tpu.memory_space<vmem>>, vector<1x1x1x8xf32>
    %10 = vector.shape_cast %9 : vector<1x1x1x8xf32> to vector<1x8xf32>
    %11 = vector.broadcast %10 : vector<1x8xf32> to vector<17x8xf32>
    %12 = arith.addf %8, %11 : vector<17x8xf32>
    %c0_13 = arith.constant 0 : index
    %c0_14 = arith.constant 0 : index
    %c0_15 = arith.constant 0 : index
    %c0_16 = arith.constant 0 : index
    %13 = vector.load %arg11[%c0_13, %c0_14, %c0_15, %c0_16] : memref<1x4x32x8xf32, #tpu.memory_space<vmem>>, vector<1x1x32x8xf32>
    %14 = vector.shape_cast %13 : vector<1x1x32x8xf32> to vector<32x8xf32>
    %cst_17 = arith.constant dense<0.000000e+00> : vector<17x8xf32>
    %15 = tpu.matmul %3, %14, %cst_17 {dimension_numbers = #tpu.dot_dimension_numbers<[1], [0], [0], [1], [0, 0, 1, 1], [], []>} : vector<17x32xf32>, vector<32x8xf32>, vector<17x8xf32> -> vector<17x8xf32>
    %c0_18 = arith.constant 0 : index
    %c0_19 = arith.constant 0 : index
    %c0_20 = arith.constant 0 : index
    %c0_21 = arith.constant 0 : index
    %16 = vector.load %arg12[%c0_18, %c0_19, %c0_20, %c0_21] : memref<1x4x1x8xf32, #tpu.memory_space<vmem>>, vector<1x1x1x8xf32>
    %17 = vector.shape_cast %16 : vector<1x1x1x8xf32> to vector<1x8xf32>
    %18 = vector.broadcast %17 : vector<1x8xf32> to vector<17x8xf32>
    %19 = arith.addf %15, %18 : vector<17x8xf32>
    %c0_22 = arith.constant 0 : index
    %c0_23 = arith.constant 0 : index
    %c0_24 = arith.constant 0 : index
    %c0_25 = arith.constant 0 : index
    %20 = vector.load %arg13[%c0_22, %c0_23, %c0_24, %c0_25] : memref<1x4x32x8xf32, #tpu.memory_space<vmem>>, vector<1x1x32x8xf32>
    %21 = vector.shape_cast %20 : vector<1x1x32x8xf32> to vector<32x8xf32>
    %cst_26 = arith.constant dense<0.000000e+00> : vector<17x8xf32>
    %22 = tpu.matmul %3, %21, %cst_26 {dimension_numbers = #tpu.dot_dimension_numbers<[1], [0], [0], [1], [0, 0, 1, 1], [], []>} : vector<17x32xf32>, vector<32x8xf32>, vector<17x8xf32> -> vector<17x8xf32>
    %c0_27 = arith.constant 0 : index
    %c0_28 = arith.constant 0 : index
    %c0_29 = arith.constant 0 : index
    %c0_30 = arith.constant 0 : index
    %23 = vector.load %arg14[%c0_27, %c0_28, %c0_29, %c0_30] : memref<1x4x1x8xf32, #tpu.memory_space<vmem>>, vector<1x1x1x8xf32>
    %24 = vector.shape_cast %23 : vector<1x1x1x8xf32> to vector<1x8xf32>
    %25 = vector.broadcast %24 : vector<1x8xf32> to vector<17x8xf32>
    %26 = arith.addf %22, %25 : vector<17x8xf32>
    %cst_31 = arith.constant dense<0.000000e+00> : vector<17x17xf32>
    %27 = tpu.matmul %12, %19, %cst_31 {dimension_numbers = #tpu.dot_dimension_numbers<[1], [1], [0], [0], [0, 0, 1, 0], [], []>} : vector<17x8xf32>, vector<17x8xf32>, vector<17x17xf32> -> vector<17x17xf32>
    %cst_32 = arith.constant dense<0xFF800000> : vector<17xf32>
    %28 = vector.multi_reduction <maximumf>, %27, %cst_32 [1] : vector<17x17xf32> to vector<17xf32>
    %29 = vector.shape_cast %28 : vector<17xf32> to vector<17x1xf32>
    %30 = vector.broadcast %29 : vector<17x1xf32> to vector<17x17xf32>
    %31 = arith.subf %27, %30 : vector<17x17xf32>
    %32 = math.exp %31 : vector<17x17xf32>
    %cst_33 = arith.constant dense<0.000000e+00> : vector<17xf32>
    %33 = vector.multi_reduction <add>, %32, %cst_33 [1] : vector<17x17xf32> to vector<17xf32>
    %34 = vector.shape_cast %33 : vector<17xf32> to vector<17x1xf32>
    %35 = tpu.reciprocal %34 {approx = true} : vector<17x1xf32> -> vector<17x1xf32>
    %36 = vector.broadcast %35 : vector<17x1xf32> to vector<17x17xf32>
    %37 = arith.mulf %32, %36 : vector<17x17xf32>
    %cst_34 = arith.constant dense<0.000000e+00> : vector<17x8xf32>
    %38 = tpu.matmul %37, %26, %cst_34 {dimension_numbers = #tpu.dot_dimension_numbers<[1], [0], [0], [1], [0, 0, 1, 1], [], []>} : vector<17x17xf32>, vector<17x8xf32>, vector<17x8xf32> -> vector<17x8xf32>
    %c0_35 = arith.constant 0 : index
    %c0_36 = arith.constant 0 : index
    %c0_37 = arith.constant 0 : index
    %c0_38 = arith.constant 0 : index
    %39 = vector.load %arg15[%c0_35, %c0_36, %c0_37, %c0_38] : memref<1x4x8x32xf32, #tpu.memory_space<vmem>>, vector<1x1x8x32xf32>
    %40 = vector.shape_cast %39 : vector<1x1x8x32xf32> to vector<8x32xf32>
    %cst_39 = arith.constant dense<0.000000e+00> : vector<17x32xf32>
    %41 = tpu.matmul %38, %40, %cst_39 {dimension_numbers = #tpu.dot_dimension_numbers<[1], [0], [0], [1], [0, 0, 1, 1], [], []>} : vector<17x8xf32>, vector<8x32xf32>, vector<17x32xf32> -> vector<17x32xf32>
    %42 = vector.broadcast %5 : vector<1x32xf32> to vector<17x32xf32>
    %43 = arith.addf %42, %41 : vector<17x32xf32>
    %c0_40 = arith.constant 0 : index
    %c1 = arith.constant 1 : index
    %c0_41 = arith.constant 0 : index
    %c0_42 = arith.constant 0 : index
    %44 = vector.load %arg9[%c0_40, %c1, %c0_41, %c0_42] : memref<1x4x32x8xf32, #tpu.memory_space<vmem>>, vector<1x1x32x8xf32>
    %45 = vector.shape_cast %44 : vector<1x1x32x8xf32> to vector<32x8xf32>
    %cst_43 = arith.constant dense<0.000000e+00> : vector<17x8xf32>
    %46 = tpu.matmul %3, %45, %cst_43 {dimension_numbers = #tpu.dot_dimension_numbers<[1], [0], [0], [1], [0, 0, 1, 1], [], []>} : vector<17x32xf32>, vector<32x8xf32>, vector<17x8xf32> -> vector<17x8xf32>
    %c0_44 = arith.constant 0 : index
    %c1_45 = arith.constant 1 : index
    %c0_46 = arith.constant 0 : index
    %c0_47 = arith.constant 0 : index
    %47 = vector.load %arg10[%c0_44, %c1_45, %c0_46, %c0_47] : memref<1x4x1x8xf32, #tpu.memory_space<vmem>>, vector<1x1x1x8xf32>
    %48 = vector.shape_cast %47 : vector<1x1x1x8xf32> to vector<1x8xf32>
    %49 = vector.broadcast %48 : vector<1x8xf32> to vector<17x8xf32>
    %50 = arith.addf %46, %49 : vector<17x8xf32>
    %c0_48 = arith.constant 0 : index
    %c1_49 = arith.constant 1 : index
    %c0_50 = arith.constant 0 : index
    %c0_51 = arith.constant 0 : index
    %51 = vector.load %arg11[%c0_48, %c1_49, %c0_50, %c0_51] : memref<1x4x32x8xf32, #tpu.memory_space<vmem>>, vector<1x1x32x8xf32>
    %52 = vector.shape_cast %51 : vector<1x1x32x8xf32> to vector<32x8xf32>
    %cst_52 = arith.constant dense<0.000000e+00> : vector<17x8xf32>
    %53 = tpu.matmul %3, %52, %cst_52 {dimension_numbers = #tpu.dot_dimension_numbers<[1], [0], [0], [1], [0, 0, 1, 1], [], []>} : vector<17x32xf32>, vector<32x8xf32>, vector<17x8xf32> -> vector<17x8xf32>
    %c0_53 = arith.constant 0 : index
    %c1_54 = arith.constant 1 : index
    %c0_55 = arith.constant 0 : index
    %c0_56 = arith.constant 0 : index
    %54 = vector.load %arg12[%c0_53, %c1_54, %c0_55, %c0_56] : memref<1x4x1x8xf32, #tpu.memory_space<vmem>>, vector<1x1x1x8xf32>
    %55 = vector.shape_cast %54 : vector<1x1x1x8xf32> to vector<1x8xf32>
    %56 = vector.broadcast %55 : vector<1x8xf32> to vector<17x8xf32>
    %57 = arith.addf %53, %56 : vector<17x8xf32>
    %c0_57 = arith.constant 0 : index
    %c1_58 = arith.constant 1 : index
    %c0_59 = arith.constant 0 : index
    %c0_60 = arith.constant 0 : index
    %58 = vector.load %arg13[%c0_57, %c1_58, %c0_59, %c0_60] : memref<1x4x32x8xf32, #tpu.memory_space<vmem>>, vector<1x1x32x8xf32>
    %59 = vector.shape_cast %58 : vector<1x1x32x8xf32> to vector<32x8xf32>
    %cst_61 = arith.constant dense<0.000000e+00> : vector<17x8xf32>
    %60 = tpu.matmul %3, %59, %cst_61 {dimension_numbers = #tpu.dot_dimension_numbers<[1], [0], [0], [1], [0, 0, 1, 1], [], []>} : vector<17x32xf32>, vector<32x8xf32>, vector<17x8xf32> -> vector<17x8xf32>
    %c0_62 = arith.constant 0 : index
    %c1_63 = arith.constant 1 : index
    %c0_64 = arith.constant 0 : index
    %c0_65 = arith.constant 0 : index
    %61 = vector.load %arg14[%c0_62, %c1_63, %c0_64, %c0_65] : memref<1x4x1x8xf32, #tpu.memory_space<vmem>>, vector<1x1x1x8xf32>
    %62 = vector.shape_cast %61 : vector<1x1x1x8xf32> to vector<1x8xf32>
    %63 = vector.broadcast %62 : vector<1x8xf32> to vector<17x8xf32>
    %64 = arith.addf %60, %63 : vector<17x8xf32>
    %cst_66 = arith.constant dense<0.000000e+00> : vector<17x17xf32>
    %65 = tpu.matmul %50, %57, %cst_66 {dimension_numbers = #tpu.dot_dimension_numbers<[1], [1], [0], [0], [0, 0, 1, 0], [], []>} : vector<17x8xf32>, vector<17x8xf32>, vector<17x17xf32> -> vector<17x17xf32>
    %cst_67 = arith.constant dense<0xFF800000> : vector<17xf32>
    %66 = vector.multi_reduction <maximumf>, %65, %cst_67 [1] : vector<17x17xf32> to vector<17xf32>
    %67 = vector.shape_cast %66 : vector<17xf32> to vector<17x1xf32>
    %68 = vector.broadcast %67 : vector<17x1xf32> to vector<17x17xf32>
    %69 = arith.subf %65, %68 : vector<17x17xf32>
    %70 = math.exp %69 : vector<17x17xf32>
    %cst_68 = arith.constant dense<0.000000e+00> : vector<17xf32>
    %71 = vector.multi_reduction <add>, %70, %cst_68 [1] : vector<17x17xf32> to vector<17xf32>
    %72 = vector.shape_cast %71 : vector<17xf32> to vector<17x1xf32>
    %73 = tpu.reciprocal %72 {approx = true} : vector<17x1xf32> -> vector<17x1xf32>
    %74 = vector.broadcast %73 : vector<17x1xf32> to vector<17x17xf32>
    %75 = arith.mulf %70, %74 : vector<17x17xf32>
    %cst_69 = arith.constant dense<0.000000e+00> : vector<17x8xf32>
    %76 = tpu.matmul %75, %64, %cst_69 {dimension_numbers = #tpu.dot_dimension_numbers<[1], [0], [0], [1], [0, 0, 1, 1], [], []>} : vector<17x17xf32>, vector<17x8xf32>, vector<17x8xf32> -> vector<17x8xf32>
    %c0_70 = arith.constant 0 : index
    %c1_71 = arith.constant 1 : index
    %c0_72 = arith.constant 0 : index
    %c0_73 = arith.constant 0 : index
    %77 = vector.load %arg15[%c0_70, %c1_71, %c0_72, %c0_73] : memref<1x4x8x32xf32, #tpu.memory_space<vmem>>, vector<1x1x8x32xf32>
    %78 = vector.shape_cast %77 : vector<1x1x8x32xf32> to vector<8x32xf32>
    %cst_74 = arith.constant dense<0.000000e+00> : vector<17x32xf32>
    %79 = tpu.matmul %76, %78, %cst_74 {dimension_numbers = #tpu.dot_dimension_numbers<[1], [0], [0], [1], [0, 0, 1, 1], [], []>} : vector<17x8xf32>, vector<8x32xf32>, vector<17x32xf32> -> vector<17x32xf32>
    %80 = arith.addf %43, %79 : vector<17x32xf32>
    %c0_75 = arith.constant 0 : index
    %c2 = arith.constant 2 : index
    %c0_76 = arith.constant 0 : index
    %c0_77 = arith.constant 0 : index
    %81 = vector.load %arg9[%c0_75, %c2, %c0_76, %c0_77] : memref<1x4x32x8xf32, #tpu.memory_space<vmem>>, vector<1x1x32x8xf32>
    %82 = vector.shape_cast %81 : vector<1x1x32x8xf32> to vector<32x8xf32>
    %cst_78 = arith.constant dense<0.000000e+00> : vector<17x8xf32>
    %83 = tpu.matmul %3, %82, %cst_78 {dimension_numbers = #tpu.dot_dimension_numbers<[1], [0], [0], [1], [0, 0, 1, 1], [], []>} : vector<17x32xf32>, vector<32x8xf32>, vector<17x8xf32> -> vector<17x8xf32>
    %c0_79 = arith.constant 0 : index
    %c2_80 = arith.constant 2 : index
    %c0_81 = arith.constant 0 : index
    %c0_82 = arith.constant 0 : index
    %84 = vector.load %arg10[%c0_79, %c2_80, %c0_81, %c0_82] : memref<1x4x1x8xf32, #tpu.memory_space<vmem>>, vector<1x1x1x8xf32>
    %85 = vector.shape_cast %84 : vector<1x1x1x8xf32> to vector<1x8xf32>
    %86 = vector.broadcast %85 : vector<1x8xf32> to vector<17x8xf32>
    %87 = arith.addf %83, %86 : vector<17x8xf32>
    %c0_83 = arith.constant 0 : index
    %c2_84 = arith.constant 2 : index
    %c0_85 = arith.constant 0 : index
    %c0_86 = arith.constant 0 : index
    %88 = vector.load %arg11[%c0_83, %c2_84, %c0_85, %c0_86] : memref<1x4x32x8xf32, #tpu.memory_space<vmem>>, vector<1x1x32x8xf32>
    %89 = vector.shape_cast %88 : vector<1x1x32x8xf32> to vector<32x8xf32>
    %cst_87 = arith.constant dense<0.000000e+00> : vector<17x8xf32>
    %90 = tpu.matmul %3, %89, %cst_87 {dimension_numbers = #tpu.dot_dimension_numbers<[1], [0], [0], [1], [0, 0, 1, 1], [], []>} : vector<17x32xf32>, vector<32x8xf32>, vector<17x8xf32> -> vector<17x8xf32>
    %c0_88 = arith.constant 0 : index
    %c2_89 = arith.constant 2 : index
    %c0_90 = arith.constant 0 : index
    %c0_91 = arith.constant 0 : index
    %91 = vector.load %arg12[%c0_88, %c2_89, %c0_90, %c0_91] : memref<1x4x1x8xf32, #tpu.memory_space<vmem>>, vector<1x1x1x8xf32>
    %92 = vector.shape_cast %91 : vector<1x1x1x8xf32> to vector<1x8xf32>
    %93 = vector.broadcast %92 : vector<1x8xf32> to vector<17x8xf32>
    %94 = arith.addf %90, %93 : vector<17x8xf32>
    %c0_92 = arith.constant 0 : index
    %c2_93 = arith.constant 2 : index
    %c0_94 = arith.constant 0 : index
    %c0_95 = arith.constant 0 : index
    %95 = vector.load %arg13[%c0_92, %c2_93, %c0_94, %c0_95] : memref<1x4x32x8xf32, #tpu.memory_space<vmem>>, vector<1x1x32x8xf32>
    %96 = vector.shape_cast %95 : vector<1x1x32x8xf32> to vector<32x8xf32>
    %cst_96 = arith.constant dense<0.000000e+00> : vector<17x8xf32>
    %97 = tpu.matmul %3, %96, %cst_96 {dimension_numbers = #tpu.dot_dimension_numbers<[1], [0], [0], [1], [0, 0, 1, 1], [], []>} : vector<17x32xf32>, vector<32x8xf32>, vector<17x8xf32> -> vector<17x8xf32>
    %c0_97 = arith.constant 0 : index
    %c2_98 = arith.constant 2 : index
    %c0_99 = arith.constant 0 : index
    %c0_100 = arith.constant 0 : index
    %98 = vector.load %arg14[%c0_97, %c2_98, %c0_99, %c0_100] : memref<1x4x1x8xf32, #tpu.memory_space<vmem>>, vector<1x1x1x8xf32>
    %99 = vector.shape_cast %98 : vector<1x1x1x8xf32> to vector<1x8xf32>
    %100 = vector.broadcast %99 : vector<1x8xf32> to vector<17x8xf32>
    %101 = arith.addf %97, %100 : vector<17x8xf32>
    %cst_101 = arith.constant dense<0.000000e+00> : vector<17x17xf32>
    %102 = tpu.matmul %87, %94, %cst_101 {dimension_numbers = #tpu.dot_dimension_numbers<[1], [1], [0], [0], [0, 0, 1, 0], [], []>} : vector<17x8xf32>, vector<17x8xf32>, vector<17x17xf32> -> vector<17x17xf32>
    %cst_102 = arith.constant dense<0xFF800000> : vector<17xf32>
    %103 = vector.multi_reduction <maximumf>, %102, %cst_102 [1] : vector<17x17xf32> to vector<17xf32>
    %104 = vector.shape_cast %103 : vector<17xf32> to vector<17x1xf32>
    %105 = vector.broadcast %104 : vector<17x1xf32> to vector<17x17xf32>
    %106 = arith.subf %102, %105 : vector<17x17xf32>
    %107 = math.exp %106 : vector<17x17xf32>
    %cst_103 = arith.constant dense<0.000000e+00> : vector<17xf32>
    %108 = vector.multi_reduction <add>, %107, %cst_103 [1] : vector<17x17xf32> to vector<17xf32>
    %109 = vector.shape_cast %108 : vector<17xf32> to vector<17x1xf32>
    %110 = tpu.reciprocal %109 {approx = true} : vector<17x1xf32> -> vector<17x1xf32>
    %111 = vector.broadcast %110 : vector<17x1xf32> to vector<17x17xf32>
    %112 = arith.mulf %107, %111 : vector<17x17xf32>
    %cst_104 = arith.constant dense<0.000000e+00> : vector<17x8xf32>
    %113 = tpu.matmul %112, %101, %cst_104 {dimension_numbers = #tpu.dot_dimension_numbers<[1], [0], [0], [1], [0, 0, 1, 1], [], []>} : vector<17x17xf32>, vector<17x8xf32>, vector<17x8xf32> -> vector<17x8xf32>
    %c0_105 = arith.constant 0 : index
    %c2_106 = arith.constant 2 : index
    %c0_107 = arith.constant 0 : index
    %c0_108 = arith.constant 0 : index
    %114 = vector.load %arg15[%c0_105, %c2_106, %c0_107, %c0_108] : memref<1x4x8x32xf32, #tpu.memory_space<vmem>>, vector<1x1x8x32xf32>
    %115 = vector.shape_cast %114 : vector<1x1x8x32xf32> to vector<8x32xf32>
    %cst_109 = arith.constant dense<0.000000e+00> : vector<17x32xf32>
    %116 = tpu.matmul %113, %115, %cst_109 {dimension_numbers = #tpu.dot_dimension_numbers<[1], [0], [0], [1], [0, 0, 1, 1], [], []>} : vector<17x8xf32>, vector<8x32xf32>, vector<17x32xf32> -> vector<17x32xf32>
    %117 = arith.addf %80, %116 : vector<17x32xf32>
    %c0_110 = arith.constant 0 : index
    %c3 = arith.constant 3 : index
    %c0_111 = arith.constant 0 : index
    %c0_112 = arith.constant 0 : index
    %118 = vector.load %arg9[%c0_110, %c3, %c0_111, %c0_112] : memref<1x4x32x8xf32, #tpu.memory_space<vmem>>, vector<1x1x32x8xf32>
    %119 = vector.shape_cast %118 : vector<1x1x32x8xf32> to vector<32x8xf32>
    %cst_113 = arith.constant dense<0.000000e+00> : vector<17x8xf32>
    %120 = tpu.matmul %3, %119, %cst_113 {dimension_numbers = #tpu.dot_dimension_numbers<[1], [0], [0], [1], [0, 0, 1, 1], [], []>} : vector<17x32xf32>, vector<32x8xf32>, vector<17x8xf32> -> vector<17x8xf32>
    %c0_114 = arith.constant 0 : index
    %c3_115 = arith.constant 3 : index
    %c0_116 = arith.constant 0 : index
    %c0_117 = arith.constant 0 : index
    %121 = vector.load %arg10[%c0_114, %c3_115, %c0_116, %c0_117] : memref<1x4x1x8xf32, #tpu.memory_space<vmem>>, vector<1x1x1x8xf32>
    %122 = vector.shape_cast %121 : vector<1x1x1x8xf32> to vector<1x8xf32>
    %123 = vector.broadcast %122 : vector<1x8xf32> to vector<17x8xf32>
    %124 = arith.addf %120, %123 : vector<17x8xf32>
    %c0_118 = arith.constant 0 : index
    %c3_119 = arith.constant 3 : index
    %c0_120 = arith.constant 0 : index
    %c0_121 = arith.constant 0 : index
    %125 = vector.load %arg11[%c0_118, %c3_119, %c0_120, %c0_121] : memref<1x4x32x8xf32, #tpu.memory_space<vmem>>, vector<1x1x32x8xf32>
    %126 = vector.shape_cast %125 : vector<1x1x32x8xf32> to vector<32x8xf32>
    %cst_122 = arith.constant dense<0.000000e+00> : vector<17x8xf32>
    %127 = tpu.matmul %3, %126, %cst_122 {dimension_numbers = #tpu.dot_dimension_numbers<[1], [0], [0], [1], [0, 0, 1, 1], [], []>} : vector<17x32xf32>, vector<32x8xf32>, vector<17x8xf32> -> vector<17x8xf32>
    %c0_123 = arith.constant 0 : index
    %c3_124 = arith.constant 3 : index
    %c0_125 = arith.constant 0 : index
    %c0_126 = arith.constant 0 : index
    %128 = vector.load %arg12[%c0_123, %c3_124, %c0_125, %c0_126] : memref<1x4x1x8xf32, #tpu.memory_space<vmem>>, vector<1x1x1x8xf32>
    %129 = vector.shape_cast %128 : vector<1x1x1x8xf32> to vector<1x8xf32>
    %130 = vector.broadcast %129 : vector<1x8xf32> to vector<17x8xf32>
    %131 = arith.addf %127, %130 : vector<17x8xf32>
    %c0_127 = arith.constant 0 : index
    %c3_128 = arith.constant 3 : index
    %c0_129 = arith.constant 0 : index
    %c0_130 = arith.constant 0 : index
    %132 = vector.load %arg13[%c0_127, %c3_128, %c0_129, %c0_130] : memref<1x4x32x8xf32, #tpu.memory_space<vmem>>, vector<1x1x32x8xf32>
    %133 = vector.shape_cast %132 : vector<1x1x32x8xf32> to vector<32x8xf32>
    %cst_131 = arith.constant dense<0.000000e+00> : vector<17x8xf32>
    %134 = tpu.matmul %3, %133, %cst_131 {dimension_numbers = #tpu.dot_dimension_numbers<[1], [0], [0], [1], [0, 0, 1, 1], [], []>} : vector<17x32xf32>, vector<32x8xf32>, vector<17x8xf32> -> vector<17x8xf32>
    %c0_132 = arith.constant 0 : index
    %c3_133 = arith.constant 3 : index
    %c0_134 = arith.constant 0 : index
    %c0_135 = arith.constant 0 : index
    %135 = vector.load %arg14[%c0_132, %c3_133, %c0_134, %c0_135] : memref<1x4x1x8xf32, #tpu.memory_space<vmem>>, vector<1x1x1x8xf32>
    %136 = vector.shape_cast %135 : vector<1x1x1x8xf32> to vector<1x8xf32>
    %137 = vector.broadcast %136 : vector<1x8xf32> to vector<17x8xf32>
    %138 = arith.addf %134, %137 : vector<17x8xf32>
    %cst_136 = arith.constant dense<0.000000e+00> : vector<17x17xf32>
    %139 = tpu.matmul %124, %131, %cst_136 {dimension_numbers = #tpu.dot_dimension_numbers<[1], [1], [0], [0], [0, 0, 1, 0], [], []>} : vector<17x8xf32>, vector<17x8xf32>, vector<17x17xf32> -> vector<17x17xf32>
    %cst_137 = arith.constant dense<0xFF800000> : vector<17xf32>
    %140 = vector.multi_reduction <maximumf>, %139, %cst_137 [1] : vector<17x17xf32> to vector<17xf32>
    %141 = vector.shape_cast %140 : vector<17xf32> to vector<17x1xf32>
    %142 = vector.broadcast %141 : vector<17x1xf32> to vector<17x17xf32>
    %143 = arith.subf %139, %142 : vector<17x17xf32>
    %144 = math.exp %143 : vector<17x17xf32>
    %cst_138 = arith.constant dense<0.000000e+00> : vector<17xf32>
    %145 = vector.multi_reduction <add>, %144, %cst_138 [1] : vector<17x17xf32> to vector<17xf32>
    %146 = vector.shape_cast %145 : vector<17xf32> to vector<17x1xf32>
    %147 = tpu.reciprocal %146 {approx = true} : vector<17x1xf32> -> vector<17x1xf32>
    %148 = vector.broadcast %147 : vector<17x1xf32> to vector<17x17xf32>
    %149 = arith.mulf %144, %148 : vector<17x17xf32>
    %cst_139 = arith.constant dense<0.000000e+00> : vector<17x8xf32>
    %150 = tpu.matmul %149, %138, %cst_139 {dimension_numbers = #tpu.dot_dimension_numbers<[1], [0], [0], [1], [0, 0, 1, 1], [], []>} : vector<17x17xf32>, vector<17x8xf32>, vector<17x8xf32> -> vector<17x8xf32>
    %c0_140 = arith.constant 0 : index
    %c3_141 = arith.constant 3 : index
    %c0_142 = arith.constant 0 : index
    %c0_143 = arith.constant 0 : index
    %151 = vector.load %arg15[%c0_140, %c3_141, %c0_142, %c0_143] : memref<1x4x8x32xf32, #tpu.memory_space<vmem>>, vector<1x1x8x32xf32>
    %152 = vector.shape_cast %151 : vector<1x1x8x32xf32> to vector<8x32xf32>
    %cst_144 = arith.constant dense<0.000000e+00> : vector<17x32xf32>
    %153 = tpu.matmul %150, %152, %cst_144 {dimension_numbers = #tpu.dot_dimension_numbers<[1], [0], [0], [1], [0, 0, 1, 1], [], []>} : vector<17x8xf32>, vector<8x32xf32>, vector<17x32xf32> -> vector<17x32xf32>
    %154 = arith.addf %117, %153 : vector<17x32xf32>
    %155 = arith.addf %3, %154 : vector<17x32xf32>
    %c0_145 = arith.constant 0 : index
    %c0_146 = arith.constant 0 : index
    %c0_147 = arith.constant 0 : index
    %156 = vector.load %arg17[%c0_145, %c0_146, %c0_147] : memref<1x17x1xf32, #tpu.memory_space<vmem>>, vector<1x17x1xf32>
    %157 = vector.shape_cast %156 : vector<1x17x1xf32> to vector<17x1xf32>
    %c0_148 = arith.constant 0 : index
    %c0_149 = arith.constant 0 : index
    %c0_150 = arith.constant 0 : index
    %158 = vector.load %arg18[%c0_148, %c0_149, %c0_150] : memref<1x17x1xf32, #tpu.memory_space<vmem>>, vector<1x17x1xf32>
    %159 = vector.shape_cast %158 : vector<1x17x1xf32> to vector<17x1xf32>
    %160 = vector.shape_cast %155 : vector<17x32xf32> to vector<1x17x32xf32>
    %cst_151 = arith.constant dense<0.000000e+00> : vector<1xf32>
    %161 = vector.multi_reduction <add>, %160, %cst_151 [1, 2] : vector<1x17x32xf32> to vector<1xf32>
    %162 = vector.shape_cast %161 : vector<1xf32> to vector<1x1x1xf32>
    %163 = vector.extract %162[0, 0, 0] : f32 from vector<1x1x1xf32>
    %cst_152 = arith.constant 5.440000e+02 : f32
    %164 = arith.divf %163, %cst_152 : f32
    %165 = vector.broadcast %164 : f32 to vector<17x32xf32>
    %166 = arith.subf %155, %165 : vector<17x32xf32>
    %167 = arith.mulf %166, %166 : vector<17x32xf32>
    %168 = vector.shape_cast %167 : vector<17x32xf32> to vector<1x17x32xf32>
    %cst_153 = arith.constant dense<0.000000e+00> : vector<1xf32>
    %169 = vector.multi_reduction <add>, %168, %cst_153 [1, 2] : vector<1x17x32xf32> to vector<1xf32>
    %170 = vector.shape_cast %169 : vector<1xf32> to vector<1x1x1xf32>
    %171 = vector.extract %170[0, 0, 0] : f32 from vector<1x1x1xf32>
    %cst_154 = arith.constant 5.440000e+02 : f32
    %172 = arith.divf %171, %cst_154 : f32
    %173 = vector.broadcast %164 : f32 to vector<17x32xf32>
    %174 = arith.subf %155, %173 : vector<17x32xf32>
    %cst_155 = arith.constant 9.99999974E-6 : f32
    %175 = arith.addf %172, %cst_155 : f32
    %176 = math.rsqrt %175 : f32
    %177 = vector.broadcast %176 : f32 to vector<17x32xf32>
    %178 = arith.mulf %174, %177 : vector<17x32xf32>
    %179 = vector.broadcast %157 : vector<17x1xf32> to vector<17x32xf32>
    %180 = arith.mulf %178, %179 : vector<17x32xf32>
    %181 = vector.broadcast %159 : vector<17x1xf32> to vector<17x32xf32>
    %182 = arith.addf %180, %181 : vector<17x32xf32>
    %c0_156 = arith.constant 0 : index
    %c0_157 = arith.constant 0 : index
    %c0_158 = arith.constant 0 : index
    %183 = vector.load %arg19[%c0_156, %c0_157, %c0_158] : memref<1x32x85xf32, #tpu.memory_space<vmem>>, vector<1x32x85xf32>
    %184 = vector.shape_cast %183 : vector<1x32x85xf32> to vector<32x85xf32>
    %cst_159 = arith.constant dense<0.000000e+00> : vector<17x85xf32>
    %185 = tpu.matmul %182, %184, %cst_159 {dimension_numbers = #tpu.dot_dimension_numbers<[1], [0], [0], [1], [0, 0, 1, 1], [], []>} : vector<17x32xf32>, vector<32x85xf32>, vector<17x85xf32> -> vector<17x85xf32>
    %c0_160 = arith.constant 0 : index
    %c0_161 = arith.constant 0 : index
    %c0_162 = arith.constant 0 : index
    %186 = vector.load %arg20[%c0_160, %c0_161, %c0_162] : memref<1x1x85xf32, #tpu.memory_space<vmem>>, vector<1x1x85xf32>
    %187 = vector.shape_cast %186 : vector<1x1x85xf32> to vector<1x85xf32>
    %188 = vector.broadcast %187 : vector<1x85xf32> to vector<17x85xf32>
    %189 = arith.addf %185, %188 : vector<17x85xf32>
    %c0_163 = arith.constant 0 : index
    %c0_164 = arith.constant 0 : index
    %c0_165 = arith.constant 0 : index
    %190 = vector.load %arg21[%c0_163, %c0_164, %c0_165] : memref<1x32x85xf32, #tpu.memory_space<vmem>>, vector<1x32x85xf32>
    %191 = vector.shape_cast %190 : vector<1x32x85xf32> to vector<32x85xf32>
    %cst_166 = arith.constant dense<0.000000e+00> : vector<17x85xf32>
    %192 = tpu.matmul %182, %191, %cst_166 {dimension_numbers = #tpu.dot_dimension_numbers<[1], [0], [0], [1], [0, 0, 1, 1], [], []>} : vector<17x32xf32>, vector<32x85xf32>, vector<17x85xf32> -> vector<17x85xf32>
    %c0_167 = arith.constant 0 : index
    %c0_168 = arith.constant 0 : index
    %c0_169 = arith.constant 0 : index
    %193 = vector.load %arg22[%c0_167, %c0_168, %c0_169] : memref<1x1x85xf32, #tpu.memory_space<vmem>>, vector<1x1x85xf32>
    %194 = vector.shape_cast %193 : vector<1x1x85xf32> to vector<1x85xf32>
    %195 = vector.broadcast %194 : vector<1x85xf32> to vector<17x85xf32>
    %196 = arith.addf %192, %195 : vector<17x85xf32>
    %197 = arith.negf %189 : vector<17x85xf32>
    %198 = math.exp %197 : vector<17x85xf32>
    %cst_170 = arith.constant 1.000000e+00 : f32
    %199 = vector.broadcast %cst_170 : f32 to vector<17x85xf32>
    %200 = arith.addf %199, %198 : vector<17x85xf32>
    %201 = arith.divf %199, %200 : vector<17x85xf32>
    %202 = arith.mulf %189, %201 : vector<17x85xf32>
    %203 = arith.mulf %202, %196 : vector<17x85xf32>
    %c0_171 = arith.constant 0 : index
    %c0_172 = arith.constant 0 : index
    %c0_173 = arith.constant 0 : index
    %204 = vector.load %arg23[%c0_171, %c0_172, %c0_173] : memref<1x85x32xf32, #tpu.memory_space<vmem>>, vector<1x85x32xf32>
    %205 = vector.shape_cast %204 : vector<1x85x32xf32> to vector<85x32xf32>
    %cst_174 = arith.constant dense<0.000000e+00> : vector<17x32xf32>
    %206 = tpu.matmul %203, %205, %cst_174 {dimension_numbers = #tpu.dot_dimension_numbers<[1], [0], [0], [1], [0, 0, 1, 1], [], []>} : vector<17x85xf32>, vector<85x32xf32>, vector<17x32xf32> -> vector<17x32xf32>
    %c0_175 = arith.constant 0 : index
    %c0_176 = arith.constant 0 : index
    %c0_177 = arith.constant 0 : index
    %207 = vector.load %arg24[%c0_175, %c0_176, %c0_177] : memref<1x1x32xf32, #tpu.memory_space<vmem>>, vector<1x1x32xf32>
    %208 = vector.shape_cast %207 : vector<1x1x32xf32> to vector<1x32xf32>
    %209 = vector.broadcast %208 : vector<1x32xf32> to vector<17x32xf32>
    %210 = arith.addf %206, %209 : vector<17x32xf32>
    %211 = arith.addf %182, %210 : vector<17x32xf32>
    %c0_178 = arith.constant 0 : index
    %c0_179 = arith.constant 0 : index
    %c0_180 = arith.constant 0 : index
    %212 = vector.load %arg25[%c0_178, %c0_179, %c0_180] : memref<1x17x1xf32, #tpu.memory_space<vmem>>, vector<1x17x1xf32>
    %213 = vector.shape_cast %212 : vector<1x17x1xf32> to vector<17x1xf32>
    %c0_181 = arith.constant 0 : index
    %c0_182 = arith.constant 0 : index
    %c0_183 = arith.constant 0 : index
    %214 = vector.load %arg26[%c0_181, %c0_182, %c0_183] : memref<1x17x1xf32, #tpu.memory_space<vmem>>, vector<1x17x1xf32>
    %215 = vector.shape_cast %214 : vector<1x17x1xf32> to vector<17x1xf32>
    %216 = vector.shape_cast %211 : vector<17x32xf32> to vector<1x17x32xf32>
    %cst_184 = arith.constant dense<0.000000e+00> : vector<1xf32>
    %217 = vector.multi_reduction <add>, %216, %cst_184 [1, 2] : vector<1x17x32xf32> to vector<1xf32>
    %218 = vector.shape_cast %217 : vector<1xf32> to vector<1x1x1xf32>
    %219 = vector.extract %218[0, 0, 0] : f32 from vector<1x1x1xf32>
    %cst_185 = arith.constant 5.440000e+02 : f32
    %220 = arith.divf %219, %cst_185 : f32
    %221 = vector.broadcast %220 : f32 to vector<17x32xf32>
    %222 = arith.subf %211, %221 : vector<17x32xf32>
    %223 = arith.mulf %222, %222 : vector<17x32xf32>
    %224 = vector.shape_cast %223 : vector<17x32xf32> to vector<1x17x32xf32>
    %cst_186 = arith.constant dense<0.000000e+00> : vector<1xf32>
    %225 = vector.multi_reduction <add>, %224, %cst_186 [1, 2] : vector<1x17x32xf32> to vector<1xf32>
    %226 = vector.shape_cast %225 : vector<1xf32> to vector<1x1x1xf32>
    %227 = vector.extract %226[0, 0, 0] : f32 from vector<1x1x1xf32>
    %cst_187 = arith.constant 5.440000e+02 : f32
    %228 = arith.divf %227, %cst_187 : f32
    %229 = vector.broadcast %220 : f32 to vector<17x32xf32>
    %230 = arith.subf %211, %229 : vector<17x32xf32>
    %cst_188 = arith.constant 9.99999974E-6 : f32
    %231 = arith.addf %228, %cst_188 : f32
    %232 = math.rsqrt %231 : f32
    %233 = vector.broadcast %232 : f32 to vector<17x32xf32>
    %234 = arith.mulf %230, %233 : vector<17x32xf32>
    %235 = vector.broadcast %213 : vector<17x1xf32> to vector<17x32xf32>
    %236 = arith.mulf %234, %235 : vector<17x32xf32>
    %237 = vector.broadcast %215 : vector<17x1xf32> to vector<17x32xf32>
    %238 = arith.addf %236, %237 : vector<17x32xf32>
    %c0_189 = arith.constant 0 : index
    %c0_190 = arith.constant 0 : index
    %239 = vector.load %arg28[%c0_189, %c0_190] : memref<17x32xf32, #tpu.memory_space<vmem>>, vector<17x32xf32>
    tpu.vector_store %arg28[%c0_189, %c0_190], %238 {strides = array<i32>} : memref<17x32xf32, #tpu.memory_space<vmem>>, vector<17x32xf32>,
    %c1_i32 = arith.constant 1 : i32
    %240 = arith.cmpi eq, %arg1, %c1_i32 : i32
    %241 = arith.extui %240 : i1 to i32
    %c0_i32_191 = arith.constant 0 : i32
    %242 = arith.cmpi ne, %241, %c0_i32_191 : i32
    scf.if %242 {
      %c0_192 = arith.constant 0 : index
      %c0_193 = arith.constant 0 : index
      %243 = vector.load %arg7[%c0_192, %c0_193] : memref<32x3xf32, #tpu.memory_space<vmem>>, vector<32x3xf32>
      %cst_194 = arith.constant dense<0.000000e+00> : vector<17x3xf32>
      %244 = tpu.matmul %238, %243, %cst_194 {dimension_numbers = #tpu.dot_dimension_numbers<[1], [0], [0], [1], [0, 0, 1, 1], [], []>} : vector<17x32xf32>, vector<32x3xf32>, vector<17x3xf32> -> vector<17x3xf32>
      %c0_195 = arith.constant 0 : index
      %c0_196 = arith.constant 0 : index
      %245 = vector.load %arg8[%c0_195, %c0_196] : memref<1x3xf32, #tpu.memory_space<vmem>>, vector<1x3xf32>
      %246 = vector.broadcast %245 : vector<1x3xf32> to vector<17x3xf32>
      %247 = arith.addf %244, %246 : vector<17x3xf32>
      %c0_197 = arith.constant 0 : index
      %c0_198 = arith.constant 0 : index
      %c0_199 = arith.constant 0 : index
      %248 = vector.load %arg27[%c0_197, %c0_198, %c0_199] : memref<1x17x3xf32, #tpu.memory_space<vmem>>, vector<1x17x3xf32>
      %249 = vector.shape_cast %248 : vector<1x17x3xf32> to vector<17x3xf32>
      %250 = vector.shape_cast %247 : vector<17x3xf32> to vector<1x17x3xf32>
      tpu.vector_store %arg27[%c0_197, %c0_198, %c0_199], %250 {strides = array<i32>} : memref<1x17x3xf32, #tpu.memory_space<vmem>>, vector<1x17x3xf32>,
    } else {
    }
    return
  }
  func.func @transform_0(%arg0: i32, %arg1: i32) -> (i32, i32, i32) {
    %c0_i32 = arith.constant 0 : i32
    %c0_i32_0 = arith.constant 0 : i32
    %c0_i32_1 = arith.constant 0 : i32
    return %arg0, %c0_i32, %c0_i32_0 : i32, i32, i32
  }
  func.func @transform_1(%arg0: i32, %arg1: i32) -> (i32, i32) {
    %c0_i32 = arith.constant 0 : i32
    %c0_i32_0 = arith.constant 0 : i32
    %c0_i32_1 = arith.constant 0 : i32
    return %c0_i32, %c0_i32_0 : i32, i32
  }
  func.func @transform_2(%arg0: i32, %arg1: i32) -> (i32, i32) {
    %c0_i32 = arith.constant 0 : i32
    %c0_i32_0 = arith.constant 0 : i32
    %c0_i32_1 = arith.constant 0 : i32
    return %c0_i32, %c0_i32_0 : i32, i32
  }
  func.func @transform_3(%arg0: i32, %arg1: i32) -> (i32, i32) {
    %c0_i32 = arith.constant 0 : i32
    %c0_i32_0 = arith.constant 0 : i32
    %c0_i32_1 = arith.constant 0 : i32
    return %c0_i32, %c0_i32_0 : i32, i32
  }
  func.func @transform_4(%arg0: i32, %arg1: i32) -> (i32, i32) {
    %c0_i32 = arith.constant 0 : i32
    %c0_i32_0 = arith.constant 0 : i32
    %c0_i32_1 = arith.constant 0 : i32
    return %c0_i32, %c0_i32_0 : i32, i32
  }
  func.func @transform_5(%arg0: i32, %arg1: i32) -> (i32, i32) {
    %c0_i32 = arith.constant 0 : i32
    %c0_i32_0 = arith.constant 0 : i32
    %c0_i32_1 = arith.constant 0 : i32
    return %c0_i32, %c0_i32_0 : i32, i32
  }
  func.func @transform_6(%arg0: i32, %arg1: i32) -> (i32, i32) {
    %c0_i32 = arith.constant 0 : i32
    %c0_i32_0 = arith.constant 0 : i32
    %c0_i32_1 = arith.constant 0 : i32
    return %c0_i32, %c0_i32_0 : i32, i32
  }
  func.func @transform_7(%arg0: i32, %arg1: i32) -> (i32, i32, i32, i32) {
    %c0_i32 = arith.constant 0 : i32
    %c0_i32_0 = arith.constant 0 : i32
    %c0_i32_1 = arith.constant 0 : i32
    %c0_i32_2 = arith.constant 0 : i32
    return %arg1, %c0_i32, %c0_i32_0, %c0_i32_1 : i32, i32, i32, i32
  }
  func.func @transform_8(%arg0: i32, %arg1: i32) -> (i32, i32, i32, i32) {
    %c0_i32 = arith.constant 0 : i32
    %c0_i32_0 = arith.constant 0 : i32
    %c0_i32_1 = arith.constant 0 : i32
    %c0_i32_2 = arith.constant 0 : i32
    return %arg1, %c0_i32, %c0_i32_0, %c0_i32_1 : i32, i32, i32, i32
  }
  func.func @transform_9(%arg0: i32, %arg1: i32) -> (i32, i32, i32, i32) {
    %c0_i32 = arith.constant 0 : i32
    %c0_i32_0 = arith.constant 0 : i32
    %c0_i32_1 = arith.constant 0 : i32
    %c0_i32_2 = arith.constant 0 : i32
    return %arg1, %c0_i32, %c0_i32_0, %c0_i32_1 : i32, i32, i32, i32
  }
  func.func @transform_10(%arg0: i32, %arg1: i32) -> (i32, i32, i32, i32) {
    %c0_i32 = arith.constant 0 : i32
    %c0_i32_0 = arith.constant 0 : i32
    %c0_i32_1 = arith.constant 0 : i32
    %c0_i32_2 = arith.constant 0 : i32
    return %arg1, %c0_i32, %c0_i32_0, %c0_i32_1 : i32, i32, i32, i32
  }
  func.func @transform_11(%arg0: i32, %arg1: i32) -> (i32, i32, i32, i32) {
    %c0_i32 = arith.constant 0 : i32
    %c0_i32_0 = arith.constant 0 : i32
    %c0_i32_1 = arith.constant 0 : i32
    %c0_i32_2 = arith.constant 0 : i32
    return %arg1, %c0_i32, %c0_i32_0, %c0_i32_1 : i32, i32, i32, i32
  }
  func.func @transform_12(%arg0: i32, %arg1: i32) -> (i32, i32, i32, i32) {
    %c0_i32 = arith.constant 0 : i32
    %c0_i32_0 = arith.constant 0 : i32
    %c0_i32_1 = arith.constant 0 : i32
    %c0_i32_2 = arith.constant 0 : i32
    return %arg1, %c0_i32, %c0_i32_0, %c0_i32_1 : i32, i32, i32, i32
  }
  func.func @transform_13(%arg0: i32, %arg1: i32) -> (i32, i32, i32, i32) {
    %c0_i32 = arith.constant 0 : i32
    %c0_i32_0 = arith.constant 0 : i32
    %c0_i32_1 = arith.constant 0 : i32
    %c0_i32_2 = arith.constant 0 : i32
    return %arg1, %c0_i32, %c0_i32_0, %c0_i32_1 : i32, i32, i32, i32
  }
  func.func @transform_14(%arg0: i32, %arg1: i32) -> (i32, i32, i32) {
    %c0_i32 = arith.constant 0 : i32
    %c0_i32_0 = arith.constant 0 : i32
    %c0_i32_1 = arith.constant 0 : i32
    return %arg1, %c0_i32, %c0_i32_0 : i32, i32, i32
  }
  func.func @transform_15(%arg0: i32, %arg1: i32) -> (i32, i32, i32) {
    %c0_i32 = arith.constant 0 : i32
    %c0_i32_0 = arith.constant 0 : i32
    %c0_i32_1 = arith.constant 0 : i32
    return %arg1, %c0_i32, %c0_i32_0 : i32, i32, i32
  }
  func.func @transform_16(%arg0: i32, %arg1: i32) -> (i32, i32, i32) {
    %c0_i32 = arith.constant 0 : i32
    %c0_i32_0 = arith.constant 0 : i32
    %c0_i32_1 = arith.constant 0 : i32
    return %arg1, %c0_i32, %c0_i32_0 : i32, i32, i32
  }
  func.func @transform_17(%arg0: i32, %arg1: i32) -> (i32, i32, i32) {
    %c0_i32 = arith.constant 0 : i32
    %c0_i32_0 = arith.constant 0 : i32
    %c0_i32_1 = arith.constant 0 : i32
    return %arg1, %c0_i32, %c0_i32_0 : i32, i32, i32
  }
  func.func @transform_18(%arg0: i32, %arg1: i32) -> (i32, i32, i32) {
    %c0_i32 = arith.constant 0 : i32
    %c0_i32_0 = arith.constant 0 : i32
    %c0_i32_1 = arith.constant 0 : i32
    return %arg1, %c0_i32, %c0_i32_0 : i32, i32, i32
  }
  func.func @transform_19(%arg0: i32, %arg1: i32) -> (i32, i32, i32) {
    %c0_i32 = arith.constant 0 : i32
    %c0_i32_0 = arith.constant 0 : i32
    %c0_i32_1 = arith.constant 0 : i32
    return %arg1, %c0_i32, %c0_i32_0 : i32, i32, i32
  }
  func.func @transform_20(%arg0: i32, %arg1: i32) -> (i32, i32, i32) {
    %c0_i32 = arith.constant 0 : i32
    %c0_i32_0 = arith.constant 0 : i32
    %c0_i32_1 = arith.constant 0 : i32
    return %arg1, %c0_i32, %c0_i32_0 : i32, i32, i32
  }
  func.func @transform_21(%arg0: i32, %arg1: i32) -> (i32, i32, i32) {
    %c0_i32 = arith.constant 0 : i32
    %c0_i32_0 = arith.constant 0 : i32
    %c0_i32_1 = arith.constant 0 : i32
    return %arg1, %c0_i32, %c0_i32_0 : i32, i32, i32
  }
  func.func @transform_22(%arg0: i32, %arg1: i32) -> (i32, i32, i32) {
    %c0_i32 = arith.constant 0 : i32
    %c0_i32_0 = arith.constant 0 : i32
    %c0_i32_1 = arith.constant 0 : i32
    return %arg1, %c0_i32, %c0_i32_0 : i32, i32, i32
  }
  func.func @transform_23(%arg0: i32, %arg1: i32) -> (i32, i32, i32) {
    %c0_i32 = arith.constant 0 : i32
    %c0_i32_0 = arith.constant 0 : i32
    %c0_i32_1 = arith.constant 0 : i32
    return %arg1, %c0_i32, %c0_i32_0 : i32, i32, i32
  }
  func.func @transform_24(%arg0: i32, %arg1: i32) -> (i32, i32, i32) {
    %c0_i32 = arith.constant 0 : i32
    %c0_i32_0 = arith.constant 0 : i32
    %c0_i32_1 = arith.constant 0 : i32
    return %arg1, %c0_i32, %c0_i32_0 : i32, i32, i32
  }
  func.func @transform_25(%arg0: i32, %arg1: i32) -> (i32, i32, i32) {
    %c0_i32 = arith.constant 0 : i32
    %c0_i32_0 = arith.constant 0 : i32
    %c0_i32_1 = arith.constant 0 : i32
    return %arg0, %c0_i32, %c0_i32_0 : i32, i32, i32
  }
}

</mosaic_0001>

<llo_original>
// kernel: forward.1
$region0: #{forward.1}
  #allocation0 [shape = 'u32[]', space=smem, size = 0x4, offset = 0x4, fixed_abs, tag = 'smem constant byte address 0x4 - core index']
  #allocation1 [shape = 'u32[144,128]{1,0:T(1,128)}', space=vmem, size = 0x12000, scoped, tag = 'internal scratch']
  #allocation2 [shape = 'f32[17,32]{1,0:T(8,128)}', space=vmem, size = 0x3000, scoped, tag = 'scratch operand']
  %s0 = inlined_call_operand.vmem [shape: f32[2,17,12], index: 0, kind: input, shape index: {}]
  %s1 = inlined_call_operand.vmem [shape: f32[12,32], index: 1, kind: input, shape index: {}]
  %s2 = inlined_call_operand.vmem [shape: f32[17,32], index: 2, kind: input, shape index: {}]
  %s3 = inlined_call_operand.vmem [shape: f32[17,32], index: 3, kind: input, shape index: {}]
  %s4 = inlined_call_operand.vmem [shape: f32[32,32], index: 4, kind: input, shape index: {}]
  %s5 = inlined_call_operand.vmem [shape: f32[32,3], index: 5, kind: input, shape index: {}]
  %s6 = inlined_call_operand.vmem [shape: f32[1,3], index: 6, kind: input, shape index: {}]
  %s7 = inlined_call_operand.vmem [shape: f32[2,4,32,8], index: 7, kind: input, shape index: {}]
  %s8 = inlined_call_operand.vmem [shape: f32[2,4,1,8], index: 8, kind: input, shape index: {}]
  %s9 = inlined_call_operand.vmem [shape: f32[2,4,32,8], index: 9, kind: input, shape index: {}]
  %s10 = inlined_call_operand.vmem [shape: f32[2,4,1,8], index: 10, kind: input, shape index: {}]
  %s11 = inlined_call_operand.vmem [shape: f32[2,4,32,8], index: 11, kind: input, shape index: {}]
  %s12 = inlined_call_operand.vmem [shape: f32[2,4,1,8], index: 12, kind: input, shape index: {}]
  %s13 = inlined_call_operand.vmem [shape: f32[2,4,8,32], index: 13, kind: input, shape index: {}]
  %s14 = inlined_call_operand.vmem [shape: f32[2,1,32], index: 14, kind: input, shape index: {}]
  %s15 = inlined_call_operand.vmem [shape: f32[2,17,1], index: 15, kind: input, shape index: {}]
  %s16 = inlined_call_operand.vmem [shape: f32[2,17,1], index: 16, kind: input, shape index: {}]
  %s17 = inlined_call_operand.vmem [shape: f32[2,32,85], index: 17, kind: input, shape index: {}]
  %s18 = inlined_call_operand.vmem [shape: f32[2,1,85], index: 18, kind: input, shape index: {}]
  %s19 = inlined_call_operand.vmem [shape: f32[2,32,85], index: 19, kind: input, shape index: {}]
  %s20 = inlined_call_operand.vmem [shape: f32[2,1,85], index: 20, kind: input, shape index: {}]
  %s21 = inlined_call_operand.vmem [shape: f32[2,85,32], index: 21, kind: input, shape index: {}]
  %s22 = inlined_call_operand.vmem [shape: f32[2,1,32], index: 22, kind: input, shape index: {}]
  %s23 = inlined_call_operand.vmem [shape: f32[2,17,1], index: 23, kind: input, shape index: {}]
  %s24 = inlined_call_operand.vmem [shape: f32[2,17,1], index: 24, kind: input, shape index: {}]
  %s25 = inlined_call_operand.vmem [shape: f32[2,17,3], index: 25, kind: output, shape index: {}]
  %s26 = sld [smem:[#allocation0]]
  $region141: #{forward.1} parent=0
    _
  %s28 = ssub.s32 1, %s26
  %s29 = scalar_select 0, %s28, %s26
  loop: start=0, step=1, limit=6
  $region2: #{forward.1} parent=0 // loop_pre_header
    _
  $region3: #{forward.1} parent=0 // loop_header
    %s31 = sphi 0, %s35
    %p32 = scmp.ge.s32.totalorder %s31, 6
    %s38 = sphi 0, %s50
    %s39 = sphi 0, %s46
    %s40 = sphi 0, %s38
    %s41 = sphi 0, %s39
    %s42 = sphi 0, %s40
    %s43 = sphi 0, %s41
    %s53 = sphi 0, %s55
    %s56 = sphi 0, %s53
    %s57 = sphi 0, %s56
    %s73 = sphi 0, %s57
    %s77 = sphi 0, %s77
    %s79 = sphi 0, %s77
    %s80 = sphi 0, %s79
    %s94 = sphi 0, %s80
    %s98 = sphi 0, %s98
    %s100 = sphi 0, %s98
    %s101 = sphi 0, %s100
    %s115 = sphi 0, %s101
    %s119 = sphi 0, %s119
    %s121 = sphi 0, %s119
    %s122 = sphi 0, %s121
    %s136 = sphi 0, %s122
    %s140 = sphi 0, %s140
    %s142 = sphi 0, %s140
    %s143 = sphi 0, %s142
    %s157 = sphi 0, %s143
    %s161 = sphi 0, %s161
    %s163 = sphi 0, %s161
    %s164 = sphi 0, %s163
    %s178 = sphi 0, %s164
    %s182 = sphi 0, %s182
    %s184 = sphi 0, %s182
    %s185 = sphi 0, %s184
    %s199 = sphi 0, %s185
    %s205 = sphi 0, %s207
    %s208 = sphi 0, %s205
    %s209 = sphi 0, %s208
    %s225 = sphi 0, %s209
    %s231 = sphi 0, %s233
    %s234 = sphi 0, %s231
    %s235 = sphi 0, %s234
    %s251 = sphi 0, %s235
    %s257 = sphi 0, %s259
    %s260 = sphi 0, %s257
    %s261 = sphi 0, %s260
    %s277 = sphi 0, %s261
    %s283 = sphi 0, %s285
    %s286 = sphi 0, %s283
    %s287 = sphi 0, %s286
    %s303 = sphi 0, %s287
    %s309 = sphi 0, %s311
    %s312 = sphi 0, %s309
    %s313 = sphi 0, %s312
    %s329 = sphi 0, %s313
    %s335 = sphi 0, %s337
    %s338 = sphi 0, %s335
    %s339 = sphi 0, %s338
    %s355 = sphi 0, %s339
    %s361 = sphi 0, %s363
    %s364 = sphi 0, %s361
    %s365 = sphi 0, %s364
    %s381 = sphi 0, %s365
    %s387 = sphi 0, %s389
    %s390 = sphi 0, %s387
    %s391 = sphi 0, %s390
    %s407 = sphi 0, %s391
    %s413 = sphi 0, %s415
    %s416 = sphi 0, %s413
    %s417 = sphi 0, %s416
    %s433 = sphi 0, %s417
    %s439 = sphi 0, %s441
    %s442 = sphi 0, %s439
    %s443 = sphi 0, %s442
    %s459 = sphi 0, %s443
    %s465 = sphi 0, %s467
    %s468 = sphi 0, %s465
    %s469 = sphi 0, %s468
    %s485 = sphi 0, %s469
    %s491 = sphi 0, %s493
    %s494 = sphi 0, %s491
    %s495 = sphi 0, %s494
    %s511 = sphi 0, %s495
    %s517 = sphi 0, %s519
    %s520 = sphi 0, %s517
    %s521 = sphi 0, %s520
    %s537 = sphi 0, %s521
    %s543 = sphi 0, %s545
    %s546 = sphi 0, %s543
    %s547 = sphi 0, %s546
    %s563 = sphi 0, %s547
    %s569 = sphi 0, %s571
    %s572 = sphi 0, %s569
    %s573 = sphi 0, %s572
    %s589 = sphi 0, %s573
    %s595 = sphi 0, %s597
    %s598 = sphi 0, %s595
    %s599 = sphi 0, %s598
    %s615 = sphi 0, %s599
    %s621 = sphi 0, %s623
    %s624 = sphi 0, %s621
    %s625 = sphi 0, %s624
    %s641 = sphi 0, %s625
    %s647 = sphi 0, %s649
    %s650 = sphi 0, %s647
    %s651 = sphi 0, %s650
    %s667 = sphi 0, %s651
    %s673 = sphi 0, %s675
    %s676 = sphi 0, %s673
    %s677 = sphi 0, %s676
    %s693 = sphi 0, %s677
  $region4: #{forward.1} parent=0 // loop_header_branch
    %34 = sbr.rel (%p32) target = $region8
  $region5: #{forward.1} parent=0 // loop_body
    %s36 = ssub.s32 %s31, 1
    %s37 = ssub.s32 %s31, 2
    %s44 = sadd.s32 1, %s39
    %p45 = scmp.ge.s32.totalorder %s44, 2
    %s46 = scalar_select %p45, 0, %s44
    %s47 = sadd.s32 1, %s38
    %s48 = scalar_select %p45, %s47, %s38
    %p49 = scmp.ge.s32.totalorder %s48, 2
    %s50 = scalar_select %p49, 0, %s48
    %s51 = ssub.s32 %s38, %s50
    %p52 = scmp.eq.s32.totalorder %s51, 0
    %s54 = sadd.s32 %s53, 1
    %s55 = scalar_select %p52, %s53, %s54
    %p58 = pneg %p52
    %p59 = scmp.eq.s32.totalorder %s31, 3
    %p60 = por %p58, %p59
    %p61 = scmp.ne.s32.totalorder %s53, %s56
    %p62 = scmp.eq.s32.totalorder %s31, 0
    %p63 = por %p61, %p62
    %p64 = scmp.ne.s32.totalorder %s53, %s56
    %p65 = scmp.eq.s32.totalorder %s36, 3
    %p66 = por %p64, %p65
    %p67 = scmp.ne.s32.totalorder %s56, %s57
    %p68 = scmp.eq.s32.totalorder %s36, 0
    %p69 = por %p67, %p68
    %p70 = scmp.ne.s32.totalorder %s56, %s57
    %p71 = scmp.eq.s32.totalorder %s37, 3
    %p72 = por %p70, %p71
    %p74 = scmp.ne.s32.totalorder %s57, %s73
    %p75 = scmp.eq.s32.totalorder %s37, 0
    %p76 = por %p74, %p75
    %s78 = sadd.s32 %s77, 1
    %p81 = scmp.eq.s32.totalorder %s31, 3
    %p82 = scmp.ne.s32.totalorder %s77, %s79
    %p83 = scmp.eq.s32.totalorder %s31, 0
    %p84 = por %p82, %p83
    %p85 = scmp.ne.s32.totalorder %s77, %s79
    %p86 = scmp.eq.s32.totalorder %s36, 3
    %p87 = por %p85, %p86
    %p88 = scmp.ne.s32.totalorder %s79, %s80
    %p89 = scmp.eq.s32.totalorder %s36, 0
    %p90 = por %p88, %p89
    %p91 = scmp.ne.s32.totalorder %s79, %s80
    %p92 = scmp.eq.s32.totalorder %s37, 3
    %p93 = por %p91, %p92
    %p95 = scmp.ne.s32.totalorder %s80, %s94
    %p96 = scmp.eq.s32.totalorder %s37, 0
    %p97 = por %p95, %p96
    %s99 = sadd.s32 %s98, 1
    %p102 = scmp.eq.s32.totalorder %s31, 3
    %p103 = scmp.ne.s32.totalorder %s98, %s100
    %p104 = scmp.eq.s32.totalorder %s31, 0
    %p105 = por %p103, %p104
    %p106 = scmp.ne.s32.totalorder %s98, %s100
    %p107 = scmp.eq.s32.totalorder %s36, 3
    %p108 = por %p106, %p107
    %p109 = scmp.ne.s32.totalorder %s100, %s101
    %p110 = scmp.eq.s32.totalorder %s36, 0
    %p111 = por %p109, %p110
    %p112 = scmp.ne.s32.totalorder %s100, %s101
    %p113 = scmp.eq.s32.totalorder %s37, 3
    %p114 = por %p112, %p113
    %p116 = scmp.ne.s32.totalorder %s101, %s115
    %p117 = scmp.eq.s32.totalorder %s37, 0
    %p118 = por %p116, %p117
    %s120 = sadd.s32 %s119, 1
    %p123 = scmp.eq.s32.totalorder %s31, 3
    %p124 = scmp.ne.s32.totalorder %s119, %s121
    %p125 = scmp.eq.s32.totalorder %s31, 0
    %p126 = por %p124, %p125
    %p127 = scmp.ne.s32.totalorder %s119, %s121
    %p128 = scmp.eq.s32.totalorder %s36, 3
    %p129 = por %p127, %p128
    %p130 = scmp.ne.s32.totalorder %s121, %s122
    %p131 = scmp.eq.s32.totalorder %s36, 0
    %p132 = por %p130, %p131
    %p133 = scmp.ne.s32.totalorder %s121, %s122
    %p134 = scmp.eq.s32.totalorder %s37, 3
    %p135 = por %p133, %p134
    %p137 = scmp.ne.s32.totalorder %s122, %s136
    %p138 = scmp.eq.s32.totalorder %s37, 0
    %p139 = por %p137, %p138
    %s141 = sadd.s32 %s140, 1
    %p144 = scmp.eq.s32.totalorder %s31, 3
    %p145 = scmp.ne.s32.totalorder %s140, %s142
    %p146 = scmp.eq.s32.totalorder %s31, 0
    %p147 = por %p145, %p146
    %p148 = scmp.ne.s32.totalorder %s140, %s142
    %p149 = scmp.eq.s32.totalorder %s36, 3
    %p150 = por %p148, %p149
    %p151 = scmp.ne.s32.totalorder %s142, %s143
    %p152 = scmp.eq.s32.totalorder %s36, 0
    %p153 = por %p151, %p152
    %p154 = scmp.ne.s32.totalorder %s142, %s143
    %p155 = scmp.eq.s32.totalorder %s37, 3
    %p156 = por %p154, %p155
    %p158 = scmp.ne.s32.totalorder %s143, %s157
    %p159 = scmp.eq.s32.totalorder %s37, 0
    %p160 = por %p158, %p159
    %s162 = sadd.s32 %s161, 1
    %p165 = scmp.eq.s32.totalorder %s31, 3
    %p166 = scmp.ne.s32.totalorder %s161, %s163
    %p167 = scmp.eq.s32.totalorder %s31, 0
    %p168 = por %p166, %p167
    %p169 = scmp.ne.s32.totalorder %s161, %s163
    %p170 = scmp.eq.s32.totalorder %s36, 3
    %p171 = por %p169, %p170
    %p172 = scmp.ne.s32.totalorder %s163, %s164
    %p173 = scmp.eq.s32.totalorder %s36, 0
    %p174 = por %p172, %p173
    %p175 = scmp.ne.s32.totalorder %s163, %s164
    %p176 = scmp.eq.s32.totalorder %s37, 3
    %p177 = por %p175, %p176
    %p179 = scmp.ne.s32.totalorder %s164, %s178
    %p180 = scmp.eq.s32.totalorder %s37, 0
    %p181 = por %p179, %p180
    %s183 = sadd.s32 %s182, 1
    %p186 = scmp.eq.s32.totalorder %s31, 3
    %p187 = scmp.ne.s32.totalorder %s182, %s184
    %p188 = scmp.eq.s32.totalorder %s31, 0
    %p189 = por %p187, %p188
    %p190 = scmp.ne.s32.totalorder %s182, %s184
    %p191 = scmp.eq.s32.totalorder %s36, 3
    %p192 = por %p190, %p191
    %p193 = scmp.ne.s32.totalorder %s184, %s185
    %p194 = scmp.eq.s32.totalorder %s36, 0
    %p195 = por %p193, %p194
    %p196 = scmp.ne.s32.totalorder %s184, %s185
    %p197 = scmp.eq.s32.totalorder %s37, 3
    %p198 = por %p196, %p197
    %p200 = scmp.ne.s32.totalorder %s185, %s199
    %p201 = scmp.eq.s32.totalorder %s37, 0
    %p202 = por %p200, %p201
    %s203 = ssub.s32 %s39, %s46
    %p204 = scmp.eq.s32.totalorder %s203, 0
    %s206 = sadd.s32 %s205, 1
    %s207 = scalar_select %p204, %s205, %s206
    %p210 = pneg %p204
    %p211 = scmp.eq.s32.totalorder %s31, 3
    %p212 = por %p210, %p211
    %p213 = scmp.ne.s32.totalorder %s205, %s208
    %p214 = scmp.eq.s32.totalorder %s31, 0
    %p215 = por %p213, %p214
    %p216 = scmp.ne.s32.totalorder %s205, %s208
    %p217 = scmp.eq.s32.totalorder %s36, 3
    %p218 = por %p216, %p217
    %p219 = scmp.ne.s32.totalorder %s208, %s209
    %p220 = scmp.eq.s32.totalorder %s36, 0
    %p221 = por %p219, %p220
    %p222 = scmp.ne.s32.totalorder %s208, %s209
    %p223 = scmp.eq.s32.totalorder %s37, 3
    %p224 = por %p222, %p223
    %p226 = scmp.ne.s32.totalorder %s209, %s225
    %p227 = scmp.eq.s32.totalorder %s37, 0
    %p228 = por %p226, %p227
    %s229 = ssub.s32 %s39, %s46
    %p230 = scmp.eq.s32.totalorder %s229, 0
    %s232 = sadd.s32 %s231, 1
    %s233 = scalar_select %p230, %s231, %s232
    %p236 = pneg %p230
    %p237 = scmp.eq.s32.totalorder %s31, 3
    %p238 = por %p236, %p237
    %p239 = scmp.ne.s32.totalorder %s231, %s234
    %p240 = scmp.eq.s32.totalorder %s31, 0
    %p241 = por %p239, %p240
    %p242 = scmp.ne.s32.totalorder %s231, %s234
    %p243 = scmp.eq.s32.totalorder %s36, 3
    %p244 = por %p242, %p243
    %p245 = scmp.ne.s32.totalorder %s234, %s235
    %p246 = scmp.eq.s32.totalorder %s36, 0
    %p247 = por %p245, %p246
    %p248 = scmp.ne.s32.totalorder %s234, %s235
    %p249 = scmp.eq.s32.totalorder %s37, 3
    %p250 = por %p248, %p249
    %p252 = scmp.ne.s32.totalorder %s235, %s251
    %p253 = scmp.eq.s32.totalorder %s37, 0
    %p254 = por %p252, %p253
    %s255 = ssub.s32 %s39, %s46
    %p256 = scmp.eq.s32.totalorder %s255, 0
    %s258 = sadd.s32 %s257, 1
    %s259 = scalar_select %p256, %s257, %s258
    %p262 = pneg %p256
    %p263 = scmp.eq.s32.totalorder %s31, 3
    %p264 = por %p262, %p263
    %p265 = scmp.ne.s32.totalorder %s257, %s260
    %p266 = scmp.eq.s32.totalorder %s31, 0
    %p267 = por %p265, %p266
    %p268 = scmp.ne.s32.totalorder %s257, %s260
    %p269 = scmp.eq.s32.totalorder %s36, 3
    %p270 = por %p268, %p269
    %p271 = scmp.ne.s32.totalorder %s260, %s261
    %p272 = scmp.eq.s32.totalorder %s36, 0
    %p273 = por %p271, %p272
    %p274 = scmp.ne.s32.totalorder %s260, %s261
    %p275 = scmp.eq.s32.totalorder %s37, 3
    %p276 = por %p274, %p275
    %p278 = scmp.ne.s32.totalorder %s261, %s277
    %p279 = scmp.eq.s32.totalorder %s37, 0
    %p280 = por %p278, %p279
    %s281 = ssub.s32 %s39, %s46
    %p282 = scmp.eq.s32.totalorder %s281, 0
    %s284 = sadd.s32 %s283, 1
    %s285 = scalar_select %p282, %s283, %s284
    %p288 = pneg %p282
    %p289 = scmp.eq.s32.totalorder %s31, 3
    %p290 = por %p288, %p289
    %p291 = scmp.ne.s32.totalorder %s283, %s286
    %p292 = scmp.eq.s32.totalorder %s31, 0
    %p293 = por %p291, %p292
    %p294 = scmp.ne.s32.totalorder %s283, %s286
    %p295 = scmp.eq.s32.totalorder %s36, 3
    %p296 = por %p294, %p295
    %p297 = scmp.ne.s32.totalorder %s286, %s287
    %p298 = scmp.eq.s32.totalorder %s36, 0
    %p299 = por %p297, %p298
    %p300 = scmp.ne.s32.totalorder %s286, %s287
    %p301 = scmp.eq.s32.totalorder %s37, 3
    %p302 = por %p300, %p301
    %p304 = scmp.ne.s32.totalorder %s287, %s303
    %p305 = scmp.eq.s32.totalorder %s37, 0
    %p306 = por %p304, %p305
    %s307 = ssub.s32 %s39, %s46
    %p308 = scmp.eq.s32.totalorder %s307, 0
    %s310 = sadd.s32 %s309, 1
    %s311 = scalar_select %p308, %s309, %s310
    %p314 = pneg %p308
    %p315 = scmp.eq.s32.totalorder %s31, 3
    %p316 = por %p314, %p315
    %p317 = scmp.ne.s32.totalorder %s309, %s312
    %p318 = scmp.eq.s32.totalorder %s31, 0
    %p319 = por %p317, %p318
    %p320 = scmp.ne.s32.totalorder %s309, %s312
    %p321 = scmp.eq.s32.totalorder %s36, 3
    %p322 = por %p320, %p321
    %p323 = scmp.ne.s32.totalorder %s312, %s313
    %p324 = scmp.eq.s32.totalorder %s36, 0
    %p325 = por %p323, %p324
    %p326 = scmp.ne.s32.totalorder %s312, %s313
    %p327 = scmp.eq.s32.totalorder %s37, 3
    %p328 = por %p326, %p327
    %p330 = scmp.ne.s32.totalorder %s313, %s329
    %p331 = scmp.eq.s32.totalorder %s37, 0
    %p332 = por %p330, %p331
    %s333 = ssub.s32 %s39, %s46
    %p334 = scmp.eq.s32.totalorder %s333, 0
    %s336 = sadd.s32 %s335, 1
    %s337 = scalar_select %p334, %s335, %s336
    %p340 = pneg %p334
    %p341 = scmp.eq.s32.totalorder %s31, 3
    %p342 = por %p340, %p341
    %p343 = scmp.ne.s32.totalorder %s335, %s338
    %p344 = scmp.eq.s32.totalorder %s31, 0
    %p345 = por %p343, %p344
    %p346 = scmp.ne.s32.totalorder %s335, %s338
    %p347 = scmp.eq.s32.totalorder %s36, 3
    %p348 = por %p346, %p347
    %p349 = scmp.ne.s32.totalorder %s338, %s339
    %p350 = scmp.eq.s32.totalorder %s36, 0
    %p351 = por %p349, %p350
    %p352 = scmp.ne.s32.totalorder %s338, %s339
    %p353 = scmp.eq.s32.totalorder %s37, 3
    %p354 = por %p352, %p353
    %p356 = scmp.ne.s32.totalorder %s339, %s355
    %p357 = scmp.eq.s32.totalorder %s37, 0
    %p358 = por %p356, %p357
    %s359 = ssub.s32 %s39, %s46
    %p360 = scmp.eq.s32.totalorder %s359, 0
    %s362 = sadd.s32 %s361, 1
    %s363 = scalar_select %p360, %s361, %s362
    %p366 = pneg %p360
    %p367 = scmp.eq.s32.totalorder %s31, 3
    %p368 = por %p366, %p367
    %p369 = scmp.ne.s32.totalorder %s361, %s364
    %p370 = scmp.eq.s32.totalorder %s31, 0
    %p371 = por %p369, %p370
    %p372 = scmp.ne.s32.totalorder %s361, %s364
    %p373 = scmp.eq.s32.totalorder %s36, 3
    %p374 = por %p372, %p373
    %p375 = scmp.ne.s32.totalorder %s364, %s365
    %p376 = scmp.eq.s32.totalorder %s36, 0
    %p377 = por %p375, %p376
    %p378 = scmp.ne.s32.totalorder %s364, %s365
    %p379 = scmp.eq.s32.totalorder %s37, 3
    %p380 = por %p378, %p379
    %p382 = scmp.ne.s32.totalorder %s365, %s381
    %p383 = scmp.eq.s32.totalorder %s37, 0
    %p384 = por %p382, %p383
    %s385 = ssub.s32 %s39, %s46
    %p386 = scmp.eq.s32.totalorder %s385, 0
    %s388 = sadd.s32 %s387, 1
    %s389 = scalar_select %p386, %s387, %s388
    %p392 = pneg %p386
    %p393 = scmp.eq.s32.totalorder %s31, 3
    %p394 = por %p392, %p393
    %p395 = scmp.ne.s32.totalorder %s387, %s390
    %p396 = scmp.eq.s32.totalorder %s31, 0
    %p397 = por %p395, %p396
    %p398 = scmp.ne.s32.totalorder %s387, %s390
    %p399 = scmp.eq.s32.totalorder %s36, 3
    %p400 = por %p398, %p399
    %p401 = scmp.ne.s32.totalorder %s390, %s391
    %p402 = scmp.eq.s32.totalorder %s36, 0
    %p403 = por %p401, %p402
    %p404 = scmp.ne.s32.totalorder %s390, %s391
    %p405 = scmp.eq.s32.totalorder %s37, 3
    %p406 = por %p404, %p405
    %p408 = scmp.ne.s32.totalorder %s391, %s407
    %p409 = scmp.eq.s32.totalorder %s37, 0
    %p410 = por %p408, %p409
    %s411 = ssub.s32 %s39, %s46
    %p412 = scmp.eq.s32.totalorder %s411, 0
    %s414 = sadd.s32 %s413, 1
    %s415 = scalar_select %p412, %s413, %s414
    %p418 = pneg %p412
    %p419 = scmp.eq.s32.totalorder %s31, 3
    %p420 = por %p418, %p419
    %p421 = scmp.ne.s32.totalorder %s413, %s416
    %p422 = scmp.eq.s32.totalorder %s31, 0
    %p423 = por %p421, %p422
    %p424 = scmp.ne.s32.totalorder %s413, %s416
    %p425 = scmp.eq.s32.totalorder %s36, 3
    %p426 = por %p424, %p425
    %p427 = scmp.ne.s32.totalorder %s416, %s417
    %p428 = scmp.eq.s32.totalorder %s36, 0
    %p429 = por %p427, %p428
    %p430 = scmp.ne.s32.totalorder %s416, %s417
    %p431 = scmp.eq.s32.totalorder %s37, 3
    %p432 = por %p430, %p431
    %p434 = scmp.ne.s32.totalorder %s417, %s433
    %p435 = scmp.eq.s32.totalorder %s37, 0
    %p436 = por %p434, %p435
    %s437 = ssub.s32 %s39, %s46
    %p438 = scmp.eq.s32.totalorder %s437, 0
    %s440 = sadd.s32 %s439, 1
    %s441 = scalar_select %p438, %s439, %s440
    %p444 = pneg %p438
    %p445 = scmp.eq.s32.totalorder %s31, 3
    %p446 = por %p444, %p445
    %p447 = scmp.ne.s32.totalorder %s439, %s442
    %p448 = scmp.eq.s32.totalorder %s31, 0
    %p449 = por %p447, %p448
    %p450 = scmp.ne.s32.totalorder %s439, %s442
    %p451 = scmp.eq.s32.totalorder %s36, 3
    %p452 = por %p450, %p451
    %p453 = scmp.ne.s32.totalorder %s442, %s443
    %p454 = scmp.eq.s32.totalorder %s36, 0
    %p455 = por %p453, %p454
    %p456 = scmp.ne.s32.totalorder %s442, %s443
    %p457 = scmp.eq.s32.totalorder %s37, 3
    %p458 = por %p456, %p457
    %p460 = scmp.ne.s32.totalorder %s443, %s459
    %p461 = scmp.eq.s32.totalorder %s37, 0
    %p462 = por %p460, %p461
    %s463 = ssub.s32 %s39, %s46
    %p464 = scmp.eq.s32.totalorder %s463, 0
    %s466 = sadd.s32 %s465, 1
    %s467 = scalar_select %p464, %s465, %s466
    %p470 = pneg %p464
    %p471 = scmp.eq.s32.totalorder %s31, 3
    %p472 = por %p470, %p471
    %p473 = scmp.ne.s32.totalorder %s465, %s468
    %p474 = scmp.eq.s32.totalorder %s31, 0
    %p475 = por %p473, %p474
    %p476 = scmp.ne.s32.totalorder %s465, %s468
    %p477 = scmp.eq.s32.totalorder %s36, 3
    %p478 = por %p476, %p477
    %p479 = scmp.ne.s32.totalorder %s468, %s469
    %p480 = scmp.eq.s32.totalorder %s36, 0
    %p481 = por %p479, %p480
    %p482 = scmp.ne.s32.totalorder %s468, %s469
    %p483 = scmp.eq.s32.totalorder %s37, 3
    %p484 = por %p482, %p483
    %p486 = scmp.ne.s32.totalorder %s469, %s485
    %p487 = scmp.eq.s32.totalorder %s37, 0
    %p488 = por %p486, %p487
    %s489 = ssub.s32 %s39, %s46
    %p490 = scmp.eq.s32.totalorder %s489, 0
    %s492 = sadd.s32 %s491, 1
    %s493 = scalar_select %p490, %s491, %s492
    %p496 = pneg %p490
    %p497 = scmp.eq.s32.totalorder %s31, 3
    %p498 = por %p496, %p497
    %p499 = scmp.ne.s32.totalorder %s491, %s494
    %p500 = scmp.eq.s32.totalorder %s31, 0
    %p501 = por %p499, %p500
    %p502 = scmp.ne.s32.totalorder %s491, %s494
    %p503 = scmp.eq.s32.totalorder %s36, 3
    %p504 = por %p502, %p503
    %p505 = scmp.ne.s32.totalorder %s494, %s495
    %p506 = scmp.eq.s32.totalorder %s36, 0
    %p507 = por %p505, %p506
    %p508 = scmp.ne.s32.totalorder %s494, %s495
    %p509 = scmp.eq.s32.totalorder %s37, 3
    %p510 = por %p508, %p509
    %p512 = scmp.ne.s32.totalorder %s495, %s511
    %p513 = scmp.eq.s32.totalorder %s37, 0
    %p514 = por %p512, %p513
    %s515 = ssub.s32 %s39, %s46
    %p516 = scmp.eq.s32.totalorder %s515, 0
    %s518 = sadd.s32 %s517, 1
    %s519 = scalar_select %p516, %s517, %s518
    %p522 = pneg %p516
    %p523 = scmp.eq.s32.totalorder %s31, 3
    %p524 = por %p522, %p523
    %p525 = scmp.ne.s32.totalorder %s517, %s520
    %p526 = scmp.eq.s32.totalorder %s31, 0
    %p527 = por %p525, %p526
    %p528 = scmp.ne.s32.totalorder %s517, %s520
    %p529 = scmp.eq.s32.totalorder %s36, 3
    %p530 = por %p528, %p529
    %p531 = scmp.ne.s32.totalorder %s520, %s521
    %p532 = scmp.eq.s32.totalorder %s36, 0
    %p533 = por %p531, %p532
    %p534 = scmp.ne.s32.totalorder %s520, %s521
    %p535 = scmp.eq.s32.totalorder %s37, 3
    %p536 = por %p534, %p535
    %p538 = scmp.ne.s32.totalorder %s521, %s537
    %p539 = scmp.eq.s32.totalorder %s37, 0
    %p540 = por %p538, %p539
    %s541 = ssub.s32 %s39, %s46
    %p542 = scmp.eq.s32.totalorder %s541, 0
    %s544 = sadd.s32 %s543, 1
    %s545 = scalar_select %p542, %s543, %s544
    %p548 = pneg %p542
    %p549 = scmp.eq.s32.totalorder %s31, 3
    %p550 = por %p548, %p549
    %p551 = scmp.ne.s32.totalorder %s543, %s546
    %p552 = scmp.eq.s32.totalorder %s31, 0
    %p553 = por %p551, %p552
    %p554 = scmp.ne.s32.totalorder %s543, %s546
    %p555 = scmp.eq.s32.totalorder %s36, 3
    %p556 = por %p554, %p555
    %p557 = scmp.ne.s32.totalorder %s546, %s547
    %p558 = scmp.eq.s32.totalorder %s36, 0
    %p559 = por %p557, %p558
    %p560 = scmp.ne.s32.totalorder %s546, %s547
    %p561 = scmp.eq.s32.totalorder %s37, 3
    %p562 = por %p560, %p561
    %p564 = scmp.ne.s32.totalorder %s547, %s563
    %p565 = scmp.eq.s32.totalorder %s37, 0
    %p566 = por %p564, %p565
    %s567 = ssub.s32 %s39, %s46
    %p568 = scmp.eq.s32.totalorder %s567, 0
    %s570 = sadd.s32 %s569, 1
    %s571 = scalar_select %p568, %s569, %s570
    %p574 = pneg %p568
    %p575 = scmp.eq.s32.totalorder %s31, 3
    %p576 = por %p574, %p575
    %p577 = scmp.ne.s32.totalorder %s569, %s572
    %p578 = scmp.eq.s32.totalorder %s31, 0
    %p579 = por %p577, %p578
    %p580 = scmp.ne.s32.totalorder %s569, %s572
    %p581 = scmp.eq.s32.totalorder %s36, 3
    %p582 = por %p580, %p581
    %p583 = scmp.ne.s32.totalorder %s572, %s573
    %p584 = scmp.eq.s32.totalorder %s36, 0
    %p585 = por %p583, %p584
    %p586 = scmp.ne.s32.totalorder %s572, %s573
    %p587 = scmp.eq.s32.totalorder %s37, 3
    %p588 = por %p586, %p587
    %p590 = scmp.ne.s32.totalorder %s573, %s589
    %p591 = scmp.eq.s32.totalorder %s37, 0
    %p592 = por %p590, %p591
    %s593 = ssub.s32 %s39, %s46
    %p594 = scmp.eq.s32.totalorder %s593, 0
    %s596 = sadd.s32 %s595, 1
    %s597 = scalar_select %p594, %s595, %s596
    %p600 = pneg %p594
    %p601 = scmp.eq.s32.totalorder %s31, 3
    %p602 = por %p600, %p601
    %p603 = scmp.ne.s32.totalorder %s595, %s598
    %p604 = scmp.eq.s32.totalorder %s31, 0
    %p605 = por %p603, %p604
    %p606 = scmp.ne.s32.totalorder %s595, %s598
    %p607 = scmp.eq.s32.totalorder %s36, 3
    %p608 = por %p606, %p607
    %p609 = scmp.ne.s32.totalorder %s598, %s599
    %p610 = scmp.eq.s32.totalorder %s36, 0
    %p611 = por %p609, %p610
    %p612 = scmp.ne.s32.totalorder %s598, %s599
    %p613 = scmp.eq.s32.totalorder %s37, 3
    %p614 = por %p612, %p613
    %p616 = scmp.ne.s32.totalorder %s599, %s615
    %p617 = scmp.eq.s32.totalorder %s37, 0
    %p618 = por %p616, %p617
    %s619 = ssub.s32 %s39, %s46
    %p620 = scmp.eq.s32.totalorder %s619, 0
    %s622 = sadd.s32 %s621, 1
    %s623 = scalar_select %p620, %s621, %s622
    %p626 = pneg %p620
    %p627 = scmp.eq.s32.totalorder %s31, 3
    %p628 = por %p626, %p627
    %p629 = scmp.ne.s32.totalorder %s621, %s624
    %p630 = scmp.eq.s32.totalorder %s31, 0
    %p631 = por %p629, %p630
    %p632 = scmp.ne.s32.totalorder %s621, %s624
    %p633 = scmp.eq.s32.totalorder %s36, 3
    %p634 = por %p632, %p633
    %p635 = scmp.ne.s32.totalorder %s624, %s625
    %p636 = scmp.eq.s32.totalorder %s36, 0
    %p637 = por %p635, %p636
    %p638 = scmp.ne.s32.totalorder %s624, %s625
    %p639 = scmp.eq.s32.totalorder %s37, 3
    %p640 = por %p638, %p639
    %p642 = scmp.ne.s32.totalorder %s625, %s641
    %p643 = scmp.eq.s32.totalorder %s37, 0
    %p644 = por %p642, %p643
    %s645 = ssub.s32 %s39, %s46
    %p646 = scmp.eq.s32.totalorder %s645, 0
    %s648 = sadd.s32 %s647, 1
    %s649 = scalar_select %p646, %s647, %s648
    %p652 = pneg %p646
    %p653 = scmp.eq.s32.totalorder %s31, 3
    %p654 = por %p652, %p653
    %p655 = scmp.ne.s32.totalorder %s647, %s650
    %p656 = scmp.eq.s32.totalorder %s31, 0
    %p657 = por %p655, %p656
    %p658 = scmp.ne.s32.totalorder %s647, %s650
    %p659 = scmp.eq.s32.totalorder %s36, 3
    %p660 = por %p658, %p659
    %p661 = scmp.ne.s32.totalorder %s650, %s651
    %p662 = scmp.eq.s32.totalorder %s36, 0
    %p663 = por %p661, %p662
    %p664 = scmp.ne.s32.totalorder %s650, %s651
    %p665 = scmp.eq.s32.totalorder %s37, 3
    %p666 = por %p664, %p665
    %p668 = scmp.ne.s32.totalorder %s651, %s667
    %p669 = scmp.eq.s32.totalorder %s37, 0
    %p670 = por %p668, %p669
    %s671 = ssub.s32 %s38, %s50
    %p672 = scmp.eq.s32.totalorder %s671, 0
    %s674 = sadd.s32 %s673, 1
    %s675 = scalar_select %p672, %s673, %s674
    %p678 = pneg %p672
    %p679 = scmp.eq.s32.totalorder %s31, 3
    %p680 = por %p678, %p679
    %p681 = scmp.ne.s32.totalorder %s673, %s676
    %p682 = scmp.eq.s32.totalorder %s31, 0
    %p683 = por %p681, %p682
    %p684 = scmp.ne.s32.totalorder %s673, %s676
    %p685 = scmp.eq.s32.totalorder %s36, 3
    %p686 = por %p684, %p685
    %p687 = scmp.ne.s32.totalorder %s676, %s677
    %p688 = scmp.eq.s32.totalorder %s36, 0
    %p689 = por %p687, %p688
    %p690 = scmp.ne.s32.totalorder %s676, %s677
    %p691 = scmp.eq.s32.totalorder %s37, 3
    %p692 = por %p690, %p691
    %p694 = scmp.ne.s32.totalorder %s677, %s693
    %p695 = scmp.eq.s32.totalorder %s37, 0
    %p696 = por %p694, %p695
    %p697 = scmp.le.s32.totalorder 1, %s31
    %p698 = scmp.lt.s32.totalorder %s31, 5
    %p699 = pnand %p697, %p698
    %p700 = pneg %p699
    // Predicated region
    $region9: #{forward.1} parent=5 // pred_check
      _
    $region10: #{forward.1} parent=5 // pred_check_branch
      %702 = sbr.rel (%p699) target = $region12
    $region11: #{forward.1} parent=5 // pred_region
      %s703 = ssub.s32 %s31, 1
      // Predicated region
      $region13: #{forward.1} parent=11 // pred_check
        %p704 = pneg %p90
      $region14: #{forward.1} parent=11 // pred_check_branch
        %706 = sbr.rel (%p704) target = $region16
      $region15: #{forward.1} parent=11 // pred_region
        _
      $region16: #{forward.1} parent=11 // pred_fallthru
        _
      // Predicated region
      $region17: #{forward.1} parent=11 // pred_check
        %p707 = pneg %p111
      $region18: #{forward.1} parent=11 // pred_check_branch
        %709 = sbr.rel (%p707) target = $region20
      $region19: #{forward.1} parent=11 // pred_region
        _
      $region20: #{forward.1} parent=11 // pred_fallthru
        _
      // Predicated region
      $region21: #{forward.1} parent=11 // pred_check
        %p710 = pneg %p132
      $region22: #{forward.1} parent=11 // pred_check_branch
        %712 = sbr.rel (%p710) target = $region24
      $region23: #{forward.1} parent=11 // pred_region
        _
      $region24: #{forward.1} parent=11 // pred_fallthru
        _
      // Predicated region
      $region25: #{forward.1} parent=11 // pred_check
        %p713 = pneg %p153
      $region26: #{forward.1} parent=11 // pred_check_branch
        %715 = sbr.rel (%p713) target = $region28
      $region27: #{forward.1} parent=11 // pred_region
        _
      $region28: #{forward.1} parent=11 // pred_fallthru
        _
      // Predicated region
      $region29: #{forward.1} parent=11 // pred_check
        %p716 = pneg %p174
      $region30: #{forward.1} parent=11 // pred_check_branch
        %718 = sbr.rel (%p716) target = $region32
      $region31: #{forward.1} parent=11 // pred_region
        _
      $region32: #{forward.1} parent=11 // pred_fallthru
        _
      // Predicated region
      $region33: #{forward.1} parent=11 // pred_check
        %p719 = pneg %p195
      $region34: #{forward.1} parent=11 // pred_check_branch
        %721 = sbr.rel (%p719) target = $region36
      $region35: #{forward.1} parent=11 // pred_region
        _
      $region36: #{forward.1} parent=11 // pred_fallthru
        _
    $region12: #{forward.1} parent=5 // pred_fallthru
      _
    %p722 = scmp.lt.s32.totalorder %s31, 4
    // Predicated region
    $region37: #{forward.1} parent=5 // pred_check
      %p723 = pneg %p722
    $region38: #{forward.1} parent=5 // pred_check_branch
      %725 = sbr.rel (%p723) target = $region40
    $region39: #{forward.1} parent=5 // pred_region
      // Predicated region
      $region41: #{forward.1} parent=39 // pred_check
        %p726 = pneg %p63
      $region42: #{forward.1} parent=39 // pred_check_branch
        %728 = sbr.rel (%p726) target = $region44
      $region43: #{forward.1} parent=39 // pred_region
        %p729 = scmp.lt.s32.totalorder %s38, 1
        %s730 = scalar_select %p729, %s38, 1
        %s731 = smul.addr %s730, 3
        %s732 = smul.addr %s731, 8
        %s733 = scalar_lea.vmem %s0, %s732
      $region44: #{forward.1} parent=39 // pred_fallthru
        _
      // Predicated region
      $region45: #{forward.1} parent=39 // pred_check
        %p734 = pneg %p215
      $region46: #{forward.1} parent=39 // pred_check_branch
        %736 = sbr.rel (%p734) target = $region48
      $region47: #{forward.1} parent=39 // pred_region
        %p737 = scmp.lt.s32.totalorder %s39, 1
        %s738 = scalar_select %p737, %s39, 1
        %s739 = smul.addr %s738, 16
        %s740 = smul.addr %s739, 8
        %s741 = scalar_lea.vmem %s7, %s740
      $region48: #{forward.1} parent=39 // pred_fallthru
        _
      // Predicated region
      $region49: #{forward.1} parent=39 // pred_check
        %p742 = pneg %p241
      $region50: #{forward.1} parent=39 // pred_check_branch
        %744 = sbr.rel (%p742) target = $region52
      $region51: #{forward.1} parent=39 // pred_region
        %p745 = scmp.lt.s32.totalorder %s39, 1
        %s746 = scalar_select %p745, %s39, 1
        %s747 = smul.addr %s746, 4
        %s748 = scalar_lea.vmem %s8, %s747
      $region52: #{forward.1} parent=39 // pred_fallthru
        _
      // Predicated region
      $region53: #{forward.1} parent=39 // pred_check
        %p749 = pneg %p267
      $region54: #{forward.1} parent=39 // pred_check_branch
        %751 = sbr.rel (%p749) target = $region56
      $region55: #{forward.1} parent=39 // pred_region
        %p752 = scmp.lt.s32.totalorder %s39, 1
        %s753 = scalar_select %p752, %s39, 1
        %s754 = smul.addr %s753, 16
        %s755 = smul.addr %s754, 8
        %s756 = scalar_lea.vmem %s9, %s755
      $region56: #{forward.1} parent=39 // pred_fallthru
        _
      // Predicated region
      $region57: #{forward.1} parent=39 // pred_check
        %p757 = pneg %p293
      $region58: #{forward.1} parent=39 // pred_check_branch
        %759 = sbr.rel (%p757) target = $region60
      $region59: #{forward.1} parent=39 // pred_region
        %p760 = scmp.lt.s32.totalorder %s39, 1
        %s761 = scalar_select %p760, %s39, 1
        %s762 = smul.addr %s761, 4
        %s763 = scalar_lea.vmem %s10, %s762
      $region60: #{forward.1} parent=39 // pred_fallthru
        _
      // Predicated region
      $region61: #{forward.1} parent=39 // pred_check
        %p764 = pneg %p319
      $region62: #{forward.1} parent=39 // pred_check_branch
        %766 = sbr.rel (%p764) target = $region64
      $region63: #{forward.1} parent=39 // pred_region
        %p767 = scmp.lt.s32.totalorder %s39, 1
        %s768 = scalar_select %p767, %s39, 1
        %s769 = smul.addr %s768, 16
        %s770 = smul.addr %s769, 8
        %s771 = scalar_lea.vmem %s11, %s770
      $region64: #{forward.1} parent=39 // pred_fallthru
        _
      // Predicated region
      $region65: #{forward.1} parent=39 // pred_check
        %p772 = pneg %p345
      $region66: #{forward.1} parent=39 // pred_check_branch
        %774 = sbr.rel (%p772) target = $region68
      $region67: #{forward.1} parent=39 // pred_region
        %p775 = scmp.lt.s32.totalorder %s39, 1
        %s776 = scalar_select %p775, %s39, 1
        %s777 = smul.addr %s776, 4
        %s778 = scalar_lea.vmem %s12, %s777
      $region68: #{forward.1} parent=39 // pred_fallthru
        _
      // Predicated region
      $region69: #{forward.1} parent=39 // pred_check
        %p779 = pneg %p371
      $region70: #{forward.1} parent=39 // pred_check_branch
        %781 = sbr.rel (%p779) target = $region72
      $region71: #{forward.1} parent=39 // pred_region
        %p782 = scmp.lt.s32.totalorder %s39, 1
        %s783 = scalar_select %p782, %s39, 1
        %s784 = smul.addr %s783, 4
        %s785 = smul.addr %s784, 8
        %s786 = scalar_lea.vmem %s13, %s785
      $region72: #{forward.1} parent=39 // pred_fallthru
        _
      // Predicated region
      $region73: #{forward.1} parent=39 // pred_check
        %p787 = pneg %p397
      $region74: #{forward.1} parent=39 // pred_check_branch
        %789 = sbr.rel (%p787) target = $region76
      $region75: #{forward.1} parent=39 // pred_region
        %p790 = scmp.lt.s32.totalorder %s39, 1
        %s791 = scalar_select %p790, %s39, 1
        %s792 = scalar_lea.vmem %s14, %s791
      $region76: #{forward.1} parent=39 // pred_fallthru
        _
      // Predicated region
      $region77: #{forward.1} parent=39 // pred_check
        %p793 = pneg %p423
      $region78: #{forward.1} parent=39 // pred_check_branch
        %795 = sbr.rel (%p793) target = $region80
      $region79: #{forward.1} parent=39 // pred_region
        %p796 = scmp.lt.s32.totalorder %s39, 1
        %s797 = scalar_select %p796, %s39, 1
        %s798 = smul.addr %s797, 3
        %s799 = smul.addr %s798, 8
        %s800 = scalar_lea.vmem %s15, %s799
      $region80: #{forward.1} parent=39 // pred_fallthru
        _
      // Predicated region
      $region81: #{forward.1} parent=39 // pred_check
        %p801 = pneg %p449
      $region82: #{forward.1} parent=39 // pred_check_branch
        %803 = sbr.rel (%p801) target = $region84
      $region83: #{forward.1} parent=39 // pred_region
        %p804 = scmp.lt.s32.totalorder %s39, 1
        %s805 = scalar_select %p804, %s39, 1
        %s806 = smul.addr %s805, 3
        %s807 = smul.addr %s806, 8
        %s808 = scalar_lea.vmem %s16, %s807
      $region84: #{forward.1} parent=39 // pred_fallthru
        _
      // Predicated region
      $region85: #{forward.1} parent=39 // pred_check
        %p809 = pneg %p475
      $region86: #{forward.1} parent=39 // pred_check_branch
        %811 = sbr.rel (%p809) target = $region88
      $region87: #{forward.1} parent=39 // pred_region
        %p812 = scmp.lt.s32.totalorder %s39, 1
        %s813 = scalar_select %p812, %s39, 1
        %s814 = smul.addr %s813, 4
        %s815 = smul.addr %s814, 8
        %s816 = scalar_lea.vmem %s17, %s815
      $region88: #{forward.1} parent=39 // pred_fallthru
        _
      // Predicated region
      $region89: #{forward.1} parent=39 // pred_check
        %p817 = pneg %p501
      $region90: #{forward.1} parent=39 // pred_check_branch
        %819 = sbr.rel (%p817) target = $region92
      $region91: #{forward.1} parent=39 // pred_region
        %p820 = scmp.lt.s32.totalorder %s39, 1
        %s821 = scalar_select %p820, %s39, 1
        %s822 = scalar_lea.vmem %s18, %s821
      $region92: #{forward.1} parent=39 // pred_fallthru
        _
      // Predicated region
      $region93: #{forward.1} parent=39 // pred_check
        %p823 = pneg %p527
      $region94: #{forward.1} parent=39 // pred_check_branch
        %825 = sbr.rel (%p823) target = $region96
      $region95: #{forward.1} parent=39 // pred_region
        %p826 = scmp.lt.s32.totalorder %s39, 1
        %s827 = scalar_select %p826, %s39, 1
        %s828 = smul.addr %s827, 4
        %s829 = smul.addr %s828, 8
        %s830 = scalar_lea.vmem %s19, %s829
      $region96: #{forward.1} parent=39 // pred_fallthru
        _
      // Predicated region
      $region97: #{forward.1} parent=39 // pred_check
        %p831 = pneg %p553
      $region98: #{forward.1} parent=39 // pred_check_branch
        %833 = sbr.rel (%p831) target = $region100
      $region99: #{forward.1} parent=39 // pred_region
        %p834 = scmp.lt.s32.totalorder %s39, 1
        %s835 = scalar_select %p834, %s39, 1
        %s836 = scalar_lea.vmem %s20, %s835
      $region100: #{forward.1} parent=39 // pred_fallthru
        _
      // Predicated region
      $region101: #{forward.1} parent=39 // pred_check
        %p837 = pneg %p579
      $region102: #{forward.1} parent=39 // pred_check_branch
        %839 = sbr.rel (%p837) target = $region104
      $region103: #{forward.1} parent=39 // pred_region
        %p840 = scmp.lt.s32.totalorder %s39, 1
        %s841 = scalar_select %p840, %s39, 1
        %s842 = smul.addr %s841, 11
        %s843 = smul.addr %s842, 8
        %s844 = scalar_lea.vmem %s21, %s843
      $region104: #{forward.1} parent=39 // pred_fallthru
        _
      // Predicated region
      $region105: #{forward.1} parent=39 // pred_check
        %p845 = pneg %p605
      $region106: #{forward.1} parent=39 // pred_check_branch
        %847 = sbr.rel (%p845) target = $region108
      $region107: #{forward.1} parent=39 // pred_region
        %p848 = scmp.lt.s32.totalorder %s39, 1
        %s849 = scalar_select %p848, %s39, 1
        %s850 = scalar_lea.vmem %s22, %s849
      $region108: #{forward.1} parent=39 // pred_fallthru
        _
      // Predicated region
      $region109: #{forward.1} parent=39 // pred_check
        %p851 = pneg %p631
      $region110: #{forward.1} parent=39 // pred_check_branch
        %853 = sbr.rel (%p851) target = $region112
      $region111: #{forward.1} parent=39 // pred_region
        %p854 = scmp.lt.s32.totalorder %s39, 1
        %s855 = scalar_select %p854, %s39, 1
        %s856 = smul.addr %s855, 3
        %s857 = smul.addr %s856, 8
        %s858 = scalar_lea.vmem %s23, %s857
      $region112: #{forward.1} parent=39 // pred_fallthru
        _
      // Predicated region
      $region113: #{forward.1} parent=39 // pred_check
        %p859 = pneg %p657
      $region114: #{forward.1} parent=39 // pred_check_branch
        %861 = sbr.rel (%p859) target = $region116
      $region115: #{forward.1} parent=39 // pred_region
        %p862 = scmp.lt.s32.totalorder %s39, 1
        %s863 = scalar_select %p862, %s39, 1
        %s864 = smul.addr %s863, 3
        %s865 = smul.addr %s864, 8
        %s866 = scalar_lea.vmem %s24, %s865
      $region116: #{forward.1} parent=39 // pred_fallthru
        _
    $region40: #{forward.1} parent=5 // pred_fallthru
      _
    %p867 = scmp.le.s32.totalorder 1, %s31
    %p868 = scmp.lt.s32.totalorder %s31, 5
    %p869 = pnand %p867, %p868
    %p870 = pneg %p869
    // Predicated region
    $region117: #{forward.1} parent=5 // pred_check
      _
    $region118: #{forward.1} parent=5 // pred_check_branch
      %872 = sbr.rel (%p869) target = $region120
    $region119: #{forward.1} parent=5 // pred_region
      %s873 = ssub.s32 %s31, 1
      %p874 = scmp.lt.s32.totalorder %s40, 1
      %s875 = scalar_select %p874, %s40, 1
      %s876 = smul.addr %s875, 3
      %s877 = smul.addr %s876, 8
      %s878 = scalar_lea.vmem %s0, %s877
      %p879 = pneg %p69
      %p880 = pneg %p66
      %p881 = pneg %p90
      %p882 = pneg %p87
      %p883 = pneg %p111
      %p884 = pneg %p108
      %p885 = pneg %p132
      %p886 = pneg %p129
      %p887 = pneg %p153
      %p888 = pneg %p150
      %p889 = pneg %p174
      %p890 = pneg %p171
      %p891 = pneg %p195
      %p892 = pneg %p192
      %p893 = scmp.lt.s32.totalorder %s41, 1
      %s894 = scalar_select %p893, %s41, 1
      %s895 = smul.addr %s894, 16
      %s896 = smul.addr %s895, 8
      %s897 = scalar_lea.vmem %s7, %s896
      %p898 = pneg %p221
      %p899 = pneg %p218
      %p900 = scmp.lt.s32.totalorder %s41, 1
      %s901 = scalar_select %p900, %s41, 1
      %s902 = smul.addr %s901, 4
      %s903 = scalar_lea.vmem %s8, %s902
      %p904 = pneg %p247
      %p905 = pneg %p244
      %p906 = scmp.lt.s32.totalorder %s41, 1
      %s907 = scalar_select %p906, %s41, 1
      %s908 = smul.addr %s907, 16
      %s909 = smul.addr %s908, 8
      %s910 = scalar_lea.vmem %s9, %s909
      %p911 = pneg %p273
      %p912 = pneg %p270
      %p913 = scmp.lt.s32.totalorder %s41, 1
      %s914 = scalar_select %p913, %s41, 1
      %s915 = smul.addr %s914, 4
      %s916 = scalar_lea.vmem %s10, %s915
      %p917 = pneg %p299
      %p918 = pneg %p296
      %p919 = scmp.lt.s32.totalorder %s41, 1
      %s920 = scalar_select %p919, %s41, 1
      %s921 = smul.addr %s920, 16
      %s922 = smul.addr %s921, 8
      %s923 = scalar_lea.vmem %s11, %s922
      %p924 = pneg %p325
      %p925 = pneg %p322
      %p926 = scmp.lt.s32.totalorder %s41, 1
      %s927 = scalar_select %p926, %s41, 1
      %s928 = smul.addr %s927, 4
      %s929 = scalar_lea.vmem %s12, %s928
      %p930 = pneg %p351
      %p931 = pneg %p348
      %p932 = scmp.lt.s32.totalorder %s41, 1
      %s933 = scalar_select %p932, %s41, 1
      %s934 = smul.addr %s933, 4
      %s935 = smul.addr %s934, 8
      %s936 = scalar_lea.vmem %s13, %s935
      %p937 = pneg %p377
      %p938 = pneg %p374
      %p939 = scmp.lt.s32.totalorder %s41, 1
      %s940 = scalar_select %p939, %s41, 1
      %s941 = scalar_lea.vmem %s14, %s940
      %p942 = pneg %p403
      %p943 = pneg %p400
      %p944 = scmp.lt.s32.totalorder %s41, 1
      %s945 = scalar_select %p944, %s41, 1
      %s946 = smul.addr %s945, 3
      %s947 = smul.addr %s946, 8
      %s948 = scalar_lea.vmem %s15, %s947
      %p949 = pneg %p429
      %p950 = pneg %p426
      %p951 = scmp.lt.s32.totalorder %s41, 1
      %s952 = scalar_select %p951, %s41, 1
      %s953 = smul.addr %s952, 3
      %s954 = smul.addr %s953, 8
      %s955 = scalar_lea.vmem %s16, %s954
      %p956 = pneg %p455
      %p957 = pneg %p452
      %p958 = scmp.lt.s32.totalorder %s41, 1
      %s959 = scalar_select %p958, %s41, 1
      %s960 = smul.addr %s959, 4
      %s961 = smul.addr %s960, 8
      %s962 = scalar_lea.vmem %s17, %s961
      %p963 = pneg %p481
      %p964 = pneg %p478
      %p965 = scmp.lt.s32.totalorder %s41, 1
      %s966 = scalar_select %p965, %s41, 1
      %s967 = scalar_lea.vmem %s18, %s966
      %p968 = pneg %p507
      %p969 = pneg %p504
      %p970 = scmp.lt.s32.totalorder %s41, 1
      %s971 = scalar_select %p970, %s41, 1
      %s972 = smul.addr %s971, 4
      %s973 = smul.addr %s972, 8
      %s974 = scalar_lea.vmem %s19, %s973
      %p975 = pneg %p533
      %p976 = pneg %p530
      %p977 = scmp.lt.s32.totalorder %s41, 1
      %s978 = scalar_select %p977, %s41, 1
      %s979 = scalar_lea.vmem %s20, %s978
      %p980 = pneg %p559
      %p981 = pneg %p556
      %p982 = scmp.lt.s32.totalorder %s41, 1
      %s983 = scalar_select %p982, %s41, 1
      %s984 = smul.addr %s983, 11
      %s985 = smul.addr %s984, 8
      %s986 = scalar_lea.vmem %s21, %s985
      %p987 = pneg %p585
      %p988 = pneg %p582
      %p989 = scmp.lt.s32.totalorder %s41, 1
      %s990 = scalar_select %p989, %s41, 1
      %s991 = scalar_lea.vmem %s22, %s990
      %p992 = pneg %p611
      %p993 = pneg %p608
      %p994 = scmp.lt.s32.totalorder %s41, 1
      %s995 = scalar_select %p994, %s41, 1
      %s996 = smul.addr %s995, 3
      %s997 = smul.addr %s996, 8
      %s998 = scalar_lea.vmem %s23, %s997
      %p999 = pneg %p637
      %p1000 = pneg %p634
      %p1001 = scmp.lt.s32.totalorder %s41, 1
      %s1002 = scalar_select %p1001, %s41, 1
      %s1003 = smul.addr %s1002, 3
      %s1004 = smul.addr %s1003, 8
      %s1005 = scalar_lea.vmem %s24, %s1004
      %p1006 = pneg %p663
      %p1007 = pneg %p660
      %p1008 = pneg %p689
      %p1009 = pneg %p686
      %p1010 = scmp.lt.s32.totalorder %s40, 1
      %s1011 = scalar_select %p1010, %s40, 1
      %s1012 = smul.addr %s1011, 3
      %s1013 = smul.addr %s1012, 8
      %s1014 = scalar_lea.vmem %s25, %s1013
      %p1015 = scmp.lt.s32.totalorder %s40, 1
      %s1016 = scalar_select %p1015, %s40, 1
      %s1017 = smul.addr %s1016, 3
      %s1018 = smul.addr %s1017, 8
      %s1019 = scalar_lea.vmem %s0, %s1018
      %p1020 = scmp.lt.s32.totalorder %s41, 1
      %s1021 = scalar_select %p1020, %s41, 1
      %s1022 = smul.addr %s1021, 16
      %s1023 = smul.addr %s1022, 8
      %s1024 = scalar_lea.vmem %s7, %s1023
      %p1025 = scmp.lt.s32.totalorder %s41, 1
      %s1026 = scalar_select %p1025, %s41, 1
      %s1027 = smul.addr %s1026, 4
      %s1028 = scalar_lea.vmem %s8, %s1027
      %p1029 = scmp.lt.s32.totalorder %s41, 1
      %s1030 = scalar_select %p1029, %s41, 1
      %s1031 = smul.addr %s1030, 16
      %s1032 = smul.addr %s1031, 8
      %s1033 = scalar_lea.vmem %s9, %s1032
      %p1034 = scmp.lt.s32.totalorder %s41, 1
      %s1035 = scalar_select %p1034, %s41, 1
      %s1036 = smul.addr %s1035, 4
      %s1037 = scalar_lea.vmem %s10, %s1036
      %p1038 = scmp.lt.s32.totalorder %s41, 1
      %s1039 = scalar_select %p1038, %s41, 1
      %s1040 = smul.addr %s1039, 16
      %s1041 = smul.addr %s1040, 8
      %s1042 = scalar_lea.vmem %s11, %s1041
      %p1043 = scmp.lt.s32.totalorder %s41, 1
      %s1044 = scalar_select %p1043, %s41, 1
      %s1045 = smul.addr %s1044, 4
      %s1046 = scalar_lea.vmem %s12, %s1045
      %p1047 = scmp.lt.s32.totalorder %s41, 1
      %s1048 = scalar_select %p1047, %s41, 1
      %s1049 = smul.addr %s1048, 4
      %s1050 = smul.addr %s1049, 8
      %s1051 = scalar_lea.vmem %s13, %s1050
      %p1052 = scmp.lt.s32.totalorder %s41, 1
      %s1053 = scalar_select %p1052, %s41, 1
      %s1054 = scalar_lea.vmem %s14, %s1053
      %p1055 = scmp.lt.s32.totalorder %s41, 1
      %s1056 = scalar_select %p1055, %s41, 1
      %s1057 = smul.addr %s1056, 3
      %s1058 = smul.addr %s1057, 8
      %s1059 = scalar_lea.vmem %s15, %s1058
      %p1060 = scmp.lt.s32.totalorder %s41, 1
      %s1061 = scalar_select %p1060, %s41, 1
      %s1062 = smul.addr %s1061, 3
      %s1063 = smul.addr %s1062, 8
      %s1064 = scalar_lea.vmem %s16, %s1063
      %p1065 = scmp.lt.s32.totalorder %s41, 1
      %s1066 = scalar_select %p1065, %s41, 1
      %s1067 = smul.addr %s1066, 4
      %s1068 = smul.addr %s1067, 8
      %s1069 = scalar_lea.vmem %s17, %s1068
      %p1070 = scmp.lt.s32.totalorder %s41, 1
      %s1071 = scalar_select %p1070, %s41, 1
      %s1072 = scalar_lea.vmem %s18, %s1071
      %p1073 = scmp.lt.s32.totalorder %s41, 1
      %s1074 = scalar_select %p1073, %s41, 1
      %s1075 = smul.addr %s1074, 4
      %s1076 = smul.addr %s1075, 8
      %s1077 = scalar_lea.vmem %s19, %s1076
      %p1078 = scmp.lt.s32.totalorder %s41, 1
      %s1079 = scalar_select %p1078, %s41, 1
      %s1080 = scalar_lea.vmem %s20, %s1079
      %p1081 = scmp.lt.s32.totalorder %s41, 1
      %s1082 = scalar_select %p1081, %s41, 1
      %s1083 = smul.addr %s1082, 11
      %s1084 = smul.addr %s1083, 8
      %s1085 = scalar_lea.vmem %s21, %s1084
      %p1086 = scmp.lt.s32.totalorder %s41, 1
      %s1087 = scalar_select %p1086, %s41, 1
      %s1088 = scalar_lea.vmem %s22, %s1087
      %p1089 = scmp.lt.s32.totalorder %s41, 1
      %s1090 = scalar_select %p1089, %s41, 1
      %s1091 = smul.addr %s1090, 3
      %s1092 = smul.addr %s1091, 8
      %s1093 = scalar_lea.vmem %s23, %s1092
      %p1094 = scmp.lt.s32.totalorder %s41, 1
      %s1095 = scalar_select %p1094, %s41, 1
      %s1096 = smul.addr %s1095, 3
      %s1097 = smul.addr %s1096, 8
      %s1098 = scalar_lea.vmem %s24, %s1097
      %p1099 = scmp.lt.s32.totalorder %s40, 1
      %s1100 = scalar_select %p1099, %s40, 1
      %s1101 = smul.addr %s1100, 3
      %s1102 = smul.addr %s1101, 8
      %s1103 = scalar_lea.vmem %s25, %s1102
      %p1104 = scmp.eq.s32.totalorder %s41, 0
      // Predicated region
      $region121: #{forward.1} parent=119 // pred_check
        %p1105 = pneg %p1104
      $region122: #{forward.1} parent=119 // pred_check_branch
        %1107 = sbr.rel (%p1105) target = $region124
      $region123: #{forward.1} parent=119 // pred_region
        %v1108 = vld [vmem:[%s1019] sm:$0xff]
        %v1109 = vld [vmem:[%s1019 + $0x8] sm:$0xff]
        %v1110 = vld [vmem:[%s1019 + $0x10] sm:$0x1]
        %v1111 = vld [vmem:[%s1] sm:$0xff]
        %v1112 = vld [vmem:[%s1 + $0x8] sm:$0xf]
        %vm1113 = vcmask 97280
        %v1115 = vsel %vm1113, %v1108, 0
        %v1118 = vsel %vm1113, %v1109, 0
        %v1121 = vsel %vm1113, %v1110, 0
        %vm1123 = vcmask 1043456
        %v1125 = vsel %vm1123, %v1112, 0
        %1127 = vmatprep.subr.mxu0 0.0
        %1128 = vmatpush1.msra.mxu0 %v1111
        %1129 = vmatprep.subr.mxu0 0.0
        %1130 = vmatpush1.msra.mxu0 %v1125
        %1131 = vmatprep.subr.mxu0 0.0
        %1132 = vmatpush1.msra.mxu0 0.0
        %1133 = vmatprep.subr.mxu0 0.0
        %1134 = vmatpush1.msra.mxu0 0.0
        %1135 = vmatprep.subr.mxu0 0.0
        %1136 = vmatpush1.msra.mxu0 0.0
        %1137 = vmatprep.subr.mxu0 0.0
        %1138 = vmatpush1.msra.mxu0 0.0
        %1139 = vmatprep.subr.mxu0 0.0
        %1140 = vmatpush1.msra.mxu0 0.0
        %1141 = vmatprep.subr.mxu0 0.0
        %1142 = vmatpush1.msra.mxu0 0.0
        %1143 = vmatprep.subr.mxu0 0.0
        %1144 = vmatpush1.msra.mxu0 0.0
        %1145 = vmatprep.subr.mxu0 0.0
        %1146 = vmatpush1.msra.mxu0 0.0
        %1147 = vmatprep.subr.mxu0 0.0
        %1148 = vmatpush1.msra.mxu0 0.0
        %1149 = vmatprep.subr.mxu0 0.0
        %1150 = vmatpush1.msra.mxu0 0.0
        %1151 = vmatprep.subr.mxu0 0.0
        %1152 = vmatpush1.msra.mxu0 0.0
        %1153 = vmatprep.subr.mxu0 0.0
        %1154 = vmatpush1.msra.mxu0 0.0
        %1155 = vmatprep.subr.mxu0 0.0
        %1156 = vmatpush1.msra.mxu0 0.0
        %1157 = vmatprep.subr.mxu0 0.0
        %1158 = vmatpush1.msra.mxu0 0.0
        %1159 = vmatprep.subr.mxu0 0.0
        %1160 = vmatpush1.msra.mxu0 0.0
        %1161 = vmatprep.subr.mxu0 0.0
        %1162 = vmatpush1.msra.mxu0 0.0
        %1163 = vmatprep.subr.mxu0 0.0
        %1164 = vmatpush1.msra.mxu0 0.0
        %1165 = vmatprep.subr.mxu0 0.0
        %1166 = vmatpush1.msra.mxu0 0.0
        %1167 = vmatprep.subr.mxu0 0.0
        %1168 = vmatpush1.msra.mxu0 0.0
        %1169 = vmatprep.subr.mxu0 0.0
        %1170 = vmatpush1.msra.mxu0 0.0
        %1171 = vmatprep.subr.mxu0 0.0
        %1172 = vmatpush1.msra.mxu0 0.0
        %1173 = vmatprep.subr.mxu0 0.0
        %1174 = vmatpush1.msra.mxu0 0.0
        %1175 = vmatprep.subr.mxu0 0.0
        %1176 = vmatpush1.msra.mxu0 0.0
        %1177 = vmatprep.subr.mxu0 0.0
        %1178 = vmatpush1.msra.mxu0 0.0
        %1179 = vmatprep.subr.mxu0 0.0
        %1180 = vmatpush1.msra.mxu0 0.0
        %1181 = vmatprep.subr.mxu0 0.0
        %1182 = vmatpush1.msra.mxu0 0.0
        %1183 = vmatprep.subr.mxu0 0.0
        %1184 = vmatpush1.msra.mxu0 0.0
        %1185 = vmatprep.subr.mxu0 0.0
        %1186 = vmatpush1.msra.mxu0 0.0
        %1187 = vmatprep.subr.mxu0 0.0
        %1188 = vmatpush1.msra.mxu0 0.0
        %1189 = vmatprep.subr.mxu0 0.0
        %1190 = vmatpush1.msra.mxu0 0.0
        %1191 = vmatprep.mubr.f32.mxu0 0.0
        %1192 = vmatmul.mubr.f32.gmra.mrb[0].mxu0 %v1115
        %v1193 = vpop.f32.mrb[0].mxu0
        %v1194 = vadd.f32 0.0, %v1193
        %v1195 = vpop.f32.mrb[0].mxu0
        %1196 = vmatprep.mubr.f32.mxu0 0.0
        %1197 = vmatmul.mubr.f32.gmra.mrb[0].mxu0 %v1118
        %v1198 = vpop.f32.mrb[0].mxu0
        %v1199 = vadd.f32 0.0, %v1198
        %v1200 = vpop.f32.mrb[0].mxu0
        %1201 = vmatprep.mubr.f32.mxu0 0.0
        %1202 = vmatmul.mubr.f32.gmra.mrb[0].mxu0 %v1121
        %v1203 = vpop.f32.mrb[0].mxu0
        %v1204 = vadd.f32 0.0, %v1203
        %v1205 = vpop.f32.mrb[0].mxu0
        %1206 = vdwg.mxu0
        %v1207 = vld [vmem:[%s2] sm:$0xff]
        %v1208 = vld [vmem:[%s2 + $0x8] sm:$0xff]
        %v1209 = vld [vmem:[%s2 + $0x10] sm:$0x1]
        %v1210 = vmul.f32 %v1194, %v1207
        %v1211 = vmul.f32 %v1199, %v1208
        %v1212 = vmul.f32 %v1204, %v1209
        %v1213 = vld [vmem:[%s4] sm:$0xff]
        %v1214 = vld [vmem:[%s4 + $0x8] sm:$0xff]
        %v1215 = vld [vmem:[%s4 + $0x10] sm:$0xff]
        %v1216 = vld [vmem:[%s4 + $0x18] sm:$0xff]
        %vm1217 = vcmask 261120
        %v1219 = vsel %vm1217, %v1194, 0
        %v1222 = vsel %vm1217, %v1199, 0
        %v1225 = vsel %vm1217, %v1204, 0
        %1227 = vmatprep.subr.mxu0 0.0
        %1228 = vmatpush1.msra.mxu0 %v1213
        %1229 = vmatprep.subr.mxu0 0.0
        %1230 = vmatpush1.msra.mxu0 %v1214
        %1231 = vmatprep.subr.mxu0 0.0
        %1232 = vmatpush1.msra.mxu0 %v1215
        %1233 = vmatprep.subr.mxu0 0.0
        %1234 = vmatpush1.msra.mxu0 %v1216
        %1235 = vmatprep.subr.mxu0 0.0
        %1236 = vmatpush1.msra.mxu0 0.0
        %1237 = vmatprep.subr.mxu0 0.0
        %1238 = vmatpush1.msra.mxu0 0.0
        %1239 = vmatprep.subr.mxu0 0.0
        %1240 = vmatpush1.msra.mxu0 0.0
        %1241 = vmatprep.subr.mxu0 0.0
        %1242 = vmatpush1.msra.mxu0 0.0
        %1243 = vmatprep.subr.mxu0 0.0
        %1244 = vmatpush1.msra.mxu0 0.0
        %1245 = vmatprep.subr.mxu0 0.0
        %1246 = vmatpush1.msra.mxu0 0.0
        %1247 = vmatprep.subr.mxu0 0.0
        %1248 = vmatpush1.msra.mxu0 0.0
        %1249 = vmatprep.subr.mxu0 0.0
        %1250 = vmatpush1.msra.mxu0 0.0
        %1251 = vmatprep.subr.mxu0 0.0
        %1252 = vmatpush1.msra.mxu0 0.0
        %1253 = vmatprep.subr.mxu0 0.0
        %1254 = vmatpush1.msra.mxu0 0.0
        %1255 = vmatprep.subr.mxu0 0.0
        %1256 = vmatpush1.msra.mxu0 0.0
        %1257 = vmatprep.subr.mxu0 0.0
        %1258 = vmatpush1.msra.mxu0 0.0
        %1259 = vmatprep.subr.mxu0 0.0
        %1260 = vmatpush1.msra.mxu0 0.0
        %1261 = vmatprep.subr.mxu0 0.0
        %1262 = vmatpush1.msra.mxu0 0.0
        %1263 = vmatprep.subr.mxu0 0.0
        %1264 = vmatpush1.msra.mxu0 0.0
        %1265 = vmatprep.subr.mxu0 0.0
        %1266 = vmatpush1.msra.mxu0 0.0
        %1267 = vmatprep.subr.mxu0 0.0
        %1268 = vmatpush1.msra.mxu0 0.0
        %1269 = vmatprep.subr.mxu0 0.0
        %1270 = vmatpush1.msra.mxu0 0.0
        %1271 = vmatprep.subr.mxu0 0.0
        %1272 = vmatpush1.msra.mxu0 0.0
        %1273 = vmatprep.subr.mxu0 0.0
        %1274 = vmatpush1.msra.mxu0 0.0
        %1275 = vmatprep.subr.mxu0 0.0
        %1276 = vmatpush1.msra.mxu0 0.0
        %1277 = vmatprep.subr.mxu0 0.0
        %1278 = vmatpush1.msra.mxu0 0.0
        %1279 = vmatprep.subr.mxu0 0.0
        %1280 = vmatpush1.msra.mxu0 0.0
        %1281 = vmatprep.subr.mxu0 0.0
        %1282 = vmatpush1.msra.mxu0 0.0
        %1283 = vmatprep.subr.mxu0 0.0
        %1284 = vmatpush1.msra.mxu0 0.0
        %1285 = vmatprep.subr.mxu0 0.0
        %1286 = vmatpush1.msra.mxu0 0.0
        %1287 = vmatprep.subr.mxu0 0.0
        %1288 = vmatpush1.msra.mxu0 0.0
        %1289 = vmatprep.subr.mxu0 0.0
        %1290 = vmatpush1.msra.mxu0 0.0
        %1291 = vmatprep.mubr.f32.mxu0 0.0
        %1292 = vmatmul.mubr.f32.gmra.mrb[0].mxu0 %v1219
        %v1293 = vpop.f32.mrb[0].mxu0
        %v1294 = vadd.f32 0.0, %v1293
        %v1295 = vpop.f32.mrb[0].mxu0
        %1296 = vmatprep.mubr.f32.mxu0 0.0
        %1297 = vmatmul.mubr.f32.gmra.mrb[0].mxu0 %v1222
        %v1298 = vpop.f32.mrb[0].mxu0
        %v1299 = vadd.f32 0.0, %v1298
        %v1300 = vpop.f32.mrb[0].mxu0
        %1301 = vmatprep.mubr.f32.mxu0 0.0
        %1302 = vmatmul.mubr.f32.gmra.mrb[0].mxu0 %v1225
        %v1303 = vpop.f32.mrb[0].mxu0
        %v1304 = vadd.f32 0.0, %v1303
        %v1305 = vpop.f32.mrb[0].mxu0
        %1306 = vdwg.mxu0
        %v1307 = vld [vmem:[%s3] sm:$0xff]
        %v1308 = vld [vmem:[%s3 + $0x8] sm:$0xff]
        %v1309 = vld [vmem:[%s3 + $0x10] sm:$0x1]
        %v1310 = vmul.f32 %v1294, %v1307
        %v1311 = vmul.f32 %v1299, %v1308
        %v1312 = vmul.f32 %v1304, %v1309
        %v1313 = vadd.f32 %v1210, %v1310
        %v1314 = vadd.f32 %v1211, %v1311
        %v1315 = vadd.f32 %v1212, %v1312
        %1316 = vst.msk [vmem:[#allocation2] sm:$0xff] %vm1217, %v1313
        %1317 = vst.msk [vmem:[#allocation2 + $0x8] sm:$0xff] %vm1217, %v1314
        %vm1318 = vcmask 253952
        %1319 = vst.msk [vmem:[#allocation2 + $0x10] sm:$0x1] %vm1318, %v1315
      $region124: #{forward.1} parent=119 // pred_fallthru
        _
      %v1320 = vld [vmem:[#allocation2] sm:$0xff]
      %v1321 = vld [vmem:[#allocation2 + $0x8] sm:$0xff]
      %v1322 = vld [vmem:[#allocation2 + $0x10] sm:$0x1]
      %v1323 = vld [vmem:[%s1054] sm:$0x1]
      %v1324 = vld [vmem:[%s1024] sm:$0xff]
      %v1325 = vld [vmem:[%s1024 + $0x8] sm:$0xff]
      %v1326 = vld [vmem:[%s1024 + $0x10] sm:$0xff]
      %v1327 = vld [vmem:[%s1024 + $0x18] sm:$0xff]
      %v1328 = vld [vmem:[%s1028] sm:$0x1]
      %v1330 = vlaneseq
      %v1331 = vshrl.u32 %v1330, 7
      %v1332 = vsub.s32 0, %v1331
      %v1333 = vrot.slane %v1328, %v1332
      %vm1335 = vcmask 261120
      %v1337 = vsel %vm1335, %v1320, 0
      %v1340 = vsel %vm1335, %v1321, 0
      %v1343 = vsel %vm1335, %v1322, 0
      %1345 = vmatprep.subr.mxu0 0.0
      %1346 = vmatpush1.msra.mxu0 %v1324
      %1347 = vmatprep.subr.mxu0 0.0
      %1348 = vmatpush1.msra.mxu0 %v1325
      %1349 = vmatprep.subr.mxu0 0.0
      %1350 = vmatpush1.msra.mxu0 %v1326
      %1351 = vmatprep.subr.mxu0 0.0
      %1352 = vmatpush1.msra.mxu0 %v1327
      %1353 = vmatprep.subr.mxu0 0.0
      %1354 = vmatpush1.msra.mxu0 0.0
      %1355 = vmatprep.subr.mxu0 0.0
      %1356 = vmatpush1.msra.mxu0 0.0
      %1357 = vmatprep.subr.mxu0 0.0
      %1358 = vmatpush1.msra.mxu0 0.0
      %1359 = vmatprep.subr.mxu0 0.0
      %1360 = vmatpush1.msra.mxu0 0.0
      %1361 = vmatprep.subr.mxu0 0.0
      %1362 = vmatpush1.msra.mxu0 0.0
      %1363 = vmatprep.subr.mxu0 0.0
      %1364 = vmatpush1.msra.mxu0 0.0
      %1365 = vmatprep.subr.mxu0 0.0
      %1366 = vmatpush1.msra.mxu0 0.0
      %1367 = vmatprep.subr.mxu0 0.0
      %1368 = vmatpush1.msra.mxu0 0.0
      %1369 = vmatprep.subr.mxu0 0.0
      %1370 = vmatpush1.msra.mxu0 0.0
      %1371 = vmatprep.subr.mxu0 0.0
      %1372 = vmatpush1.msra.mxu0 0.0
      %1373 = vmatprep.subr.mxu0 0.0
      %1374 = vmatpush1.msra.mxu0 0.0
      %1375 = vmatprep.subr.mxu0 0.0
      %1376 = vmatpush1.msra.mxu0 0.0
      %1377 = vmatprep.subr.mxu0 0.0
      %1378 = vmatpush1.msra.mxu0 0.0
      %1379 = vmatprep.subr.mxu0 0.0
      %1380 = vmatpush1.msra.mxu0 0.0
      %1381 = vmatprep.subr.mxu0 0.0
      %1382 = vmatpush1.msra.mxu0 0.0
      %1383 = vmatprep.subr.mxu0 0.0
      %1384 = vmatpush1.msra.mxu0 0.0
      %1385 = vmatprep.subr.mxu0 0.0
      %1386 = vmatpush1.msra.mxu0 0.0
      %1387 = vmatprep.subr.mxu0 0.0
      %1388 = vmatpush1.msra.mxu0 0.0
      %1389 = vmatprep.subr.mxu0 0.0
      %1390 = vmatpush1.msra.mxu0 0.0
      %1391 = vmatprep.subr.mxu0 0.0
      %1392 = vmatpush1.msra.mxu0 0.0
      %1393 = vmatprep.subr.mxu0 0.0
      %1394 = vmatpush1.msra.mxu0 0.0
      %1395 = vmatprep.subr.mxu0 0.0
      %1396 = vmatpush1.msra.mxu0 0.0
      %1397 = vmatprep.subr.mxu0 0.0
      %1398 = vmatpush1.msra.mxu0 0.0
      %1399 = vmatprep.subr.mxu0 0.0
      %1400 = vmatpush1.msra.mxu0 0.0
      %1401 = vmatprep.subr.mxu0 0.0
      %1402 = vmatpush1.msra.mxu0 0.0
      %1403 = vmatprep.subr.mxu0 0.0
      %1404 = vmatpush1.msra.mxu0 0.0
      %1405 = vmatprep.subr.mxu0 0.0
      %1406 = vmatpush1.msra.mxu0 0.0
      %1407 = vmatprep.subr.mxu0 0.0
      %1408 = vmatpush1.msra.mxu0 0.0
      %1409 = vmatprep.mubr.f32.mxu0 0.0
      %1410 = vmatmul.mubr.f32.gmra.mrb[0].mxu0 %v1337
      %v1411 = vpop.f32.mrb[0].mxu0
      %v1412 = vadd.f32 %v1333, %v1411
      %v1413 = vpop.f32.mrb[0].mxu0
      %1414 = vmatprep.mubr.f32.mxu0 0.0
      %1415 = vmatmul.mubr.f32.gmra.mrb[0].mxu0 %v1340
      %v1416 = vpop.f32.mrb[0].mxu0
      %v1417 = vadd.f32 %v1333, %v1416
      %v1418 = vpop.f32.mrb[0].mxu0
      %1419 = vmatprep.mubr.f32.mxu0 0.0
      %1420 = vmatmul.mubr.f32.gmra.mrb[0].mxu0 %v1343
      %v1421 = vpop.f32.mrb[0].mxu0
      %v1422 = vadd.f32 %v1333, %v1421
      %v1423 = vpop.f32.mrb[0].mxu0
      %1424 = vdwg.mxu0
      %v1425 = vld [vmem:[%s1033] sm:$0xff]
      %v1426 = vld [vmem:[%s1033 + $0x8] sm:$0xff]
      %v1427 = vld [vmem:[%s1033 + $0x10] sm:$0xff]
      %v1428 = vld [vmem:[%s1033 + $0x18] sm:$0xff]
      %v1429 = vld [vmem:[%s1037] sm:$0x1]
      %v1431 = vlaneseq
      %v1432 = vshrl.u32 %v1431, 7
      %v1433 = vsub.s32 0, %v1432
      %v1434 = vrot.slane %v1429, %v1433
      %1436 = vmatprep.subr.mxu0 0.0
      %1437 = vmatpush1.msra.mxu0 %v1425
      %1438 = vmatprep.subr.mxu0 0.0
      %1439 = vmatpush1.msra.mxu0 %v1426
      %1440 = vmatprep.subr.mxu0 0.0
      %1441 = vmatpush1.msra.mxu0 %v1427
      %1442 = vmatprep.subr.mxu0 0.0
      %1443 = vmatpush1.msra.mxu0 %v1428
      %1444 = vmatprep.subr.mxu0 0.0
      %1445 = vmatpush1.msra.mxu0 0.0
      %1446 = vmatprep.subr.mxu0 0.0
      %1447 = vmatpush1.msra.mxu0 0.0
      %1448 = vmatprep.subr.mxu0 0.0
      %1449 = vmatpush1.msra.mxu0 0.0
      %1450 = vmatprep.subr.mxu0 0.0
      %1451 = vmatpush1.msra.mxu0 0.0
      %1452 = vmatprep.subr.mxu0 0.0
      %1453 = vmatpush1.msra.mxu0 0.0
      %1454 = vmatprep.subr.mxu0 0.0
      %1455 = vmatpush1.msra.mxu0 0.0
      %1456 = vmatprep.subr.mxu0 0.0
      %1457 = vmatpush1.msra.mxu0 0.0
      %1458 = vmatprep.subr.mxu0 0.0
      %1459 = vmatpush1.msra.mxu0 0.0
      %1460 = vmatprep.subr.mxu0 0.0
      %1461 = vmatpush1.msra.mxu0 0.0
      %1462 = vmatprep.subr.mxu0 0.0
      %1463 = vmatpush1.msra.mxu0 0.0
      %1464 = vmatprep.subr.mxu0 0.0
      %1465 = vmatpush1.msra.mxu0 0.0
      %1466 = vmatprep.subr.mxu0 0.0
      %1467 = vmatpush1.msra.mxu0 0.0
      %1468 = vmatprep.subr.mxu0 0.0
      %1469 = vmatpush1.msra.mxu0 0.0
      %1470 = vmatprep.subr.mxu0 0.0
      %1471 = vmatpush1.msra.mxu0 0.0
      %1472 = vmatprep.subr.mxu0 0.0
      %1473 = vmatpush1.msra.mxu0 0.0
      %1474 = vmatprep.subr.mxu0 0.0
      %1475 = vmatpush1.msra.mxu0 0.0
      %1476 = vmatprep.subr.mxu0 0.0
      %1477 = vmatpush1.msra.mxu0 0.0
      %1478 = vmatprep.subr.mxu0 0.0
      %1479 = vmatpush1.msra.mxu0 0.0
      %1480 = vmatprep.subr.mxu0 0.0
      %1481 = vmatpush1.msra.mxu0 0.0
      %1482 = vmatprep.subr.mxu0 0.0
      %1483 = vmatpush1.msra.mxu0 0.0
      %1484 = vmatprep.subr.mxu0 0.0
      %1485 = vmatpush1.msra.mxu0 0.0
      %1486 = vmatprep.subr.mxu0 0.0
      %1487 = vmatpush1.msra.mxu0 0.0
      %1488 = vmatprep.subr.mxu0 0.0
      %1489 = vmatpush1.msra.mxu0 0.0
      %1490 = vmatprep.subr.mxu0 0.0
      %1491 = vmatpush1.msra.mxu0 0.0
      %1492 = vmatprep.subr.mxu0 0.0
      %1493 = vmatpush1.msra.mxu0 0.0
      %1494 = vmatprep.subr.mxu0 0.0
      %1495 = vmatpush1.msra.mxu0 0.0
      %1496 = vmatprep.subr.mxu0 0.0
      %1497 = vmatpush1.msra.mxu0 0.0
      %1498 = vmatprep.subr.mxu0 0.0
      %1499 = vmatpush1.msra.mxu0 0.0
      %1500 = vmatprep.mubr.f32.mxu0 0.0
      %1501 = vmatmul.mubr.f32.gmra.mrb[0].mxu0 %v1337
      %v1502 = vpop.f32.mrb[0].mxu0
      %v1503 = vadd.f32 %v1434, %v1502
      %v1504 = vpop.f32.mrb[0].mxu0
      %1505 = vmatprep.mubr.f32.mxu0 0.0
      %1506 = vmatmul.mubr.f32.gmra.mrb[0].mxu0 %v1340
      %v1507 = vpop.f32.mrb[0].mxu0
      %v1508 = vadd.f32 %v1434, %v1507
      %v1509 = vpop.f32.mrb[0].mxu0
      %1510 = vmatprep.mubr.f32.mxu0 0.0
      %1511 = vmatmul.mubr.f32.gmra.mrb[0].mxu0 %v1343
      %v1512 = vpop.f32.mrb[0].mxu0
      %v1513 = vadd.f32 %v1434, %v1512
      %v1514 = vpop.f32.mrb[0].mxu0
      %1515 = vdwg.mxu0
      %v1516 = vld [vmem:[%s1042] sm:$0xff]
      %v1517 = vld [vmem:[%s1042 + $0x8] sm:$0xff]
      %v1518 = vld [vmem:[%s1042 + $0x10] sm:$0xff]
      %v1519 = vld [vmem:[%s1042 + $0x18] sm:$0xff]
      %v1520 = vld [vmem:[%s1046] sm:$0x1]
      %v1522 = vlaneseq
      %v1523 = vshrl.u32 %v1522, 7
      %v1524 = vsub.s32 0, %v1523
      %v1525 = vrot.slane %v1520, %v1524
      %1527 = vmatprep.subr.mxu0 0.0
      %1528 = vmatpush1.msra.mxu0 %v1516
      %1529 = vmatprep.subr.mxu0 0.0
      %1530 = vmatpush1.msra.mxu0 %v1517
      %1531 = vmatprep.subr.mxu0 0.0
      %1532 = vmatpush1.msra.mxu0 %v1518
      %1533 = vmatprep.subr.mxu0 0.0
      %1534 = vmatpush1.msra.mxu0 %v1519
      %1535 = vmatprep.subr.mxu0 0.0
      %1536 = vmatpush1.msra.mxu0 0.0
      %1537 = vmatprep.subr.mxu0 0.0
      %1538 = vmatpush1.msra.mxu0 0.0
      %1539 = vmatprep.subr.mxu0 0.0
      %1540 = vmatpush1.msra.mxu0 0.0
      %1541 = vmatprep.subr.mxu0 0.0
      %1542 = vmatpush1.msra.mxu0 0.0
      %1543 = vmatprep.subr.mxu0 0.0
      %1544 = vmatpush1.msra.mxu0 0.0
      %1545 = vmatprep.subr.mxu0 0.0
      %1546 = vmatpush1.msra.mxu0 0.0
      %1547 = vmatprep.subr.mxu0 0.0
      %1548 = vmatpush1.msra.mxu0 0.0
      %1549 = vmatprep.subr.mxu0 0.0
      %1550 = vmatpush1.msra.mxu0 0.0
      %1551 = vmatprep.subr.mxu0 0.0
      %1552 = vmatpush1.msra.mxu0 0.0
      %1553 = vmatprep.subr.mxu0 0.0
      %1554 = vmatpush1.msra.mxu0 0.0
      %1555 = vmatprep.subr.mxu0 0.0
      %1556 = vmatpush1.msra.mxu0 0.0
      %1557 = vmatprep.subr.mxu0 0.0
      %1558 = vmatpush1.msra.mxu0 0.0
      %1559 = vmatprep.subr.mxu0 0.0
      %1560 = vmatpush1.msra.mxu0 0.0
      %1561 = vmatprep.subr.mxu0 0.0
      %1562 = vmatpush1.msra.mxu0 0.0
      %1563 = vmatprep.subr.mxu0 0.0
      %1564 = vmatpush1.msra.mxu0 0.0
      %1565 = vmatprep.subr.mxu0 0.0
      %1566 = vmatpush1.msra.mxu0 0.0
      %1567 = vmatprep.subr.mxu0 0.0
      %1568 = vmatpush1.msra.mxu0 0.0
      %1569 = vmatprep.subr.mxu0 0.0
      %1570 = vmatpush1.msra.mxu0 0.0
      %1571 = vmatprep.subr.mxu0 0.0
      %1572 = vmatpush1.msra.mxu0 0.0
      %1573 = vmatprep.subr.mxu0 0.0
      %1574 = vmatpush1.msra.mxu0 0.0
      %1575 = vmatprep.subr.mxu0 0.0
      %1576 = vmatpush1.msra.mxu0 0.0
      %1577 = vmatprep.subr.mxu0 0.0
      %1578 = vmatpush1.msra.mxu0 0.0
      %1579 = vmatprep.subr.mxu0 0.0
      %1580 = vmatpush1.msra.mxu0 0.0
      %1581 = vmatprep.subr.mxu0 0.0
      %1582 = vmatpush1.msra.mxu0 0.0
      %1583 = vmatprep.subr.mxu0 0.0
      %1584 = vmatpush1.msra.mxu0 0.0
      %1585 = vmatprep.subr.mxu0 0.0
      %1586 = vmatpush1.msra.mxu0 0.0
      %1587 = vmatprep.subr.mxu0 0.0
      %1588 = vmatpush1.msra.mxu0 0.0
      %1589 = vmatprep.subr.mxu0 0.0
      %1590 = vmatpush1.msra.mxu0 0.0
      %1591 = vmatprep.mubr.f32.mxu0 0.0
      %1592 = vmatmul.mubr.f32.gmra.mrb[0].mxu0 %v1337
      %v1593 = vpop.f32.mrb[0].mxu0
      %v1594 = vadd.f32 %v1525, %v1593
      %v1595 = vpop.f32.mrb[0].mxu0
      %1596 = vmatprep.mubr.f32.mxu0 0.0
      %1597 = vmatmul.mubr.f32.gmra.mrb[0].mxu0 %v1340
      %v1598 = vpop.f32.mrb[0].mxu0
      %v1599 = vadd.f32 %v1525, %v1598
      %v1600 = vpop.f32.mrb[0].mxu0
      %1601 = vmatprep.mubr.f32.mxu0 0.0
      %1602 = vmatmul.mubr.f32.gmra.mrb[0].mxu0 %v1343
      %v1603 = vpop.f32.mrb[0].mxu0
      %v1604 = vadd.f32 %v1525, %v1603
      %v1605 = vpop.f32.mrb[0].mxu0
      %1606 = vdwg.mxu0
      %vm1607 = vcmask 64512
      %v1609 = vsel %vm1607, %v1412, 0
      %v1612 = vsel %vm1607, %v1417, 0
      %v1615 = vsel %vm1607, %v1422, 0
      %v1618 = vsel %vm1607, %v1503, 0
      %v1621 = vsel %vm1607, %v1508, 0
      %v1624 = vsel %vm1607, %v1513, 0
      %1626 = vmatprep.subr.mxu0 0.0
      %1627 = vmatpush1.xpose.msra.mxu0 %v1618
      %1628 = vmatprep.subr.mxu0 0.0
      %1629 = vmatpush1.xpose.msra.mxu0 %v1621
      %1630 = vmatprep.subr.mxu0 0.0
      %1631 = vmatpush1.xpose.msra.mxu0 %v1624
      %1632 = vmatprep.subr.mxu0 0.0
      %1633 = vmatpush1.xpose.msra.mxu0 0.0
      %1634 = vmatprep.subr.mxu0 0.0
      %1635 = vmatpush1.xpose.msra.mxu0 0.0
      %1636 = vmatprep.subr.mxu0 0.0
      %1637 = vmatpush1.xpose.msra.mxu0 0.0
      %1638 = vmatprep.subr.mxu0 0.0
      %1639 = vmatpush1.xpose.msra.mxu0 0.0
      %1640 = vmatprep.subr.mxu0 0.0
      %1641 = vmatpush1.xpose.msra.mxu0 0.0
      %1642 = vmatprep.subr.mxu0 0.0
      %1643 = vmatpush1.xpose.msra.mxu0 0.0
      %1644 = vmatprep.subr.mxu0 0.0
      %1645 = vmatpush1.xpose.msra.mxu0 0.0
      %1646 = vmatprep.subr.mxu0 0.0
      %1647 = vmatpush1.xpose.msra.mxu0 0.0
      %1648 = vmatprep.subr.mxu0 0.0
      %1649 = vmatpush1.xpose.msra.mxu0 0.0
      %1650 = vmatprep.subr.mxu0 0.0
      %1651 = vmatpush1.xpose.msra.mxu0 0.0
      %1652 = vmatprep.subr.mxu0 0.0
      %1653 = vmatpush1.xpose.msra.mxu0 0.0
      %1654 = vmatprep.subr.mxu0 0.0
      %1655 = vmatpush1.xpose.msra.mxu0 0.0
      %1656 = vmatprep.subr.mxu0 0.0
      %1657 = vmatpush1.xpose.msra.mxu0 0.0
      %1658 = vmatprep.subr.mxu0 0.0
      %1659 = vmatpush1.xpose.msra.mxu0 0.0
      %1660 = vmatprep.subr.mxu0 0.0
      %1661 = vmatpush1.xpose.msra.mxu0 0.0
      %1662 = vmatprep.subr.mxu0 0.0
      %1663 = vmatpush1.xpose.msra.mxu0 0.0
      %1664 = vmatprep.subr.mxu0 0.0
      %1665 = vmatpush1.xpose.msra.mxu0 0.0
      %1666 = vmatprep.subr.mxu0 0.0
      %1667 = vmatpush1.xpose.msra.mxu0 0.0
      %1668 = vmatprep.subr.mxu0 0.0
      %1669 = vmatpush1.xpose.msra.mxu0 0.0
      %1670 = vmatprep.subr.mxu0 0.0
      %1671 = vmatpush1.xpose.msra.mxu0 0.0
      %1672 = vmatprep.subr.mxu0 0.0
      %1673 = vmatpush1.xpose.msra.mxu0 0.0
      %1674 = vmatprep.subr.mxu0 0.0
      %1675 = vmatpush1.xpose.msra.mxu0 0.0
      %1676 = vmatprep.subr.mxu0 0.0
      %1677 = vmatpush1.xpose.msra.mxu0 0.0
      %1678 = vmatprep.subr.mxu0 0.0
      %1679 = vmatpush1.xpose.msra.mxu0 0.0
      %1680 = vmatprep.subr.mxu0 0.0
      %1681 = vmatpush1.xpose.msra.mxu0 0.0
      %1682 = vmatprep.subr.mxu0 0.0
      %1683 = vmatpush1.xpose.msra.mxu0 0.0
      %1684 = vmatprep.subr.mxu0 0.0
      %1685 = vmatpush1.xpose.msra.mxu0 0.0
      %1686 = vmatprep.subr.mxu0 0.0
      %1687 = vmatpush1.xpose.msra.mxu0 0.0
      %1688 = vmatprep.subr.mxu0 0.0
      %1689 = vmatpush1.xpose.msra.mxu0 0.0
      %1690 = vmatprep.mubr.f32.mxu0 0.0
      %1691 = vmatmul.mubr.f32.gmra.mrb[0].mxu0 %v1609
      %v1692 = vpop.f32.mrb[0].mxu0
      %v1693 = vadd.f32 0.0, %v1692
      %v1694 = vpop.f32.mrb[0].mxu0
      %1695 = vmatprep.mubr.f32.mxu0 0.0
      %1696 = vmatmul.mubr.f32.gmra.mrb[0].mxu0 %v1612
      %v1697 = vpop.f32.mrb[0].mxu0
      %v1698 = vadd.f32 0.0, %v1697
      %v1699 = vpop.f32.mrb[0].mxu0
      %1700 = vmatprep.mubr.f32.mxu0 0.0
      %1701 = vmatmul.mubr.f32.gmra.mrb[0].mxu0 %v1615
      %v1702 = vpop.f32.mrb[0].mxu0
      %v1703 = vadd.f32 0.0, %v1702
      %v1704 = vpop.f32.mrb[0].mxu0
      %1705 = vdwg.mxu0
      %vm1706 = vcmask 138240
      %v1707 = vsel %vm1706, %v1693, -inf
      %1708 = vmax.xlane.f32.xlu0 %v1707
      %v1709 = vpop.xlane.xlu0 %1708
      %v1710 = vsel %vm1706, %v1698, -inf
      %1711 = vmax.xlane.f32.xlu0 %v1710
      %v1712 = vpop.xlane.xlu0 %1711
      %vm1713 = vcmask 131072
      %v1714 = vsel %vm1713, %v1703, -inf
      %1715 = vmax.xlane.f32.xlu0 %v1714
      %v1716 = vpop.xlane.xlu0 %1715
      %v1717 = vsub.f32 %v1693, %v1709
      %v1718 = vsub.f32 %v1698, %v1712
      %v1719 = vsub.f32 %v1703, %v1716
      %v1720 = vmul.f32 %v1717, 1.442695
      %v1721 = vpow.pop %v1720
      %v1722 = vmul.f32 %v1718, 1.442695
      %v1723 = vpow.pop %v1722
      %v1724 = vmul.f32 %v1719, 1.442695
      %v1725 = vpow.pop %v1724
      %v1726 = vsel %vm1706, %v1721, 0.0
      %1727 = vadd.xlane.f32.xlu0 %v1726
      %v1728 = vpop.xlane.xlu0 %1727
      %v1729 = vsel %vm1706, %v1723, 0.0
      %1730 = vadd.xlane.f32.xlu0 %v1729
      %v1731 = vpop.xlane.xlu0 %1730
      %v1732 = vsel %vm1713, %v1725, 0.0
      %1733 = vadd.xlane.f32.xlu0 %v1732
      %v1734 = vpop.xlane.xlu0 %1733
      %v1735 = vrcp.pop %v1728
      %v1736 = vrcp.pop %v1731
      %v1737 = vrcp.pop %v1734
      %v1738 = vmul.f32 %v1721, %v1735
      %v1739 = vmul.f32 %v1723, %v1736
      %v1740 = vmul.f32 %v1725, %v1737
      %v1742 = vsel %vm1706, %v1738, 0
      %v1745 = vsel %vm1706, %v1739, 0
      %v1748 = vsel %vm1706, %v1740, 0
      %vm1750 = vcmask 1040384
      %v1752 = vsel %vm1750, %v1604, 0
      %1754 = vmatprep.subr.mxu0 0.0
      %1755 = vmatpush1.msra.mxu0 %v1594
      %1756 = vmatprep.subr.mxu0 0.0
      %1757 = vmatpush1.msra.mxu0 %v1599
      %1758 = vmatprep.subr.mxu0 0.0
      %1759 = vmatpush1.msra.mxu0 %v1752
      %1760 = vmatprep.subr.mxu0 0.0
      %1761 = vmatpush1.msra.mxu0 0.0
      %1762 = vmatprep.subr.mxu0 0.0
      %1763 = vmatpush1.msra.mxu0 0.0
      %1764 = vmatprep.subr.mxu0 0.0
      %1765 = vmatpush1.msra.mxu0 0.0
      %1766 = vmatprep.subr.mxu0 0.0
      %1767 = vmatpush1.msra.mxu0 0.0
      %1768 = vmatprep.subr.mxu0 0.0
      %1769 = vmatpush1.msra.mxu0 0.0
      %1770 = vmatprep.subr.mxu0 0.0
      %1771 = vmatpush1.msra.mxu0 0.0
      %1772 = vmatprep.subr.mxu0 0.0
      %1773 = vmatpush1.msra.mxu0 0.0
      %1774 = vmatprep.subr.mxu0 0.0
      %1775 = vmatpush1.msra.mxu0 0.0
      %1776 = vmatprep.subr.mxu0 0.0
      %1777 = vmatpush1.msra.mxu0 0.0
      %1778 = vmatprep.subr.mxu0 0.0
      %1779 = vmatpush1.msra.mxu0 0.0
      %1780 = vmatprep.subr.mxu0 0.0
      %1781 = vmatpush1.msra.mxu0 0.0
      %1782 = vmatprep.subr.mxu0 0.0
      %1783 = vmatpush1.msra.mxu0 0.0
      %1784 = vmatprep.subr.mxu0 0.0
      %1785 = vmatpush1.msra.mxu0 0.0
      %1786 = vmatprep.subr.mxu0 0.0
      %1787 = vmatpush1.msra.mxu0 0.0
      %1788 = vmatprep.subr.mxu0 0.0
      %1789 = vmatpush1.msra.mxu0 0.0
      %1790 = vmatprep.subr.mxu0 0.0
      %1791 = vmatpush1.msra.mxu0 0.0
      %1792 = vmatprep.subr.mxu0 0.0
      %1793 = vmatpush1.msra.mxu0 0.0
      %1794 = vmatprep.subr.mxu0 0.0
      %1795 = vmatpush1.msra.mxu0 0.0
      %1796 = vmatprep.subr.mxu0 0.0
      %1797 = vmatpush1.msra.mxu0 0.0
      %1798 = vmatprep.subr.mxu0 0.0
      %1799 = vmatpush1.msra.mxu0 0.0
      %1800 = vmatprep.subr.mxu0 0.0
      %1801 = vmatpush1.msra.mxu0 0.0
      %1802 = vmatprep.subr.mxu0 0.0
      %1803 = vmatpush1.msra.mxu0 0.0
      %1804 = vmatprep.subr.mxu0 0.0
      %1805 = vmatpush1.msra.mxu0 0.0
      %1806 = vmatprep.subr.mxu0 0.0
      %1807 = vmatpush1.msra.mxu0 0.0
      %1808 = vmatprep.subr.mxu0 0.0
      %1809 = vmatpush1.msra.mxu0 0.0
      %1810 = vmatprep.subr.mxu0 0.0
      %1811 = vmatpush1.msra.mxu0 0.0
      %1812 = vmatprep.subr.mxu0 0.0
      %1813 = vmatpush1.msra.mxu0 0.0
      %1814 = vmatprep.subr.mxu0 0.0
      %1815 = vmatpush1.msra.mxu0 0.0
      %1816 = vmatprep.subr.mxu0 0.0
      %1817 = vmatpush1.msra.mxu0 0.0
      %1818 = vmatprep.mubr.f32.mxu0 0.0
      %1819 = vmatmul.mubr.f32.gmra.mrb[0].mxu0 %v1742
      %v1820 = vpop.f32.mrb[0].mxu0
      %v1821 = vadd.f32 0.0, %v1820
      %v1822 = vpop.f32.mrb[0].mxu0
      %1823 = vmatprep.mubr.f32.mxu0 0.0
      %1824 = vmatmul.mubr.f32.gmra.mrb[0].mxu0 %v1745
      %v1825 = vpop.f32.mrb[0].mxu0
      %v1826 = vadd.f32 0.0, %v1825
      %v1827 = vpop.f32.mrb[0].mxu0
      %1828 = vmatprep.mubr.f32.mxu0 0.0
      %1829 = vmatmul.mubr.f32.gmra.mrb[0].mxu0 %v1748
      %v1830 = vpop.f32.mrb[0].mxu0
      %v1831 = vadd.f32 0.0, %v1830
      %v1832 = vpop.f32.mrb[0].mxu0
      %1833 = vdwg.mxu0
      %v1834 = vld [vmem:[%s1051] sm:$0xff]
      %v1836 = vsel %vm1607, %v1821, 0
      %v1839 = vsel %vm1607, %v1826, 0
      %v1842 = vsel %vm1607, %v1831, 0
      %1844 = vmatprep.subr.mxu0 0.0
      %1845 = vmatpush1.msra.mxu0 %v1834
      %1846 = vmatprep.subr.mxu0 0.0
      %1847 = vmatpush1.msra.mxu0 0.0
      %1848 = vmatprep.subr.mxu0 0.0
      %1849 = vmatpush1.msra.mxu0 0.0
      %1850 = vmatprep.subr.mxu0 0.0
      %1851 = vmatpush1.msra.mxu0 0.0
      %1852 = vmatprep.subr.mxu0 0.0
      %1853 = vmatpush1.msra.mxu0 0.0
      %1854 = vmatprep.subr.mxu0 0.0
      %1855 = vmatpush1.msra.mxu0 0.0
      %1856 = vmatprep.subr.mxu0 0.0
      %1857 = vmatpush1.msra.mxu0 0.0
      %1858 = vmatprep.subr.mxu0 0.0
      %1859 = vmatpush1.msra.mxu0 0.0
      %1860 = vmatprep.subr.mxu0 0.0
      %1861 = vmatpush1.msra.mxu0 0.0
      %1862 = vmatprep.subr.mxu0 0.0
      %1863 = vmatpush1.msra.mxu0 0.0
      %1864 = vmatprep.subr.mxu0 0.0
      %1865 = vmatpush1.msra.mxu0 0.0
      %1866 = vmatprep.subr.mxu0 0.0
      %1867 = vmatpush1.msra.mxu0 0.0
      %1868 = vmatprep.subr.mxu0 0.0
      %1869 = vmatpush1.msra.mxu0 0.0
      %1870 = vmatprep.subr.mxu0 0.0
      %1871 = vmatpush1.msra.mxu0 0.0
      %1872 = vmatprep.subr.mxu0 0.0
      %1873 = vmatpush1.msra.mxu0 0.0
      %1874 = vmatprep.subr.mxu0 0.0
      %1875 = vmatpush1.msra.mxu0 0.0
      %1876 = vmatprep.subr.mxu0 0.0
      %1877 = vmatpush1.msra.mxu0 0.0
      %1878 = vmatprep.subr.mxu0 0.0
      %1879 = vmatpush1.msra.mxu0 0.0
      %1880 = vmatprep.subr.mxu0 0.0
      %1881 = vmatpush1.msra.mxu0 0.0
      %1882 = vmatprep.subr.mxu0 0.0
      %1883 = vmatpush1.msra.mxu0 0.0
      %1884 = vmatprep.subr.mxu0 0.0
      %1885 = vmatpush1.msra.mxu0 0.0
      %1886 = vmatprep.subr.mxu0 0.0
      %1887 = vmatpush1.msra.mxu0 0.0
      %1888 = vmatprep.subr.mxu0 0.0
      %1889 = vmatpush1.msra.mxu0 0.0
      %1890 = vmatprep.subr.mxu0 0.0
      %1891 = vmatpush1.msra.mxu0 0.0
      %1892 = vmatprep.subr.mxu0 0.0
      %1893 = vmatpush1.msra.mxu0 0.0
      %1894 = vmatprep.subr.mxu0 0.0
      %1895 = vmatpush1.msra.mxu0 0.0
      %1896 = vmatprep.subr.mxu0 0.0
      %1897 = vmatpush1.msra.mxu0 0.0
      %1898 = vmatprep.subr.mxu0 0.0
      %1899 = vmatpush1.msra.mxu0 0.0
      %1900 = vmatprep.subr.mxu0 0.0
      %1901 = vmatpush1.msra.mxu0 0.0
      %1902 = vmatprep.subr.mxu0 0.0
      %1903 = vmatpush1.msra.mxu0 0.0
      %1904 = vmatprep.subr.mxu0 0.0
      %1905 = vmatpush1.msra.mxu0 0.0
      %1906 = vmatprep.subr.mxu0 0.0
      %1907 = vmatpush1.msra.mxu0 0.0
      %1908 = vmatprep.mubr.f32.mxu0 0.0
      %1909 = vmatmul.mubr.f32.gmra.mrb[0].mxu0 %v1836
      %v1910 = vpop.f32.mrb[0].mxu0
      %v1911 = vadd.f32 0.0, %v1910
      %v1912 = vpop.f32.mrb[0].mxu0
      %1913 = vmatprep.mubr.f32.mxu0 0.0
      %1914 = vmatmul.mubr.f32.gmra.mrb[0].mxu0 %v1839
      %v1915 = vpop.f32.mrb[0].mxu0
      %v1916 = vadd.f32 0.0, %v1915
      %v1917 = vpop.f32.mrb[0].mxu0
      %1918 = vmatprep.mubr.f32.mxu0 0.0
      %1919 = vmatmul.mubr.f32.gmra.mrb[0].mxu0 %v1842
      %v1920 = vpop.f32.mrb[0].mxu0
      %v1921 = vadd.f32 0.0, %v1920
      %v1922 = vpop.f32.mrb[0].mxu0
      %1923 = vdwg.mxu0
      %v1925 = vlaneseq
      %v1926 = vshrl.u32 %v1925, 7
      %v1927 = vsub.s32 0, %v1926
      %v1928 = vrot.slane %v1323, %v1927
      %v1930 = vadd.f32 %v1928, %v1911
      %v1931 = vadd.f32 %v1928, %v1916
      %v1932 = vadd.f32 %v1928, %v1921
      %s1933 = scalar_lea.vmem %s1024, 32
      %v1934 = vld [vmem:[%s1933] sm:$0xff]
      %v1935 = vld [vmem:[%s1933 + $0x8] sm:$0xff]
      %v1936 = vld [vmem:[%s1933 + $0x10] sm:$0xff]
      %v1937 = vld [vmem:[%s1933 + $0x18] sm:$0xff]
      %s1938 = scalar_lea.vmem %s1028, 1
      %v1939 = vld [vmem:[%s1938] sm:$0x1]
      %v1941 = vlaneseq
      %v1942 = vshrl.u32 %v1941, 7
      %v1943 = vsub.s32 0, %v1942
      %v1944 = vrot.slane %v1939, %v1943
      %1946 = vmatprep.subr.mxu0 0.0
      %1947 = vmatpush1.msra.mxu0 %v1934
      %1948 = vmatprep.subr.mxu0 0.0
      %1949 = vmatpush1.msra.mxu0 %v1935
      %1950 = vmatprep.subr.mxu0 0.0
      %1951 = vmatpush1.msra.mxu0 %v1936
      %1952 = vmatprep.subr.mxu0 0.0
      %1953 = vmatpush1.msra.mxu0 %v1937
      %1954 = vmatprep.subr.mxu0 0.0
      %1955 = vmatpush1.msra.mxu0 0.0
      %1956 = vmatprep.subr.mxu0 0.0
      %1957 = vmatpush1.msra.mxu0 0.0
      %1958 = vmatprep.subr.mxu0 0.0
      %1959 = vmatpush1.msra.mxu0 0.0
      %1960 = vmatprep.subr.mxu0 0.0
      %1961 = vmatpush1.msra.mxu0 0.0
      %1962 = vmatprep.subr.mxu0 0.0
      %1963 = vmatpush1.msra.mxu0 0.0
      %1964 = vmatprep.subr.mxu0 0.0
      %1965 = vmatpush1.msra.mxu0 0.0
      %1966 = vmatprep.subr.mxu0 0.0
      %1967 = vmatpush1.msra.mxu0 0.0
      %1968 = vmatprep.subr.mxu0 0.0
      %1969 = vmatpush1.msra.mxu0 0.0
      %1970 = vmatprep.subr.mxu0 0.0
      %1971 = vmatpush1.msra.mxu0 0.0
      %1972 = vmatprep.subr.mxu0 0.0
      %1973 = vmatpush1.msra.mxu0 0.0
      %1974 = vmatprep.subr.mxu0 0.0
      %1975 = vmatpush1.msra.mxu0 0.0
      %1976 = vmatprep.subr.mxu0 0.0
      %1977 = vmatpush1.msra.mxu0 0.0
      %1978 = vmatprep.subr.mxu0 0.0
      %1979 = vmatpush1.msra.mxu0 0.0
      %1980 = vmatprep.subr.mxu0 0.0
      %1981 = vmatpush1.msra.mxu0 0.0
      %1982 = vmatprep.subr.mxu0 0.0
      %1983 = vmatpush1.msra.mxu0 0.0
      %1984 = vmatprep.subr.mxu0 0.0
      %1985 = vmatpush1.msra.mxu0 0.0
      %1986 = vmatprep.subr.mxu0 0.0
      %1987 = vmatpush1.msra.mxu0 0.0
      %1988 = vmatprep.subr.mxu0 0.0
      %1989 = vmatpush1.msra.mxu0 0.0
      %1990 = vmatprep.subr.mxu0 0.0
      %1991 = vmatpush1.msra.mxu0 0.0
      %1992 = vmatprep.subr.mxu0 0.0
      %1993 = vmatpush1.msra.mxu0 0.0
      %1994 = vmatprep.subr.mxu0 0.0
      %1995 = vmatpush1.msra.mxu0 0.0
      %1996 = vmatprep.subr.mxu0 0.0
      %1997 = vmatpush1.msra.mxu0 0.0
      %1998 = vmatprep.subr.mxu0 0.0
      %1999 = vmatpush1.msra.mxu0 0.0
      %2000 = vmatprep.subr.mxu0 0.0
      %2001 = vmatpush1.msra.mxu0 0.0
      %2002 = vmatprep.subr.mxu0 0.0
      %2003 = vmatpush1.msra.mxu0 0.0
      %2004 = vmatprep.subr.mxu0 0.0
      %2005 = vmatpush1.msra.mxu0 0.0
      %2006 = vmatprep.subr.mxu0 0.0
      %2007 = vmatpush1.msra.mxu0 0.0
      %2008 = vmatprep.subr.mxu0 0.0
      %2009 = vmatpush1.msra.mxu0 0.0
      %2010 = vmatprep.mubr.f32.mxu0 0.0
      %2011 = vmatmul.mubr.f32.gmra.mrb[0].mxu0 %v1337
      %v2012 = vpop.f32.mrb[0].mxu0
      %v2013 = vadd.f32 %v1944, %v2012
      %v2014 = vpop.f32.mrb[0].mxu0
      %2015 = vmatprep.mubr.f32.mxu0 0.0
      %2016 = vmatmul.mubr.f32.gmra.mrb[0].mxu0 %v1340
      %v2017 = vpop.f32.mrb[0].mxu0
      %v2018 = vadd.f32 %v1944, %v2017
      %v2019 = vpop.f32.mrb[0].mxu0
      %2020 = vmatprep.mubr.f32.mxu0 0.0
      %2021 = vmatmul.mubr.f32.gmra.mrb[0].mxu0 %v1343
      %v2022 = vpop.f32.mrb[0].mxu0
      %v2023 = vadd.f32 %v1944, %v2022
      %v2024 = vpop.f32.mrb[0].mxu0
      %2025 = vdwg.mxu0
      %s2026 = scalar_lea.vmem %s1033, 32
      %v2027 = vld [vmem:[%s2026] sm:$0xff]
      %v2028 = vld [vmem:[%s2026 + $0x8] sm:$0xff]
      %v2029 = vld [vmem:[%s2026 + $0x10] sm:$0xff]
      %v2030 = vld [vmem:[%s2026 + $0x18] sm:$0xff]
      %s2031 = scalar_lea.vmem %s1037, 1
      %v2032 = vld [vmem:[%s2031] sm:$0x1]
      %v2034 = vlaneseq
      %v2035 = vshrl.u32 %v2034, 7
      %v2036 = vsub.s32 0, %v2035
      %v2037 = vrot.slane %v2032, %v2036
      %2039 = vmatprep.subr.mxu0 0.0
      %2040 = vmatpush1.msra.mxu0 %v2027
      %2041 = vmatprep.subr.mxu0 0.0
      %2042 = vmatpush1.msra.mxu0 %v2028
      %2043 = vmatprep.subr.mxu0 0.0
      %2044 = vmatpush1.msra.mxu0 %v2029
      %2045 = vmatprep.subr.mxu0 0.0
      %2046 = vmatpush1.msra.mxu0 %v2030
      %2047 = vmatprep.subr.mxu0 0.0
      %2048 = vmatpush1.msra.mxu0 0.0
      %2049 = vmatprep.subr.mxu0 0.0
      %2050 = vmatpush1.msra.mxu0 0.0
      %2051 = vmatprep.subr.mxu0 0.0
      %2052 = vmatpush1.msra.mxu0 0.0
      %2053 = vmatprep.subr.mxu0 0.0
      %2054 = vmatpush1.msra.mxu0 0.0
      %2055 = vmatprep.subr.mxu0 0.0
      %2056 = vmatpush1.msra.mxu0 0.0
      %2057 = vmatprep.subr.mxu0 0.0
      %2058 = vmatpush1.msra.mxu0 0.0
      %2059 = vmatprep.subr.mxu0 0.0
      %2060 = vmatpush1.msra.mxu0 0.0
      %2061 = vmatprep.subr.mxu0 0.0
      %2062 = vmatpush1.msra.mxu0 0.0
      %2063 = vmatprep.subr.mxu0 0.0
      %2064 = vmatpush1.msra.mxu0 0.0
      %2065 = vmatprep.subr.mxu0 0.0
      %2066 = vmatpush1.msra.mxu0 0.0
      %2067 = vmatprep.subr.mxu0 0.0
      %2068 = vmatpush1.msra.mxu0 0.0
      %2069 = vmatprep.subr.mxu0 0.0
      %2070 = vmatpush1.msra.mxu0 0.0
      %2071 = vmatprep.subr.mxu0 0.0
      %2072 = vmatpush1.msra.mxu0 0.0
      %2073 = vmatprep.subr.mxu0 0.0
      %2074 = vmatpush1.msra.mxu0 0.0
      %2075 = vmatprep.subr.mxu0 0.0
      %2076 = vmatpush1.msra.mxu0 0.0
      %2077 = vmatprep.subr.mxu0 0.0
      %2078 = vmatpush1.msra.mxu0 0.0
      %2079 = vmatprep.subr.mxu0 0.0
      %2080 = vmatpush1.msra.mxu0 0.0
      %2081 = vmatprep.subr.mxu0 0.0
      %2082 = vmatpush1.msra.mxu0 0.0
      %2083 = vmatprep.subr.mxu0 0.0
      %2084 = vmatpush1.msra.mxu0 0.0
      %2085 = vmatprep.subr.mxu0 0.0
      %2086 = vmatpush1.msra.mxu0 0.0
      %2087 = vmatprep.subr.mxu0 0.0
      %2088 = vmatpush1.msra.mxu0 0.0
      %2089 = vmatprep.subr.mxu0 0.0
      %2090 = vmatpush1.msra.mxu0 0.0
      %2091 = vmatprep.subr.mxu0 0.0
      %2092 = vmatpush1.msra.mxu0 0.0
      %2093 = vmatprep.subr.mxu0 0.0
      %2094 = vmatpush1.msra.mxu0 0.0
      %2095 = vmatprep.subr.mxu0 0.0
      %2096 = vmatpush1.msra.mxu0 0.0
      %2097 = vmatprep.subr.mxu0 0.0
      %2098 = vmatpush1.msra.mxu0 0.0
      %2099 = vmatprep.subr.mxu0 0.0
      %2100 = vmatpush1.msra.mxu0 0.0
      %2101 = vmatprep.subr.mxu0 0.0
      %2102 = vmatpush1.msra.mxu0 0.0
      %2103 = vmatprep.mubr.f32.mxu0 0.0
      %2104 = vmatmul.mubr.f32.gmra.mrb[0].mxu0 %v1337
      %v2105 = vpop.f32.mrb[0].mxu0
      %v2106 = vadd.f32 %v2037, %v2105
      %v2107 = vpop.f32.mrb[0].mxu0
      %2108 = vmatprep.mubr.f32.mxu0 0.0
      %2109 = vmatmul.mubr.f32.gmra.mrb[0].mxu0 %v1340
      %v2110 = vpop.f32.mrb[0].mxu0
      %v2111 = vadd.f32 %v2037, %v2110
      %v2112 = vpop.f32.mrb[0].mxu0
      %2113 = vmatprep.mubr.f32.mxu0 0.0
      %2114 = vmatmul.mubr.f32.gmra.mrb[0].mxu0 %v1343
      %v2115 = vpop.f32.mrb[0].mxu0
      %v2116 = vadd.f32 %v2037, %v2115
      %v2117 = vpop.f32.mrb[0].mxu0
      %2118 = vdwg.mxu0
      %s2119 = scalar_lea.vmem %s1042, 32
      %v2120 = vld [vmem:[%s2119] sm:$0xff]
      %v2121 = vld [vmem:[%s2119 + $0x8] sm:$0xff]
      %v2122 = vld [vmem:[%s2119 + $0x10] sm:$0xff]
      %v2123 = vld [vmem:[%s2119 + $0x18] sm:$0xff]
      %s2124 = scalar_lea.vmem %s1046, 1
      %v2125 = vld [vmem:[%s2124] sm:$0x1]
      %v2127 = vlaneseq
      %v2128 = vshrl.u32 %v2127, 7
      %v2129 = vsub.s32 0, %v2128
      %v2130 = vrot.slane %v2125, %v2129
      %2132 = vmatprep.subr.mxu0 0.0
      %2133 = vmatpush1.msra.mxu0 %v2120
      %2134 = vmatprep.subr.mxu0 0.0
      %2135 = vmatpush1.msra.mxu0 %v2121
      %2136 = vmatprep.subr.mxu0 0.0
      %2137 = vmatpush1.msra.mxu0 %v2122
      %2138 = vmatprep.subr.mxu0 0.0
      %2139 = vmatpush1.msra.mxu0 %v2123
      %2140 = vmatprep.subr.mxu0 0.0
      %2141 = vmatpush1.msra.mxu0 0.0
      %2142 = vmatprep.subr.mxu0 0.0
      %2143 = vmatpush1.msra.mxu0 0.0
      %2144 = vmatprep.subr.mxu0 0.0
      %2145 = vmatpush1.msra.mxu0 0.0
      %2146 = vmatprep.subr.mxu0 0.0
      %2147 = vmatpush1.msra.mxu0 0.0
      %2148 = vmatprep.subr.mxu0 0.0
      %2149 = vmatpush1.msra.mxu0 0.0
      %2150 = vmatprep.subr.mxu0 0.0
      %2151 = vmatpush1.msra.mxu0 0.0
      %2152 = vmatprep.subr.mxu0 0.0
      %2153 = vmatpush1.msra.mxu0 0.0
      %2154 = vmatprep.subr.mxu0 0.0
      %2155 = vmatpush1.msra.mxu0 0.0
      %2156 = vmatprep.subr.mxu0 0.0
      %2157 = vmatpush1.msra.mxu0 0.0
      %2158 = vmatprep.subr.mxu0 0.0
      %2159 = vmatpush1.msra.mxu0 0.0
      %2160 = vmatprep.subr.mxu0 0.0
      %2161 = vmatpush1.msra.mxu0 0.0
      %2162 = vmatprep.subr.mxu0 0.0
      %2163 = vmatpush1.msra.mxu0 0.0
      %2164 = vmatprep.subr.mxu0 0.0
      %2165 = vmatpush1.msra.mxu0 0.0
      %2166 = vmatprep.subr.mxu0 0.0
      %2167 = vmatpush1.msra.mxu0 0.0
      %2168 = vmatprep.subr.mxu0 0.0
      %2169 = vmatpush1.msra.mxu0 0.0
      %2170 = vmatprep.subr.mxu0 0.0
      %2171 = vmatpush1.msra.mxu0 0.0
      %2172 = vmatprep.subr.mxu0 0.0
      %2173 = vmatpush1.msra.mxu0 0.0
      %2174 = vmatprep.subr.mxu0 0.0
      %2175 = vmatpush1.msra.mxu0 0.0
      %2176 = vmatprep.subr.mxu0 0.0
      %2177 = vmatpush1.msra.mxu0 0.0
      %2178 = vmatprep.subr.mxu0 0.0
      %2179 = vmatpush1.msra.mxu0 0.0
      %2180 = vmatprep.subr.mxu0 0.0
      %2181 = vmatpush1.msra.mxu0 0.0
      %2182 = vmatprep.subr.mxu0 0.0
      %2183 = vmatpush1.msra.mxu0 0.0
      %2184 = vmatprep.subr.mxu0 0.0
      %2185 = vmatpush1.msra.mxu0 0.0
      %2186 = vmatprep.subr.mxu0 0.0
      %2187 = vmatpush1.msra.mxu0 0.0
      %2188 = vmatprep.subr.mxu0 0.0
      %2189 = vmatpush1.msra.mxu0 0.0
      %2190 = vmatprep.subr.mxu0 0.0
      %2191 = vmatpush1.msra.mxu0 0.0
      %2192 = vmatprep.subr.mxu0 0.0
      %2193 = vmatpush1.msra.mxu0 0.0
      %2194 = vmatprep.subr.mxu0 0.0
      %2195 = vmatpush1.msra.mxu0 0.0
      %2196 = vmatprep.mubr.f32.mxu0 0.0
      %2197 = vmatmul.mubr.f32.gmra.mrb[0].mxu0 %v1337
      %v2198 = vpop.f32.mrb[0].mxu0
      %v2199 = vadd.f32 %v2130, %v2198
      %v2200 = vpop.f32.mrb[0].mxu0
      %2201 = vmatprep.mubr.f32.mxu0 0.0
      %2202 = vmatmul.mubr.f32.gmra.mrb[0].mxu0 %v1340
      %v2203 = vpop.f32.mrb[0].mxu0
      %v2204 = vadd.f32 %v2130, %v2203
      %v2205 = vpop.f32.mrb[0].mxu0
      %2206 = vmatprep.mubr.f32.mxu0 0.0
      %2207 = vmatmul.mubr.f32.gmra.mrb[0].mxu0 %v1343
      %v2208 = vpop.f32.mrb[0].mxu0
      %v2209 = vadd.f32 %v2130, %v2208
      %v2210 = vpop.f32.mrb[0].mxu0
      %2211 = vdwg.mxu0
      %v2213 = vsel %vm1607, %v2013, 0
      %v2216 = vsel %vm1607, %v2018, 0
      %v2219 = vsel %vm1607, %v2023, 0
      %v2222 = vsel %vm1607, %v2106, 0
      %v2225 = vsel %vm1607, %v2111, 0
      %v2228 = vsel %vm1607, %v2116, 0
      %2230 = vmatprep.subr.mxu0 0.0
      %2231 = vmatpush1.xpose.msra.mxu0 %v2222
      %2232 = vmatprep.subr.mxu0 0.0
      %2233 = vmatpush1.xpose.msra.mxu0 %v2225
      %2234 = vmatprep.subr.mxu0 0.0
      %2235 = vmatpush1.xpose.msra.mxu0 %v2228
      %2236 = vmatprep.subr.mxu0 0.0
      %2237 = vmatpush1.xpose.msra.mxu0 0.0
      %2238 = vmatprep.subr.mxu0 0.0
      %2239 = vmatpush1.xpose.msra.mxu0 0.0
      %2240 = vmatprep.subr.mxu0 0.0
      %2241 = vmatpush1.xpose.msra.mxu0 0.0
      %2242 = vmatprep.subr.mxu0 0.0
      %2243 = vmatpush1.xpose.msra.mxu0 0.0
      %2244 = vmatprep.subr.mxu0 0.0
      %2245 = vmatpush1.xpose.msra.mxu0 0.0
      %2246 = vmatprep.subr.mxu0 0.0
      %2247 = vmatpush1.xpose.msra.mxu0 0.0
      %2248 = vmatprep.subr.mxu0 0.0
      %2249 = vmatpush1.xpose.msra.mxu0 0.0
      %2250 = vmatprep.subr.mxu0 0.0
      %2251 = vmatpush1.xpose.msra.mxu0 0.0
      %2252 = vmatprep.subr.mxu0 0.0
      %2253 = vmatpush1.xpose.msra.mxu0 0.0
      %2254 = vmatprep.subr.mxu0 0.0
      %2255 = vmatpush1.xpose.msra.mxu0 0.0
      %2256 = vmatprep.subr.mxu0 0.0
      %2257 = vmatpush1.xpose.msra.mxu0 0.0
      %2258 = vmatprep.subr.mxu0 0.0
      %2259 = vmatpush1.xpose.msra.mxu0 0.0
      %2260 = vmatprep.subr.mxu0 0.0
      %2261 = vmatpush1.xpose.msra.mxu0 0.0
      %2262 = vmatprep.subr.mxu0 0.0
      %2263 = vmatpush1.xpose.msra.mxu0 0.0
      %2264 = vmatprep.subr.mxu0 0.0
      %2265 = vmatpush1.xpose.msra.mxu0 0.0
      %2266 = vmatprep.subr.mxu0 0.0
      %2267 = vmatpush1.xpose.msra.mxu0 0.0
      %2268 = vmatprep.subr.mxu0 0.0
      %2269 = vmatpush1.xpose.msra.mxu0 0.0
      %2270 = vmatprep.subr.mxu0 0.0
      %2271 = vmatpush1.xpose.msra.mxu0 0.0
      %2272 = vmatprep.subr.mxu0 0.0
      %2273 = vmatpush1.xpose.msra.mxu0 0.0
      %2274 = vmatprep.subr.mxu0 0.0
      %2275 = vmatpush1.xpose.msra.mxu0 0.0
      %2276 = vmatprep.subr.mxu0 0.0
      %2277 = vmatpush1.xpose.msra.mxu0 0.0
      %2278 = vmatprep.subr.mxu0 0.0
      %2279 = vmatpush1.xpose.msra.mxu0 0.0
      %2280 = vmatprep.subr.mxu0 0.0
      %2281 = vmatpush1.xpose.msra.mxu0 0.0
      %2282 = vmatprep.subr.mxu0 0.0
      %2283 = vmatpush1.xpose.msra.mxu0 0.0
      %2284 = vmatprep.subr.mxu0 0.0
      %2285 = vmatpush1.xpose.msra.mxu0 0.0
      %2286 = vmatprep.subr.mxu0 0.0
      %2287 = vmatpush1.xpose.msra.mxu0 0.0
      %2288 = vmatprep.subr.mxu0 0.0
      %2289 = vmatpush1.xpose.msra.mxu0 0.0
      %2290 = vmatprep.subr.mxu0 0.0
      %2291 = vmatpush1.xpose.msra.mxu0 0.0
      %2292 = vmatprep.subr.mxu0 0.0
      %2293 = vmatpush1.xpose.msra.mxu0 0.0
      %2294 = vmatprep.mubr.f32.mxu0 0.0
      %2295 = vmatmul.mubr.f32.gmra.mrb[0].mxu0 %v2213
      %v2296 = vpop.f32.mrb[0].mxu0
      %v2297 = vadd.f32 0.0, %v2296
      %v2298 = vpop.f32.mrb[0].mxu0
      %2299 = vmatprep.mubr.f32.mxu0 0.0
      %2300 = vmatmul.mubr.f32.gmra.mrb[0].mxu0 %v2216
      %v2301 = vpop.f32.mrb[0].mxu0
      %v2302 = vadd.f32 0.0, %v2301
      %v2303 = vpop.f32.mrb[0].mxu0
      %2304 = vmatprep.mubr.f32.mxu0 0.0
      %2305 = vmatmul.mubr.f32.gmra.mrb[0].mxu0 %v2219
      %v2306 = vpop.f32.mrb[0].mxu0
      %v2307 = vadd.f32 0.0, %v2306
      %v2308 = vpop.f32.mrb[0].mxu0
      %2309 = vdwg.mxu0
      %v2310 = vsel %vm1706, %v2297, -inf
      %2311 = vmax.xlane.f32.xlu0 %v2310
      %v2312 = vpop.xlane.xlu0 %2311
      %v2313 = vsel %vm1706, %v2302, -inf
      %2314 = vmax.xlane.f32.xlu0 %v2313
      %v2315 = vpop.xlane.xlu0 %2314
      %v2316 = vsel %vm1713, %v2307, -inf
      %2317 = vmax.xlane.f32.xlu0 %v2316
      %v2318 = vpop.xlane.xlu0 %2317
      %v2319 = vsub.f32 %v2297, %v2312
      %v2320 = vsub.f32 %v2302, %v2315
      %v2321 = vsub.f32 %v2307, %v2318
      %v2322 = vmul.f32 %v2319, 1.442695
      %v2323 = vpow.pop %v2322
      %v2324 = vmul.f32 %v2320, 1.442695
      %v2325 = vpow.pop %v2324
      %v2326 = vmul.f32 %v2321, 1.442695
      %v2327 = vpow.pop %v2326
      %v2328 = vsel %vm1706, %v2323, 0.0
      %2329 = vadd.xlane.f32.xlu0 %v2328
      %v2330 = vpop.xlane.xlu0 %2329
      %v2331 = vsel %vm1706, %v2325, 0.0
      %2332 = vadd.xlane.f32.xlu0 %v2331
      %v2333 = vpop.xlane.xlu0 %2332
      %v2334 = vsel %vm1713, %v2327, 0.0
      %2335 = vadd.xlane.f32.xlu0 %v2334
      %v2336 = vpop.xlane.xlu0 %2335
      %v2337 = vrcp.pop %v2330
      %v2338 = vrcp.pop %v2333
      %v2339 = vrcp.pop %v2336
      %v2340 = vmul.f32 %v2323, %v2337
      %v2341 = vmul.f32 %v2325, %v2338
      %v2342 = vmul.f32 %v2327, %v2339
      %v2344 = vsel %vm1706, %v2340, 0
      %v2347 = vsel %vm1706, %v2341, 0
      %v2350 = vsel %vm1706, %v2342, 0
      %v2353 = vsel %vm1750, %v2209, 0
      %2355 = vmatprep.subr.mxu0 0.0
      %2356 = vmatpush1.msra.mxu0 %v2199
      %2357 = vmatprep.subr.mxu0 0.0
      %2358 = vmatpush1.msra.mxu0 %v2204
      %2359 = vmatprep.subr.mxu0 0.0
      %2360 = vmatpush1.msra.mxu0 %v2353
      %2361 = vmatprep.subr.mxu0 0.0
      %2362 = vmatpush1.msra.mxu0 0.0
      %2363 = vmatprep.subr.mxu0 0.0
      %2364 = vmatpush1.msra.mxu0 0.0
      %2365 = vmatprep.subr.mxu0 0.0
      %2366 = vmatpush1.msra.mxu0 0.0
      %2367 = vmatprep.subr.mxu0 0.0
      %2368 = vmatpush1.msra.mxu0 0.0
      %2369 = vmatprep.subr.mxu0 0.0
      %2370 = vmatpush1.msra.mxu0 0.0
      %2371 = vmatprep.subr.mxu0 0.0
      %2372 = vmatpush1.msra.mxu0 0.0
      %2373 = vmatprep.subr.mxu0 0.0
      %2374 = vmatpush1.msra.mxu0 0.0
      %2375 = vmatprep.subr.mxu0 0.0
      %2376 = vmatpush1.msra.mxu0 0.0
      %2377 = vmatprep.subr.mxu0 0.0
      %2378 = vmatpush1.msra.mxu0 0.0
      %2379 = vmatprep.subr.mxu0 0.0
      %2380 = vmatpush1.msra.mxu0 0.0
      %2381 = vmatprep.subr.mxu0 0.0
      %2382 = vmatpush1.msra.mxu0 0.0
      %2383 = vmatprep.subr.mxu0 0.0
      %2384 = vmatpush1.msra.mxu0 0.0
      %2385 = vmatprep.subr.mxu0 0.0
      %2386 = vmatpush1.msra.mxu0 0.0
      %2387 = vmatprep.subr.mxu0 0.0
      %2388 = vmatpush1.msra.mxu0 0.0
      %2389 = vmatprep.subr.mxu0 0.0
      %2390 = vmatpush1.msra.mxu0 0.0
      %2391 = vmatprep.subr.mxu0 0.0
      %2392 = vmatpush1.msra.mxu0 0.0
      %2393 = vmatprep.subr.mxu0 0.0
      %2394 = vmatpush1.msra.mxu0 0.0
      %2395 = vmatprep.subr.mxu0 0.0
      %2396 = vmatpush1.msra.mxu0 0.0
      %2397 = vmatprep.subr.mxu0 0.0
      %2398 = vmatpush1.msra.mxu0 0.0
      %2399 = vmatprep.subr.mxu0 0.0
      %2400 = vmatpush1.msra.mxu0 0.0
      %2401 = vmatprep.subr.mxu0 0.0
      %2402 = vmatpush1.msra.mxu0 0.0
      %2403 = vmatprep.subr.mxu0 0.0
      %2404 = vmatpush1.msra.mxu0 0.0
      %2405 = vmatprep.subr.mxu0 0.0
      %2406 = vmatpush1.msra.mxu0 0.0
      %2407 = vmatprep.subr.mxu0 0.0
      %2408 = vmatpush1.msra.mxu0 0.0
      %2409 = vmatprep.subr.mxu0 0.0
      %2410 = vmatpush1.msra.mxu0 0.0
      %2411 = vmatprep.subr.mxu0 0.0
      %2412 = vmatpush1.msra.mxu0 0.0
      %2413 = vmatprep.subr.mxu0 0.0
      %2414 = vmatpush1.msra.mxu0 0.0
      %2415 = vmatprep.subr.mxu0 0.0
      %2416 = vmatpush1.msra.mxu0 0.0
      %2417 = vmatprep.subr.mxu0 0.0
      %2418 = vmatpush1.msra.mxu0 0.0
      %2419 = vmatprep.mubr.f32.mxu0 0.0
      %2420 = vmatmul.mubr.f32.gmra.mrb[0].mxu0 %v2344
      %v2421 = vpop.f32.mrb[0].mxu0
      %v2422 = vadd.f32 0.0, %v2421
      %v2423 = vpop.f32.mrb[0].mxu0
      %2424 = vmatprep.mubr.f32.mxu0 0.0
      %2425 = vmatmul.mubr.f32.gmra.mrb[0].mxu0 %v2347
      %v2426 = vpop.f32.mrb[0].mxu0
      %v2427 = vadd.f32 0.0, %v2426
      %v2428 = vpop.f32.mrb[0].mxu0
      %2429 = vmatprep.mubr.f32.mxu0 0.0
      %2430 = vmatmul.mubr.f32.gmra.mrb[0].mxu0 %v2350
      %v2431 = vpop.f32.mrb[0].mxu0
      %v2432 = vadd.f32 0.0, %v2431
      %v2433 = vpop.f32.mrb[0].mxu0
      %2434 = vdwg.mxu0
      %s2435 = scalar_lea.vmem %s1051, 8
      %v2436 = vld [vmem:[%s2435] sm:$0xff]
      %v2438 = vsel %vm1607, %v2422, 0
      %v2441 = vsel %vm1607, %v2427, 0
      %v2444 = vsel %vm1607, %v2432, 0
      %2446 = vmatprep.subr.mxu0 0.0
      %2447 = vmatpush1.msra.mxu0 %v2436
      %2448 = vmatprep.subr.mxu0 0.0
      %2449 = vmatpush1.msra.mxu0 0.0
      %2450 = vmatprep.subr.mxu0 0.0
      %2451 = vmatpush1.msra.mxu0 0.0
      %2452 = vmatprep.subr.mxu0 0.0
      %2453 = vmatpush1.msra.mxu0 0.0
      %2454 = vmatprep.subr.mxu0 0.0
      %2455 = vmatpush1.msra.mxu0 0.0
      %2456 = vmatprep.subr.mxu0 0.0
      %2457 = vmatpush1.msra.mxu0 0.0
      %2458 = vmatprep.subr.mxu0 0.0
      %2459 = vmatpush1.msra.mxu0 0.0
      %2460 = vmatprep.subr.mxu0 0.0
      %2461 = vmatpush1.msra.mxu0 0.0
      %2462 = vmatprep.subr.mxu0 0.0
      %2463 = vmatpush1.msra.mxu0 0.0
      %2464 = vmatprep.subr.mxu0 0.0
      %2465 = vmatpush1.msra.mxu0 0.0
      %2466 = vmatprep.subr.mxu0 0.0
      %2467 = vmatpush1.msra.mxu0 0.0
      %2468 = vmatprep.subr.mxu0 0.0
      %2469 = vmatpush1.msra.mxu0 0.0
      %2470 = vmatprep.subr.mxu0 0.0
      %2471 = vmatpush1.msra.mxu0 0.0
      %2472 = vmatprep.subr.mxu0 0.0
      %2473 = vmatpush1.msra.mxu0 0.0
      %2474 = vmatprep.subr.mxu0 0.0
      %2475 = vmatpush1.msra.mxu0 0.0
      %2476 = vmatprep.subr.mxu0 0.0
      %2477 = vmatpush1.msra.mxu0 0.0
      %2478 = vmatprep.subr.mxu0 0.0
      %2479 = vmatpush1.msra.mxu0 0.0
      %2480 = vmatprep.subr.mxu0 0.0
      %2481 = vmatpush1.msra.mxu0 0.0
      %2482 = vmatprep.subr.mxu0 0.0
      %2483 = vmatpush1.msra.mxu0 0.0
      %2484 = vmatprep.subr.mxu0 0.0
      %2485 = vmatpush1.msra.mxu0 0.0
      %2486 = vmatprep.subr.mxu0 0.0
      %2487 = vmatpush1.msra.mxu0 0.0
      %2488 = vmatprep.subr.mxu0 0.0
      %2489 = vmatpush1.msra.mxu0 0.0
      %2490 = vmatprep.subr.mxu0 0.0
      %2491 = vmatpush1.msra.mxu0 0.0
      %2492 = vmatprep.subr.mxu0 0.0
      %2493 = vmatpush1.msra.mxu0 0.0
      %2494 = vmatprep.subr.mxu0 0.0
      %2495 = vmatpush1.msra.mxu0 0.0
      %2496 = vmatprep.subr.mxu0 0.0
      %2497 = vmatpush1.msra.mxu0 0.0
      %2498 = vmatprep.subr.mxu0 0.0
      %2499 = vmatpush1.msra.mxu0 0.0
      %2500 = vmatprep.subr.mxu0 0.0
      %2501 = vmatpush1.msra.mxu0 0.0
      %2502 = vmatprep.subr.mxu0 0.0
      %2503 = vmatpush1.msra.mxu0 0.0
      %2504 = vmatprep.subr.mxu0 0.0
      %2505 = vmatpush1.msra.mxu0 0.0
      %2506 = vmatprep.subr.mxu0 0.0
      %2507 = vmatpush1.msra.mxu0 0.0
      %2508 = vmatprep.subr.mxu0 0.0
      %2509 = vmatpush1.msra.mxu0 0.0
      %2510 = vmatprep.mubr.f32.mxu0 0.0
      %2511 = vmatmul.mubr.f32.gmra.mrb[0].mxu0 %v2438
      %v2512 = vpop.f32.mrb[0].mxu0
      %v2513 = vadd.f32 0.0, %v2512
      %v2514 = vpop.f32.mrb[0].mxu0
      %2515 = vmatprep.mubr.f32.mxu0 0.0
      %2516 = vmatmul.mubr.f32.gmra.mrb[0].mxu0 %v2441
      %v2517 = vpop.f32.mrb[0].mxu0
      %v2518 = vadd.f32 0.0, %v2517
      %v2519 = vpop.f32.mrb[0].mxu0
      %2520 = vmatprep.mubr.f32.mxu0 0.0
      %2521 = vmatmul.mubr.f32.gmra.mrb[0].mxu0 %v2444
      %v2522 = vpop.f32.mrb[0].mxu0
      %v2523 = vadd.f32 0.0, %v2522
      %v2524 = vpop.f32.mrb[0].mxu0
      %2525 = vdwg.mxu0
      %v2526 = vadd.f32 %v1930, %v2513
      %v2527 = vadd.f32 %v1931, %v2518
      %v2528 = vadd.f32 %v1932, %v2523
      %s2529 = scalar_lea.vmem %s1024, 64
      %v2530 = vld [vmem:[%s2529] sm:$0xff]
      %v2531 = vld [vmem:[%s2529 + $0x8] sm:$0xff]
      %v2532 = vld [vmem:[%s2529 + $0x10] sm:$0xff]
      %v2533 = vld [vmem:[%s2529 + $0x18] sm:$0xff]
      %s2534 = scalar_lea.vmem %s1028, 2
      %v2535 = vld [vmem:[%s2534] sm:$0x1]
      %v2537 = vlaneseq
      %v2538 = vshrl.u32 %v2537, 7
      %v2539 = vsub.s32 0, %v2538
      %v2540 = vrot.slane %v2535, %v2539
      %2542 = vmatprep.subr.mxu0 0.0
      %2543 = vmatpush1.msra.mxu0 %v2530
      %2544 = vmatprep.subr.mxu0 0.0
      %2545 = vmatpush1.msra.mxu0 %v2531
      %2546 = vmatprep.subr.mxu0 0.0
      %2547 = vmatpush1.msra.mxu0 %v2532
      %2548 = vmatprep.subr.mxu0 0.0
      %2549 = vmatpush1.msra.mxu0 %v2533
      %2550 = vmatprep.subr.mxu0 0.0
      %2551 = vmatpush1.msra.mxu0 0.0
      %2552 = vmatprep.subr.mxu0 0.0
      %2553 = vmatpush1.msra.mxu0 0.0
      %2554 = vmatprep.subr.mxu0 0.0
      %2555 = vmatpush1.msra.mxu0 0.0
      %2556 = vmatprep.subr.mxu0 0.0
      %2557 = vmatpush1.msra.mxu0 0.0
      %2558 = vmatprep.subr.mxu0 0.0
      %2559 = vmatpush1.msra.mxu0 0.0
      %2560 = vmatprep.subr.mxu0 0.0
      %2561 = vmatpush1.msra.mxu0 0.0
      %2562 = vmatprep.subr.mxu0 0.0
      %2563 = vmatpush1.msra.mxu0 0.0
      %2564 = vmatprep.subr.mxu0 0.0
      %2565 = vmatpush1.msra.mxu0 0.0
      %2566 = vmatprep.subr.mxu0 0.0
      %2567 = vmatpush1.msra.mxu0 0.0
      %2568 = vmatprep.subr.mxu0 0.0
      %2569 = vmatpush1.msra.mxu0 0.0
      %2570 = vmatprep.subr.mxu0 0.0
      %2571 = vmatpush1.msra.mxu0 0.0
      %2572 = vmatprep.subr.mxu0 0.0
      %2573 = vmatpush1.msra.mxu0 0.0
      %2574 = vmatprep.subr.mxu0 0.0
      %2575 = vmatpush1.msra.mxu0 0.0
      %2576 = vmatprep.subr.mxu0 0.0
      %2577 = vmatpush1.msra.mxu0 0.0
      %2578 = vmatprep.subr.mxu0 0.0
      %2579 = vmatpush1.msra.mxu0 0.0
      %2580 = vmatprep.subr.mxu0 0.0
      %2581 = vmatpush1.msra.mxu0 0.0
      %2582 = vmatprep.subr.mxu0 0.0
      %2583 = vmatpush1.msra.mxu0 0.0
      %2584 = vmatprep.subr.mxu0 0.0
      %2585 = vmatpush1.msra.mxu0 0.0
      %2586 = vmatprep.subr.mxu0 0.0
      %2587 = vmatpush1.msra.mxu0 0.0
      %2588 = vmatprep.subr.mxu0 0.0
      %2589 = vmatpush1.msra.mxu0 0.0
      %2590 = vmatprep.subr.mxu0 0.0
      %2591 = vmatpush1.msra.mxu0 0.0
      %2592 = vmatprep.subr.mxu0 0.0
      %2593 = vmatpush1.msra.mxu0 0.0
      %2594 = vmatprep.subr.mxu0 0.0
      %2595 = vmatpush1.msra.mxu0 0.0
      %2596 = vmatprep.subr.mxu0 0.0
      %2597 = vmatpush1.msra.mxu0 0.0
      %2598 = vmatprep.subr.mxu0 0.0
      %2599 = vmatpush1.msra.mxu0 0.0
      %2600 = vmatprep.subr.mxu0 0.0
      %2601 = vmatpush1.msra.mxu0 0.0
      %2602 = vmatprep.subr.mxu0 0.0
      %2603 = vmatpush1.msra.mxu0 0.0
      %2604 = vmatprep.subr.mxu0 0.0
      %2605 = vmatpush1.msra.mxu0 0.0
      %2606 = vmatprep.mubr.f32.mxu0 0.0
      %2607 = vmatmul.mubr.f32.gmra.mrb[0].mxu0 %v1337
      %v2608 = vpop.f32.mrb[0].mxu0
      %v2609 = vadd.f32 %v2540, %v2608
      %v2610 = vpop.f32.mrb[0].mxu0
      %2611 = vmatprep.mubr.f32.mxu0 0.0
      %2612 = vmatmul.mubr.f32.gmra.mrb[0].mxu0 %v1340
      %v2613 = vpop.f32.mrb[0].mxu0
      %v2614 = vadd.f32 %v2540, %v2613
      %v2615 = vpop.f32.mrb[0].mxu0
      %2616 = vmatprep.mubr.f32.mxu0 0.0
      %2617 = vmatmul.mubr.f32.gmra.mrb[0].mxu0 %v1343
      %v2618 = vpop.f32.mrb[0].mxu0
      %v2619 = vadd.f32 %v2540, %v2618
      %v2620 = vpop.f32.mrb[0].mxu0
      %2621 = vdwg.mxu0
      %s2622 = scalar_lea.vmem %s1033, 64
      %v2623 = vld [vmem:[%s2622] sm:$0xff]
      %v2624 = vld [vmem:[%s2622 + $0x8] sm:$0xff]
      %v2625 = vld [vmem:[%s2622 + $0x10] sm:$0xff]
      %v2626 = vld [vmem:[%s2622 + $0x18] sm:$0xff]
      %s2627 = scalar_lea.vmem %s1037, 2
      %v2628 = vld [vmem:[%s2627] sm:$0x1]
      %v2630 = vlaneseq
      %v2631 = vshrl.u32 %v2630, 7
      %v2632 = vsub.s32 0, %v2631
      %v2633 = vrot.slane %v2628, %v2632
      %2635 = vmatprep.subr.mxu0 0.0
      %2636 = vmatpush1.msra.mxu0 %v2623
      %2637 = vmatprep.subr.mxu0 0.0
      %2638 = vmatpush1.msra.mxu0 %v2624
      %2639 = vmatprep.subr.mxu0 0.0
      %2640 = vmatpush1.msra.mxu0 %v2625
      %2641 = vmatprep.subr.mxu0 0.0
      %2642 = vmatpush1.msra.mxu0 %v2626
      %2643 = vmatprep.subr.mxu0 0.0
      %2644 = vmatpush1.msra.mxu0 0.0
      %2645 = vmatprep.subr.mxu0 0.0
      %2646 = vmatpush1.msra.mxu0 0.0
      %2647 = vmatprep.subr.mxu0 0.0
      %2648 = vmatpush1.msra.mxu0 0.0
      %2649 = vmatprep.subr.mxu0 0.0
      %2650 = vmatpush1.msra.mxu0 0.0
      %2651 = vmatprep.subr.mxu0 0.0
      %2652 = vmatpush1.msra.mxu0 0.0
      %2653 = vmatprep.subr.mxu0 0.0
      %2654 = vmatpush1.msra.mxu0 0.0
      %2655 = vmatprep.subr.mxu0 0.0
      %2656 = vmatpush1.msra.mxu0 0.0
      %2657 = vmatprep.subr.mxu0 0.0
      %2658 = vmatpush1.msra.mxu0 0.0
      %2659 = vmatprep.subr.mxu0 0.0
      %2660 = vmatpush1.msra.mxu0 0.0
      %2661 = vmatprep.subr.mxu0 0.0
      %2662 = vmatpush1.msra.mxu0 0.0
      %2663 = vmatprep.subr.mxu0 0.0
      %2664 = vmatpush1.msra.mxu0 0.0
      %2665 = vmatprep.subr.mxu0 0.0
      %2666 = vmatpush1.msra.mxu0 0.0
      %2667 = vmatprep.subr.mxu0 0.0
      %2668 = vmatpush1.msra.mxu0 0.0
      %2669 = vmatprep.subr.mxu0 0.0
      %2670 = vmatpush1.msra.mxu0 0.0
      %2671 = vmatprep.subr.mxu0 0.0
      %2672 = vmatpush1.msra.mxu0 0.0
      %2673 = vmatprep.subr.mxu0 0.0
      %2674 = vmatpush1.msra.mxu0 0.0
      %2675 = vmatprep.subr.mxu0 0.0
      %2676 = vmatpush1.msra.mxu0 0.0
      %2677 = vmatprep.subr.mxu0 0.0
      %2678 = vmatpush1.msra.mxu0 0.0
      %2679 = vmatprep.subr.mxu0 0.0
      %2680 = vmatpush1.msra.mxu0 0.0
      %2681 = vmatprep.subr.mxu0 0.0
      %2682 = vmatpush1.msra.mxu0 0.0
      %2683 = vmatprep.subr.mxu0 0.0
      %2684 = vmatpush1.msra.mxu0 0.0
      %2685 = vmatprep.subr.mxu0 0.0
      %2686 = vmatpush1.msra.mxu0 0.0
      %2687 = vmatprep.subr.mxu0 0.0
      %2688 = vmatpush1.msra.mxu0 0.0
      %2689 = vmatprep.subr.mxu0 0.0
      %2690 = vmatpush1.msra.mxu0 0.0
      %2691 = vmatprep.subr.mxu0 0.0
      %2692 = vmatpush1.msra.mxu0 0.0
      %2693 = vmatprep.subr.mxu0 0.0
      %2694 = vmatpush1.msra.mxu0 0.0
      %2695 = vmatprep.subr.mxu0 0.0
      %2696 = vmatpush1.msra.mxu0 0.0
      %2697 = vmatprep.subr.mxu0 0.0
      %2698 = vmatpush1.msra.mxu0 0.0
      %2699 = vmatprep.mubr.f32.mxu0 0.0
      %2700 = vmatmul.mubr.f32.gmra.mrb[0].mxu0 %v1337
      %v2701 = vpop.f32.mrb[0].mxu0
      %v2702 = vadd.f32 %v2633, %v2701
      %v2703 = vpop.f32.mrb[0].mxu0
      %2704 = vmatprep.mubr.f32.mxu0 0.0
      %2705 = vmatmul.mubr.f32.gmra.mrb[0].mxu0 %v1340
      %v2706 = vpop.f32.mrb[0].mxu0
      %v2707 = vadd.f32 %v2633, %v2706
      %v2708 = vpop.f32.mrb[0].mxu0
      %2709 = vmatprep.mubr.f32.mxu0 0.0
      %2710 = vmatmul.mubr.f32.gmra.mrb[0].mxu0 %v1343
      %v2711 = vpop.f32.mrb[0].mxu0
      %v2712 = vadd.f32 %v2633, %v2711
      %v2713 = vpop.f32.mrb[0].mxu0
      %2714 = vdwg.mxu0
      %s2715 = scalar_lea.vmem %s1042, 64
      %v2716 = vld [vmem:[%s2715] sm:$0xff]
      %v2717 = vld [vmem:[%s2715 + $0x8] sm:$0xff]
      %v2718 = vld [vmem:[%s2715 + $0x10] sm:$0xff]
      %v2719 = vld [vmem:[%s2715 + $0x18] sm:$0xff]
      %s2720 = scalar_lea.vmem %s1046, 2
      %v2721 = vld [vmem:[%s2720] sm:$0x1]
      %v2723 = vlaneseq
      %v2724 = vshrl.u32 %v2723, 7
      %v2725 = vsub.s32 0, %v2724
      %v2726 = vrot.slane %v2721, %v2725
      %2728 = vmatprep.subr.mxu0 0.0
      %2729 = vmatpush1.msra.mxu0 %v2716
      %2730 = vmatprep.subr.mxu0 0.0
      %2731 = vmatpush1.msra.mxu0 %v2717
      %2732 = vmatprep.subr.mxu0 0.0
      %2733 = vmatpush1.msra.mxu0 %v2718
      %2734 = vmatprep.subr.mxu0 0.0
      %2735 = vmatpush1.msra.mxu0 %v2719
      %2736 = vmatprep.subr.mxu0 0.0
      %2737 = vmatpush1.msra.mxu0 0.0
      %2738 = vmatprep.subr.mxu0 0.0
      %2739 = vmatpush1.msra.mxu0 0.0
      %2740 = vmatprep.subr.mxu0 0.0
      %2741 = vmatpush1.msra.mxu0 0.0
      %2742 = vmatprep.subr.mxu0 0.0
      %2743 = vmatpush1.msra.mxu0 0.0
      %2744 = vmatprep.subr.mxu0 0.0
      %2745 = vmatpush1.msra.mxu0 0.0
      %2746 = vmatprep.subr.mxu0 0.0
      %2747 = vmatpush1.msra.mxu0 0.0
      %2748 = vmatprep.subr.mxu0 0.0
      %2749 = vmatpush1.msra.mxu0 0.0
      %2750 = vmatprep.subr.mxu0 0.0
      %2751 = vmatpush1.msra.mxu0 0.0
      %2752 = vmatprep.subr.mxu0 0.0
      %2753 = vmatpush1.msra.mxu0 0.0
      %2754 = vmatprep.subr.mxu0 0.0
      %2755 = vmatpush1.msra.mxu0 0.0
      %2756 = vmatprep.subr.mxu0 0.0
      %2757 = vmatpush1.msra.mxu0 0.0
      %2758 = vmatprep.subr.mxu0 0.0
      %2759 = vmatpush1.msra.mxu0 0.0
      %2760 = vmatprep.subr.mxu0 0.0
      %2761 = vmatpush1.msra.mxu0 0.0
      %2762 = vmatprep.subr.mxu0 0.0
      %2763 = vmatpush1.msra.mxu0 0.0
      %2764 = vmatprep.subr.mxu0 0.0
      %2765 = vmatpush1.msra.mxu0 0.0
      %2766 = vmatprep.subr.mxu0 0.0
      %2767 = vmatpush1.msra.mxu0 0.0
      %2768 = vmatprep.subr.mxu0 0.0
      %2769 = vmatpush1.msra.mxu0 0.0
      %2770 = vmatprep.subr.mxu0 0.0
      %2771 = vmatpush1.msra.mxu0 0.0
      %2772 = vmatprep.subr.mxu0 0.0
      %2773 = vmatpush1.msra.mxu0 0.0
      %2774 = vmatprep.subr.mxu0 0.0
      %2775 = vmatpush1.msra.mxu0 0.0
      %2776 = vmatprep.subr.mxu0 0.0
      %2777 = vmatpush1.msra.mxu0 0.0
      %2778 = vmatprep.subr.mxu0 0.0
      %2779 = vmatpush1.msra.mxu0 0.0
      %2780 = vmatprep.subr.mxu0 0.0
      %2781 = vmatpush1.msra.mxu0 0.0
      %2782 = vmatprep.subr.mxu0 0.0
      %2783 = vmatpush1.msra.mxu0 0.0
      %2784 = vmatprep.subr.mxu0 0.0
      %2785 = vmatpush1.msra.mxu0 0.0
      %2786 = vmatprep.subr.mxu0 0.0
      %2787 = vmatpush1.msra.mxu0 0.0
      %2788 = vmatprep.subr.mxu0 0.0
      %2789 = vmatpush1.msra.mxu0 0.0
      %2790 = vmatprep.subr.mxu0 0.0
      %2791 = vmatpush1.msra.mxu0 0.0
      %2792 = vmatprep.mubr.f32.mxu0 0.0
      %2793 = vmatmul.mubr.f32.gmra.mrb[0].mxu0 %v1337
      %v2794 = vpop.f32.mrb[0].mxu0
      %v2795 = vadd.f32 %v2726, %v2794
      %v2796 = vpop.f32.mrb[0].mxu0
      %2797 = vmatprep.mubr.f32.mxu0 0.0
      %2798 = vmatmul.mubr.f32.gmra.mrb[0].mxu0 %v1340
      %v2799 = vpop.f32.mrb[0].mxu0
      %v2800 = vadd.f32 %v2726, %v2799
      %v2801 = vpop.f32.mrb[0].mxu0
      %2802 = vmatprep.mubr.f32.mxu0 0.0
      %2803 = vmatmul.mubr.f32.gmra.mrb[0].mxu0 %v1343
      %v2804 = vpop.f32.mrb[0].mxu0
      %v2805 = vadd.f32 %v2726, %v2804
      %v2806 = vpop.f32.mrb[0].mxu0
      %2807 = vdwg.mxu0
      %v2809 = vsel %vm1607, %v2609, 0
      %v2812 = vsel %vm1607, %v2614, 0
      %v2815 = vsel %vm1607, %v2619, 0
      %v2818 = vsel %vm1607, %v2702, 0
      %v2821 = vsel %vm1607, %v2707, 0
      %v2824 = vsel %vm1607, %v2712, 0
      %2826 = vmatprep.subr.mxu0 0.0
      %2827 = vmatpush1.xpose.msra.mxu0 %v2818
      %2828 = vmatprep.subr.mxu0 0.0
      %2829 = vmatpush1.xpose.msra.mxu0 %v2821
      %2830 = vmatprep.subr.mxu0 0.0
      %2831 = vmatpush1.xpose.msra.mxu0 %v2824
      %2832 = vmatprep.subr.mxu0 0.0
      %2833 = vmatpush1.xpose.msra.mxu0 0.0
      %2834 = vmatprep.subr.mxu0 0.0
      %2835 = vmatpush1.xpose.msra.mxu0 0.0
      %2836 = vmatprep.subr.mxu0 0.0
      %2837 = vmatpush1.xpose.msra.mxu0 0.0
      %2838 = vmatprep.subr.mxu0 0.0
      %2839 = vmatpush1.xpose.msra.mxu0 0.0
      %2840 = vmatprep.subr.mxu0 0.0
      %2841 = vmatpush1.xpose.msra.mxu0 0.0
      %2842 = vmatprep.subr.mxu0 0.0
      %2843 = vmatpush1.xpose.msra.mxu0 0.0
      %2844 = vmatprep.subr.mxu0 0.0
      %2845 = vmatpush1.xpose.msra.mxu0 0.0
      %2846 = vmatprep.subr.mxu0 0.0
      %2847 = vmatpush1.xpose.msra.mxu0 0.0
      %2848 = vmatprep.subr.mxu0 0.0
      %2849 = vmatpush1.xpose.msra.mxu0 0.0
      %2850 = vmatprep.subr.mxu0 0.0
      %2851 = vmatpush1.xpose.msra.mxu0 0.0
      %2852 = vmatprep.subr.mxu0 0.0
      %2853 = vmatpush1.xpose.msra.mxu0 0.0
      %2854 = vmatprep.subr.mxu0 0.0
      %2855 = vmatpush1.xpose.msra.mxu0 0.0
      %2856 = vmatprep.subr.mxu0 0.0
      %2857 = vmatpush1.xpose.msra.mxu0 0.0
      %2858 = vmatprep.subr.mxu0 0.0
      %2859 = vmatpush1.xpose.msra.mxu0 0.0
      %2860 = vmatprep.subr.mxu0 0.0
      %2861 = vmatpush1.xpose.msra.mxu0 0.0
      %2862 = vmatprep.subr.mxu0 0.0
      %2863 = vmatpush1.xpose.msra.mxu0 0.0
      %2864 = vmatprep.subr.mxu0 0.0
      %2865 = vmatpush1.xpose.msra.mxu0 0.0
      %2866 = vmatprep.subr.mxu0 0.0
      %2867 = vmatpush1.xpose.msra.mxu0 0.0
      %2868 = vmatprep.subr.mxu0 0.0
      %2869 = vmatpush1.xpose.msra.mxu0 0.0
      %2870 = vmatprep.subr.mxu0 0.0
      %2871 = vmatpush1.xpose.msra.mxu0 0.0
      %2872 = vmatprep.subr.mxu0 0.0
      %2873 = vmatpush1.xpose.msra.mxu0 0.0
      %2874 = vmatprep.subr.mxu0 0.0
      %2875 = vmatpush1.xpose.msra.mxu0 0.0
      %2876 = vmatprep.subr.mxu0 0.0
      %2877 = vmatpush1.xpose.msra.mxu0 0.0
      %2878 = vmatprep.subr.mxu0 0.0
      %2879 = vmatpush1.xpose.msra.mxu0 0.0
      %2880 = vmatprep.subr.mxu0 0.0
      %2881 = vmatpush1.xpose.msra.mxu0 0.0
      %2882 = vmatprep.subr.mxu0 0.0
      %2883 = vmatpush1.xpose.msra.mxu0 0.0
      %2884 = vmatprep.subr.mxu0 0.0
      %2885 = vmatpush1.xpose.msra.mxu0 0.0
      %2886 = vmatprep.subr.mxu0 0.0
      %2887 = vmatpush1.xpose.msra.mxu0 0.0
      %2888 = vmatprep.subr.mxu0 0.0
      %2889 = vmatpush1.xpose.msra.mxu0 0.0
      %2890 = vmatprep.mubr.f32.mxu0 0.0
      %2891 = vmatmul.mubr.f32.gmra.mrb[0].mxu0 %v2809
      %v2892 = vpop.f32.mrb[0].mxu0
      %v2893 = vadd.f32 0.0, %v2892
      %v2894 = vpop.f32.mrb[0].mxu0
      %2895 = vmatprep.mubr.f32.mxu0 0.0
      %2896 = vmatmul.mubr.f32.gmra.mrb[0].mxu0 %v2812
      %v2897 = vpop.f32.mrb[0].mxu0
      %v2898 = vadd.f32 0.0, %v2897
      %v2899 = vpop.f32.mrb[0].mxu0
      %2900 = vmatprep.mubr.f32.mxu0 0.0
      %2901 = vmatmul.mubr.f32.gmra.mrb[0].mxu0 %v2815
      %v2902 = vpop.f32.mrb[0].mxu0
      %v2903 = vadd.f32 0.0, %v2902
      %v2904 = vpop.f32.mrb[0].mxu0
      %2905 = vdwg.mxu0
      %v2906 = vsel %vm1706, %v2893, -inf
      %2907 = vmax.xlane.f32.xlu0 %v2906
      %v2908 = vpop.xlane.xlu0 %2907
      %v2909 = vsel %vm1706, %v2898, -inf
      %2910 = vmax.xlane.f32.xlu0 %v2909
      %v2911 = vpop.xlane.xlu0 %2910
      %v2912 = vsel %vm1713, %v2903, -inf
      %2913 = vmax.xlane.f32.xlu0 %v2912
      %v2914 = vpop.xlane.xlu0 %2913
      %v2915 = vsub.f32 %v2893, %v2908
      %v2916 = vsub.f32 %v2898, %v2911
      %v2917 = vsub.f32 %v2903, %v2914
      %v2918 = vmul.f32 %v2915, 1.442695
      %v2919 = vpow.pop %v2918
      %v2920 = vmul.f32 %v2916, 1.442695
      %v2921 = vpow.pop %v2920
      %v2922 = vmul.f32 %v2917, 1.442695
      %v2923 = vpow.pop %v2922
      %v2924 = vsel %vm1706, %v2919, 0.0
      %2925 = vadd.xlane.f32.xlu0 %v2924
      %v2926 = vpop.xlane.xlu0 %2925
      %v2927 = vsel %vm1706, %v2921, 0.0
      %2928 = vadd.xlane.f32.xlu0 %v2927
      %v2929 = vpop.xlane.xlu0 %2928
      %v2930 = vsel %vm1713, %v2923, 0.0
      %2931 = vadd.xlane.f32.xlu0 %v2930
      %v2932 = vpop.xlane.xlu0 %2931
      %v2933 = vrcp.pop %v2926
      %v2934 = vrcp.pop %v2929
      %v2935 = vrcp.pop %v2932
      %v2936 = vmul.f32 %v2919, %v2933
      %v2937 = vmul.f32 %v2921, %v2934
      %v2938 = vmul.f32 %v2923, %v2935
      %v2940 = vsel %vm1706, %v2936, 0
      %v2943 = vsel %vm1706, %v2937, 0
      %v2946 = vsel %vm1706, %v2938, 0
      %v2949 = vsel %vm1750, %v2805, 0
      %2951 = vmatprep.subr.mxu0 0.0
      %2952 = vmatpush1.msra.mxu0 %v2795
      %2953 = vmatprep.subr.mxu0 0.0
      %2954 = vmatpush1.msra.mxu0 %v2800
      %2955 = vmatprep.subr.mxu0 0.0
      %2956 = vmatpush1.msra.mxu0 %v2949
      %2957 = vmatprep.subr.mxu0 0.0
      %2958 = vmatpush1.msra.mxu0 0.0
      %2959 = vmatprep.subr.mxu0 0.0
      %2960 = vmatpush1.msra.mxu0 0.0
      %2961 = vmatprep.subr.mxu0 0.0
      %2962 = vmatpush1.msra.mxu0 0.0
      %2963 = vmatprep.subr.mxu0 0.0
      %2964 = vmatpush1.msra.mxu0 0.0
      %2965 = vmatprep.subr.mxu0 0.0
      %2966 = vmatpush1.msra.mxu0 0.0
      %2967 = vmatprep.subr.mxu0 0.0
      %2968 = vmatpush1.msra.mxu0 0.0
      %2969 = vmatprep.subr.mxu0 0.0
      %2970 = vmatpush1.msra.mxu0 0.0
      %2971 = vmatprep.subr.mxu0 0.0
      %2972 = vmatpush1.msra.mxu0 0.0
      %2973 = vmatprep.subr.mxu0 0.0
      %2974 = vmatpush1.msra.mxu0 0.0
      %2975 = vmatprep.subr.mxu0 0.0
      %2976 = vmatpush1.msra.mxu0 0.0
      %2977 = vmatprep.subr.mxu0 0.0
      %2978 = vmatpush1.msra.mxu0 0.0
      %2979 = vmatprep.subr.mxu0 0.0
      %2980 = vmatpush1.msra.mxu0 0.0
      %2981 = vmatprep.subr.mxu0 0.0
      %2982 = vmatpush1.msra.mxu0 0.0
      %2983 = vmatprep.subr.mxu0 0.0
      %2984 = vmatpush1.msra.mxu0 0.0
      %2985 = vmatprep.subr.mxu0 0.0
      %2986 = vmatpush1.msra.mxu0 0.0
      %2987 = vmatprep.subr.mxu0 0.0
      %2988 = vmatpush1.msra.mxu0 0.0
      %2989 = vmatprep.subr.mxu0 0.0
      %2990 = vmatpush1.msra.mxu0 0.0
      %2991 = vmatprep.subr.mxu0 0.0
      %2992 = vmatpush1.msra.mxu0 0.0
      %2993 = vmatprep.subr.mxu0 0.0
      %2994 = vmatpush1.msra.mxu0 0.0
      %2995 = vmatprep.subr.mxu0 0.0
      %2996 = vmatpush1.msra.mxu0 0.0
      %2997 = vmatprep.subr.mxu0 0.0
      %2998 = vmatpush1.msra.mxu0 0.0
      %2999 = vmatprep.subr.mxu0 0.0
      %3000 = vmatpush1.msra.mxu0 0.0
      %3001 = vmatprep.subr.mxu0 0.0
      %3002 = vmatpush1.msra.mxu0 0.0
      %3003 = vmatprep.subr.mxu0 0.0
      %3004 = vmatpush1.msra.mxu0 0.0
      %3005 = vmatprep.subr.mxu0 0.0
      %3006 = vmatpush1.msra.mxu0 0.0
      %3007 = vmatprep.subr.mxu0 0.0
      %3008 = vmatpush1.msra.mxu0 0.0
      %3009 = vmatprep.subr.mxu0 0.0
      %3010 = vmatpush1.msra.mxu0 0.0
      %3011 = vmatprep.subr.mxu0 0.0
      %3012 = vmatpush1.msra.mxu0 0.0
      %3013 = vmatprep.subr.mxu0 0.0
      %3014 = vmatpush1.msra.mxu0 0.0
      %3015 = vmatprep.mubr.f32.mxu0 0.0
      %3016 = vmatmul.mubr.f32.gmra.mrb[0].mxu0 %v2940
      %v3017 = vpop.f32.mrb[0].mxu0
      %v3018 = vadd.f32 0.0, %v3017
      %v3019 = vpop.f32.mrb[0].mxu0
      %3020 = vmatprep.mubr.f32.mxu0 0.0
      %3021 = vmatmul.mubr.f32.gmra.mrb[0].mxu0 %v2943
      %v3022 = vpop.f32.mrb[0].mxu0
      %v3023 = vadd.f32 0.0, %v3022
      %v3024 = vpop.f32.mrb[0].mxu0
      %3025 = vmatprep.mubr.f32.mxu0 0.0
      %3026 = vmatmul.mubr.f32.gmra.mrb[0].mxu0 %v2946
      %v3027 = vpop.f32.mrb[0].mxu0
      %v3028 = vadd.f32 0.0, %v3027
      %v3029 = vpop.f32.mrb[0].mxu0
      %3030 = vdwg.mxu0
      %s3031 = scalar_lea.vmem %s1051, 16
      %v3032 = vld [vmem:[%s3031] sm:$0xff]
      %v3034 = vsel %vm1607, %v3018, 0
      %v3037 = vsel %vm1607, %v3023, 0
      %v3040 = vsel %vm1607, %v3028, 0
      %3042 = vmatprep.subr.mxu0 0.0
      %3043 = vmatpush1.msra.mxu0 %v3032
      %3044 = vmatprep.subr.mxu0 0.0
      %3045 = vmatpush1.msra.mxu0 0.0
      %3046 = vmatprep.subr.mxu0 0.0
      %3047 = vmatpush1.msra.mxu0 0.0
      %3048 = vmatprep.subr.mxu0 0.0
      %3049 = vmatpush1.msra.mxu0 0.0
      %3050 = vmatprep.subr.mxu0 0.0
      %3051 = vmatpush1.msra.mxu0 0.0
      %3052 = vmatprep.subr.mxu0 0.0
      %3053 = vmatpush1.msra.mxu0 0.0
      %3054 = vmatprep.subr.mxu0 0.0
      %3055 = vmatpush1.msra.mxu0 0.0
      %3056 = vmatprep.subr.mxu0 0.0
      %3057 = vmatpush1.msra.mxu0 0.0
      %3058 = vmatprep.subr.mxu0 0.0
      %3059 = vmatpush1.msra.mxu0 0.0
      %3060 = vmatprep.subr.mxu0 0.0
      %3061 = vmatpush1.msra.mxu0 0.0
      %3062 = vmatprep.subr.mxu0 0.0
      %3063 = vmatpush1.msra.mxu0 0.0
      %3064 = vmatprep.subr.mxu0 0.0
      %3065 = vmatpush1.msra.mxu0 0.0
      %3066 = vmatprep.subr.mxu0 0.0
      %3067 = vmatpush1.msra.mxu0 0.0
      %3068 = vmatprep.subr.mxu0 0.0
      %3069 = vmatpush1.msra.mxu0 0.0
      %3070 = vmatprep.subr.mxu0 0.0
      %3071 = vmatpush1.msra.mxu0 0.0
      %3072 = vmatprep.subr.mxu0 0.0
      %3073 = vmatpush1.msra.mxu0 0.0
      %3074 = vmatprep.subr.mxu0 0.0
      %3075 = vmatpush1.msra.mxu0 0.0
      %3076 = vmatprep.subr.mxu0 0.0
      %3077 = vmatpush1.msra.mxu0 0.0
      %3078 = vmatprep.subr.mxu0 0.0
      %3079 = vmatpush1.msra.mxu0 0.0
      %3080 = vmatprep.subr.mxu0 0.0
      %3081 = vmatpush1.msra.mxu0 0.0
      %3082 = vmatprep.subr.mxu0 0.0
      %3083 = vmatpush1.msra.mxu0 0.0
      %3084 = vmatprep.subr.mxu0 0.0
      %3085 = vmatpush1.msra.mxu0 0.0
      %3086 = vmatprep.subr.mxu0 0.0
      %3087 = vmatpush1.msra.mxu0 0.0
      %3088 = vmatprep.subr.mxu0 0.0
      %3089 = vmatpush1.msra.mxu0 0.0
      %3090 = vmatprep.subr.mxu0 0.0
      %3091 = vmatpush1.msra.mxu0 0.0
      %3092 = vmatprep.subr.mxu0 0.0
      %3093 = vmatpush1.msra.mxu0 0.0
      %3094 = vmatprep.subr.mxu0 0.0
      %3095 = vmatpush1.msra.mxu0 0.0
      %3096 = vmatprep.subr.mxu0 0.0
      %3097 = vmatpush1.msra.mxu0 0.0
      %3098 = vmatprep.subr.mxu0 0.0
      %3099 = vmatpush1.msra.mxu0 0.0
      %3100 = vmatprep.subr.mxu0 0.0
      %3101 = vmatpush1.msra.mxu0 0.0
      %3102 = vmatprep.subr.mxu0 0.0
      %3103 = vmatpush1.msra.mxu0 0.0
      %3104 = vmatprep.subr.mxu0 0.0
      %3105 = vmatpush1.msra.mxu0 0.0
      %3106 = vmatprep.mubr.f32.mxu0 0.0
      %3107 = vmatmul.mubr.f32.gmra.mrb[0].mxu0 %v3034
      %v3108 = vpop.f32.mrb[0].mxu0
      %v3109 = vadd.f32 0.0, %v3108
      %v3110 = vpop.f32.mrb[0].mxu0
      %3111 = vmatprep.mubr.f32.mxu0 0.0
      %3112 = vmatmul.mubr.f32.gmra.mrb[0].mxu0 %v3037
      %v3113 = vpop.f32.mrb[0].mxu0
      %v3114 = vadd.f32 0.0, %v3113
      %v3115 = vpop.f32.mrb[0].mxu0
      %3116 = vmatprep.mubr.f32.mxu0 0.0
      %3117 = vmatmul.mubr.f32.gmra.mrb[0].mxu0 %v3040
      %v3118 = vpop.f32.mrb[0].mxu0
      %v3119 = vadd.f32 0.0, %v3118
      %v3120 = vpop.f32.mrb[0].mxu0
      %3121 = vdwg.mxu0
      %v3122 = vadd.f32 %v2526, %v3109
      %v3123 = vadd.f32 %v2527, %v3114
      %v3124 = vadd.f32 %v2528, %v3119
      %s3125 = scalar_lea.vmem %s1024, 96
      %v3126 = vld [vmem:[%s3125] sm:$0xff]
      %v3127 = vld [vmem:[%s3125 + $0x8] sm:$0xff]
      %v3128 = vld [vmem:[%s3125 + $0x10] sm:$0xff]
      %v3129 = vld [vmem:[%s3125 + $0x18] sm:$0xff]
      %s3130 = scalar_lea.vmem %s1028, 3
      %v3131 = vld [vmem:[%s3130] sm:$0x1]
      %v3133 = vlaneseq
      %v3134 = vshrl.u32 %v3133, 7
      %v3135 = vsub.s32 0, %v3134
      %v3136 = vrot.slane %v3131, %v3135
      %3138 = vmatprep.subr.mxu0 0.0
      %3139 = vmatpush1.msra.mxu0 %v3126
      %3140 = vmatprep.subr.mxu0 0.0
      %3141 = vmatpush1.msra.mxu0 %v3127
      %3142 = vmatprep.subr.mxu0 0.0
      %3143 = vmatpush1.msra.mxu0 %v3128
      %3144 = vmatprep.subr.mxu0 0.0
      %3145 = vmatpush1.msra.mxu0 %v3129
      %3146 = vmatprep.subr.mxu0 0.0
      %3147 = vmatpush1.msra.mxu0 0.0
      %3148 = vmatprep.subr.mxu0 0.0
      %3149 = vmatpush1.msra.mxu0 0.0
      %3150 = vmatprep.subr.mxu0 0.0
      %3151 = vmatpush1.msra.mxu0 0.0
      %3152 = vmatprep.subr.mxu0 0.0
      %3153 = vmatpush1.msra.mxu0 0.0
      %3154 = vmatprep.subr.mxu0 0.0
      %3155 = vmatpush1.msra.mxu0 0.0
      %3156 = vmatprep.subr.mxu0 0.0
      %3157 = vmatpush1.msra.mxu0 0.0
      %3158 = vmatprep.subr.mxu0 0.0
      %3159 = vmatpush1.msra.mxu0 0.0
      %3160 = vmatprep.subr.mxu0 0.0
      %3161 = vmatpush1.msra.mxu0 0.0
      %3162 = vmatprep.subr.mxu0 0.0
      %3163 = vmatpush1.msra.mxu0 0.0
      %3164 = vmatprep.subr.mxu0 0.0
      %3165 = vmatpush1.msra.mxu0 0.0
      %3166 = vmatprep.subr.mxu0 0.0
      %3167 = vmatpush1.msra.mxu0 0.0
      %3168 = vmatprep.subr.mxu0 0.0
      %3169 = vmatpush1.msra.mxu0 0.0
      %3170 = vmatprep.subr.mxu0 0.0
      %3171 = vmatpush1.msra.mxu0 0.0
      %3172 = vmatprep.subr.mxu0 0.0
      %3173 = vmatpush1.msra.mxu0 0.0
      %3174 = vmatprep.subr.mxu0 0.0
      %3175 = vmatpush1.msra.mxu0 0.0
      %3176 = vmatprep.subr.mxu0 0.0
      %3177 = vmatpush1.msra.mxu0 0.0
      %3178 = vmatprep.subr.mxu0 0.0
      %3179 = vmatpush1.msra.mxu0 0.0
      %3180 = vmatprep.subr.mxu0 0.0
      %3181 = vmatpush1.msra.mxu0 0.0
      %3182 = vmatprep.subr.mxu0 0.0
      %3183 = vmatpush1.msra.mxu0 0.0
      %3184 = vmatprep.subr.mxu0 0.0
      %3185 = vmatpush1.msra.mxu0 0.0
      %3186 = vmatprep.subr.mxu0 0.0
      %3187 = vmatpush1.msra.mxu0 0.0
      %3188 = vmatprep.subr.mxu0 0.0
      %3189 = vmatpush1.msra.mxu0 0.0
      %3190 = vmatprep.subr.mxu0 0.0
      %3191 = vmatpush1.msra.mxu0 0.0
      %3192 = vmatprep.subr.mxu0 0.0
      %3193 = vmatpush1.msra.mxu0 0.0
      %3194 = vmatprep.subr.mxu0 0.0
      %3195 = vmatpush1.msra.mxu0 0.0
      %3196 = vmatprep.subr.mxu0 0.0
      %3197 = vmatpush1.msra.mxu0 0.0
      %3198 = vmatprep.subr.mxu0 0.0
      %3199 = vmatpush1.msra.mxu0 0.0
      %3200 = vmatprep.subr.mxu0 0.0
      %3201 = vmatpush1.msra.mxu0 0.0
      %3202 = vmatprep.mubr.f32.mxu0 0.0
      %3203 = vmatmul.mubr.f32.gmra.mrb[0].mxu0 %v1337
      %v3204 = vpop.f32.mrb[0].mxu0
      %v3205 = vadd.f32 %v3136, %v3204
      %v3206 = vpop.f32.mrb[0].mxu0
      %3207 = vmatprep.mubr.f32.mxu0 0.0
      %3208 = vmatmul.mubr.f32.gmra.mrb[0].mxu0 %v1340
      %v3209 = vpop.f32.mrb[0].mxu0
      %v3210 = vadd.f32 %v3136, %v3209
      %v3211 = vpop.f32.mrb[0].mxu0
      %3212 = vmatprep.mubr.f32.mxu0 0.0
      %3213 = vmatmul.mubr.f32.gmra.mrb[0].mxu0 %v1343
      %v3214 = vpop.f32.mrb[0].mxu0
      %v3215 = vadd.f32 %v3136, %v3214
      %v3216 = vpop.f32.mrb[0].mxu0
      %3217 = vdwg.mxu0
      %s3218 = scalar_lea.vmem %s1033, 96
      %v3219 = vld [vmem:[%s3218] sm:$0xff]
      %v3220 = vld [vmem:[%s3218 + $0x8] sm:$0xff]
      %v3221 = vld [vmem:[%s3218 + $0x10] sm:$0xff]
      %v3222 = vld [vmem:[%s3218 + $0x18] sm:$0xff]
      %s3223 = scalar_lea.vmem %s1037, 3
      %v3224 = vld [vmem:[%s3223] sm:$0x1]
      %v3226 = vlaneseq
      %v3227 = vshrl.u32 %v3226, 7
      %v3228 = vsub.s32 0, %v3227
      %v3229 = vrot.slane %v3224, %v3228
      %3231 = vmatprep.subr.mxu0 0.0
      %3232 = vmatpush1.msra.mxu0 %v3219
      %3233 = vmatprep.subr.mxu0 0.0
      %3234 = vmatpush1.msra.mxu0 %v3220
      %3235 = vmatprep.subr.mxu0 0.0
      %3236 = vmatpush1.msra.mxu0 %v3221
      %3237 = vmatprep.subr.mxu0 0.0
      %3238 = vmatpush1.msra.mxu0 %v3222
      %3239 = vmatprep.subr.mxu0 0.0
      %3240 = vmatpush1.msra.mxu0 0.0
      %3241 = vmatprep.subr.mxu0 0.0
      %3242 = vmatpush1.msra.mxu0 0.0
      %3243 = vmatprep.subr.mxu0 0.0
      %3244 = vmatpush1.msra.mxu0 0.0
      %3245 = vmatprep.subr.mxu0 0.0
      %3246 = vmatpush1.msra.mxu0 0.0
      %3247 = vmatprep.subr.mxu0 0.0
      %3248 = vmatpush1.msra.mxu0 0.0
      %3249 = vmatprep.subr.mxu0 0.0
      %3250 = vmatpush1.msra.mxu0 0.0
      %3251 = vmatprep.subr.mxu0 0.0
      %3252 = vmatpush1.msra.mxu0 0.0
      %3253 = vmatprep.subr.mxu0 0.0
      %3254 = vmatpush1.msra.mxu0 0.0
      %3255 = vmatprep.subr.mxu0 0.0
      %3256 = vmatpush1.msra.mxu0 0.0
      %3257 = vmatprep.subr.mxu0 0.0
      %3258 = vmatpush1.msra.mxu0 0.0
      %3259 = vmatprep.subr.mxu0 0.0
      %3260 = vmatpush1.msra.mxu0 0.0
      %3261 = vmatprep.subr.mxu0 0.0
      %3262 = vmatpush1.msra.mxu0 0.0
      %3263 = vmatprep.subr.mxu0 0.0
      %3264 = vmatpush1.msra.mxu0 0.0
      %3265 = vmatprep.subr.mxu0 0.0
      %3266 = vmatpush1.msra.mxu0 0.0
      %3267 = vmatprep.subr.mxu0 0.0
      %3268 = vmatpush1.msra.mxu0 0.0
      %3269 = vmatprep.subr.mxu0 0.0
      %3270 = vmatpush1.msra.mxu0 0.0
      %3271 = vmatprep.subr.mxu0 0.0
      %3272 = vmatpush1.msra.mxu0 0.0
      %3273 = vmatprep.subr.mxu0 0.0
      %3274 = vmatpush1.msra.mxu0 0.0
      %3275 = vmatprep.subr.mxu0 0.0
      %3276 = vmatpush1.msra.mxu0 0.0
      %3277 = vmatprep.subr.mxu0 0.0
      %3278 = vmatpush1.msra.mxu0 0.0
      %3279 = vmatprep.subr.mxu0 0.0
      %3280 = vmatpush1.msra.mxu0 0.0
      %3281 = vmatprep.subr.mxu0 0.0
      %3282 = vmatpush1.msra.mxu0 0.0
      %3283 = vmatprep.subr.mxu0 0.0
      %3284 = vmatpush1.msra.mxu0 0.0
      %3285 = vmatprep.subr.mxu0 0.0
      %3286 = vmatpush1.msra.mxu0 0.0
      %3287 = vmatprep.subr.mxu0 0.0
      %3288 = vmatpush1.msra.mxu0 0.0
      %3289 = vmatprep.subr.mxu0 0.0
      %3290 = vmatpush1.msra.mxu0 0.0
      %3291 = vmatprep.subr.mxu0 0.0
      %3292 = vmatpush1.msra.mxu0 0.0
      %3293 = vmatprep.subr.mxu0 0.0
      %3294 = vmatpush1.msra.mxu0 0.0
      %3295 = vmatprep.mubr.f32.mxu0 0.0
      %3296 = vmatmul.mubr.f32.gmra.mrb[0].mxu0 %v1337
      %v3297 = vpop.f32.mrb[0].mxu0
      %v3298 = vadd.f32 %v3229, %v3297
      %v3299 = vpop.f32.mrb[0].mxu0
      %3300 = vmatprep.mubr.f32.mxu0 0.0
      %3301 = vmatmul.mubr.f32.gmra.mrb[0].mxu0 %v1340
      %v3302 = vpop.f32.mrb[0].mxu0
      %v3303 = vadd.f32 %v3229, %v3302
      %v3304 = vpop.f32.mrb[0].mxu0
      %3305 = vmatprep.mubr.f32.mxu0 0.0
      %3306 = vmatmul.mubr.f32.gmra.mrb[0].mxu0 %v1343
      %v3307 = vpop.f32.mrb[0].mxu0
      %v3308 = vadd.f32 %v3229, %v3307
      %v3309 = vpop.f32.mrb[0].mxu0
      %3310 = vdwg.mxu0
      %s3311 = scalar_lea.vmem %s1042, 96
      %v3312 = vld [vmem:[%s3311] sm:$0xff]
      %v3313 = vld [vmem:[%s3311 + $0x8] sm:$0xff]
      %v3314 = vld [vmem:[%s3311 + $0x10] sm:$0xff]
      %v3315 = vld [vmem:[%s3311 + $0x18] sm:$0xff]
      %s3316 = scalar_lea.vmem %s1046, 3
      %v3317 = vld [vmem:[%s3316] sm:$0x1]
      %v3319 = vlaneseq
      %v3320 = vshrl.u32 %v3319, 7
      %v3321 = vsub.s32 0, %v3320
      %v3322 = vrot.slane %v3317, %v3321
      %3324 = vmatprep.subr.mxu0 0.0
      %3325 = vmatpush1.msra.mxu0 %v3312
      %3326 = vmatprep.subr.mxu0 0.0
      %3327 = vmatpush1.msra.mxu0 %v3313
      %3328 = vmatprep.subr.mxu0 0.0
      %3329 = vmatpush1.msra.mxu0 %v3314
      %3330 = vmatprep.subr.mxu0 0.0
      %3331 = vmatpush1.msra.mxu0 %v3315
      %3332 = vmatprep.subr.mxu0 0.0
      %3333 = vmatpush1.msra.mxu0 0.0
      %3334 = vmatprep.subr.mxu0 0.0
      %3335 = vmatpush1.msra.mxu0 0.0
      %3336 = vmatprep.subr.mxu0 0.0
      %3337 = vmatpush1.msra.mxu0 0.0
      %3338 = vmatprep.subr.mxu0 0.0
      %3339 = vmatpush1.msra.mxu0 0.0
      %3340 = vmatprep.subr.mxu0 0.0
      %3341 = vmatpush1.msra.mxu0 0.0
      %3342 = vmatprep.subr.mxu0 0.0
      %3343 = vmatpush1.msra.mxu0 0.0
      %3344 = vmatprep.subr.mxu0 0.0
      %3345 = vmatpush1.msra.mxu0 0.0
      %3346 = vmatprep.subr.mxu0 0.0
      %3347 = vmatpush1.msra.mxu0 0.0
      %3348 = vmatprep.subr.mxu0 0.0
      %3349 = vmatpush1.msra.mxu0 0.0
      %3350 = vmatprep.subr.mxu0 0.0
      %3351 = vmatpush1.msra.mxu0 0.0
      %3352 = vmatprep.subr.mxu0 0.0
      %3353 = vmatpush1.msra.mxu0 0.0
      %3354 = vmatprep.subr.mxu0 0.0
      %3355 = vmatpush1.msra.mxu0 0.0
      %3356 = vmatprep.subr.mxu0 0.0
      %3357 = vmatpush1.msra.mxu0 0.0
      %3358 = vmatprep.subr.mxu0 0.0
      %3359 = vmatpush1.msra.mxu0 0.0
      %3360 = vmatprep.subr.mxu0 0.0
      %3361 = vmatpush1.msra.mxu0 0.0
      %3362 = vmatprep.subr.mxu0 0.0
      %3363 = vmatpush1.msra.mxu0 0.0
      %3364 = vmatprep.subr.mxu0 0.0
      %3365 = vmatpush1.msra.mxu0 0.0
      %3366 = vmatprep.subr.mxu0 0.0
      %3367 = vmatpush1.msra.mxu0 0.0
      %3368 = vmatprep.subr.mxu0 0.0
      %3369 = vmatpush1.msra.mxu0 0.0
      %3370 = vmatprep.subr.mxu0 0.0
      %3371 = vmatpush1.msra.mxu0 0.0
      %3372 = vmatprep.subr.mxu0 0.0
      %3373 = vmatpush1.msra.mxu0 0.0
      %3374 = vmatprep.subr.mxu0 0.0
      %3375 = vmatpush1.msra.mxu0 0.0
      %3376 = vmatprep.subr.mxu0 0.0
      %3377 = vmatpush1.msra.mxu0 0.0
      %3378 = vmatprep.subr.mxu0 0.0
      %3379 = vmatpush1.msra.mxu0 0.0
      %3380 = vmatprep.subr.mxu0 0.0
      %3381 = vmatpush1.msra.mxu0 0.0
      %3382 = vmatprep.subr.mxu0 0.0
      %3383 = vmatpush1.msra.mxu0 0.0
      %3384 = vmatprep.subr.mxu0 0.0
      %3385 = vmatpush1.msra.mxu0 0.0
      %3386 = vmatprep.subr.mxu0 0.0
      %3387 = vmatpush1.msra.mxu0 0.0
      %3388 = vmatprep.mubr.f32.mxu0 0.0
      %3389 = vmatmul.mubr.f32.gmra.mrb[0].mxu0 %v1337
      %v3390 = vpop.f32.mrb[0].mxu0
      %v3391 = vadd.f32 %v3322, %v3390
      %v3392 = vpop.f32.mrb[0].mxu0
      %3393 = vmatprep.mubr.f32.mxu0 0.0
      %3394 = vmatmul.mubr.f32.gmra.mrb[0].mxu0 %v1340
      %v3395 = vpop.f32.mrb[0].mxu0
      %v3396 = vadd.f32 %v3322, %v3395
      %v3397 = vpop.f32.mrb[0].mxu0
      %3398 = vmatprep.mubr.f32.mxu0 0.0
      %3399 = vmatmul.mubr.f32.gmra.mrb[0].mxu0 %v1343
      %v3400 = vpop.f32.mrb[0].mxu0
      %v3401 = vadd.f32 %v3322, %v3400
      %v3402 = vpop.f32.mrb[0].mxu0
      %3403 = vdwg.mxu0
      %v3405 = vsel %vm1607, %v3205, 0
      %v3408 = vsel %vm1607, %v3210, 0
      %v3411 = vsel %vm1607, %v3215, 0
      %v3414 = vsel %vm1607, %v3298, 0
      %v3417 = vsel %vm1607, %v3303, 0
      %v3420 = vsel %vm1607, %v3308, 0
      %3422 = vmatprep.subr.mxu0 0.0
      %3423 = vmatpush1.xpose.msra.mxu0 %v3414
      %3424 = vmatprep.subr.mxu0 0.0
      %3425 = vmatpush1.xpose.msra.mxu0 %v3417
      %3426 = vmatprep.subr.mxu0 0.0
      %3427 = vmatpush1.xpose.msra.mxu0 %v3420
      %3428 = vmatprep.subr.mxu0 0.0
      %3429 = vmatpush1.xpose.msra.mxu0 0.0
      %3430 = vmatprep.subr.mxu0 0.0
      %3431 = vmatpush1.xpose.msra.mxu0 0.0
      %3432 = vmatprep.subr.mxu0 0.0
      %3433 = vmatpush1.xpose.msra.mxu0 0.0
      %3434 = vmatprep.subr.mxu0 0.0
      %3435 = vmatpush1.xpose.msra.mxu0 0.0
      %3436 = vmatprep.subr.mxu0 0.0
      %3437 = vmatpush1.xpose.msra.mxu0 0.0
      %3438 = vmatprep.subr.mxu0 0.0
      %3439 = vmatpush1.xpose.msra.mxu0 0.0
      %3440 = vmatprep.subr.mxu0 0.0
      %3441 = vmatpush1.xpose.msra.mxu0 0.0
      %3442 = vmatprep.subr.mxu0 0.0
      %3443 = vmatpush1.xpose.msra.mxu0 0.0
      %3444 = vmatprep.subr.mxu0 0.0
      %3445 = vmatpush1.xpose.msra.mxu0 0.0
      %3446 = vmatprep.subr.mxu0 0.0
      %3447 = vmatpush1.xpose.msra.mxu0 0.0
      %3448 = vmatprep.subr.mxu0 0.0
      %3449 = vmatpush1.xpose.msra.mxu0 0.0
      %3450 = vmatprep.subr.mxu0 0.0
      %3451 = vmatpush1.xpose.msra.mxu0 0.0
      %3452 = vmatprep.subr.mxu0 0.0
      %3453 = vmatpush1.xpose.msra.mxu0 0.0
      %3454 = vmatprep.subr.mxu0 0.0
      %3455 = vmatpush1.xpose.msra.mxu0 0.0
      %3456 = vmatprep.subr.mxu0 0.0
      %3457 = vmatpush1.xpose.msra.mxu0 0.0
      %3458 = vmatprep.subr.mxu0 0.0
      %3459 = vmatpush1.xpose.msra.mxu0 0.0
      %3460 = vmatprep.subr.mxu0 0.0
      %3461 = vmatpush1.xpose.msra.mxu0 0.0
      %3462 = vmatprep.subr.mxu0 0.0
      %3463 = vmatpush1.xpose.msra.mxu0 0.0
      %3464 = vmatprep.subr.mxu0 0.0
      %3465 = vmatpush1.xpose.msra.mxu0 0.0
      %3466 = vmatprep.subr.mxu0 0.0
      %3467 = vmatpush1.xpose.msra.mxu0 0.0
      %3468 = vmatprep.subr.mxu0 0.0
      %3469 = vmatpush1.xpose.msra.mxu0 0.0
      %3470 = vmatprep.subr.mxu0 0.0
      %3471 = vmatpush1.xpose.msra.mxu0 0.0
      %3472 = vmatprep.subr.mxu0 0.0
      %3473 = vmatpush1.xpose.msra.mxu0 0.0
      %3474 = vmatprep.subr.mxu0 0.0
      %3475 = vmatpush1.xpose.msra.mxu0 0.0
      %3476 = vmatprep.subr.mxu0 0.0
      %3477 = vmatpush1.xpose.msra.mxu0 0.0
      %3478 = vmatprep.subr.mxu0 0.0
      %3479 = vmatpush1.xpose.msra.mxu0 0.0
      %3480 = vmatprep.subr.mxu0 0.0
      %3481 = vmatpush1.xpose.msra.mxu0 0.0
      %3482 = vmatprep.subr.mxu0 0.0
      %3483 = vmatpush1.xpose.msra.mxu0 0.0
      %3484 = vmatprep.subr.mxu0 0.0
      %3485 = vmatpush1.xpose.msra.mxu0 0.0
      %3486 = vmatprep.mubr.f32.mxu0 0.0
      %3487 = vmatmul.mubr.f32.gmra.mrb[0].mxu0 %v3405
      %v3488 = vpop.f32.mrb[0].mxu0
      %v3489 = vadd.f32 0.0, %v3488
      %v3490 = vpop.f32.mrb[0].mxu0
      %3491 = vmatprep.mubr.f32.mxu0 0.0
      %3492 = vmatmul.mubr.f32.gmra.mrb[0].mxu0 %v3408
      %v3493 = vpop.f32.mrb[0].mxu0
      %v3494 = vadd.f32 0.0, %v3493
      %v3495 = vpop.f32.mrb[0].mxu0
      %3496 = vmatprep.mubr.f32.mxu0 0.0
      %3497 = vmatmul.mubr.f32.gmra.mrb[0].mxu0 %v3411
      %v3498 = vpop.f32.mrb[0].mxu0
      %v3499 = vadd.f32 0.0, %v3498
      %v3500 = vpop.f32.mrb[0].mxu0
      %3501 = vdwg.mxu0
      %v3502 = vsel %vm1706, %v3489, -inf
      %3503 = vmax.xlane.f32.xlu0 %v3502
      %v3504 = vpop.xlane.xlu0 %3503
      %v3505 = vsel %vm1706, %v3494, -inf
      %3506 = vmax.xlane.f32.xlu0 %v3505
      %v3507 = vpop.xlane.xlu0 %3506
      %v3508 = vsel %vm1713, %v3499, -inf
      %3509 = vmax.xlane.f32.xlu0 %v3508
      %v3510 = vpop.xlane.xlu0 %3509
      %v3511 = vsub.f32 %v3489, %v3504
      %v3512 = vsub.f32 %v3494, %v3507
      %v3513 = vsub.f32 %v3499, %v3510
      %v3514 = vmul.f32 %v3511, 1.442695
      %v3515 = vpow.pop %v3514
      %v3516 = vmul.f32 %v3512, 1.442695
      %v3517 = vpow.pop %v3516
      %v3518 = vmul.f32 %v3513, 1.442695
      %v3519 = vpow.pop %v3518
      %v3520 = vsel %vm1706, %v3515, 0.0
      %3521 = vadd.xlane.f32.xlu0 %v3520
      %v3522 = vpop.xlane.xlu0 %3521
      %v3523 = vsel %vm1706, %v3517, 0.0
      %3524 = vadd.xlane.f32.xlu0 %v3523
      %v3525 = vpop.xlane.xlu0 %3524
      %v3526 = vsel %vm1713, %v3519, 0.0
      %3527 = vadd.xlane.f32.xlu0 %v3526
      %v3528 = vpop.xlane.xlu0 %3527
      %v3529 = vrcp.pop %v3522
      %v3530 = vrcp.pop %v3525
      %v3531 = vrcp.pop %v3528
      %v3532 = vmul.f32 %v3515, %v3529
      %v3533 = vmul.f32 %v3517, %v3530
      %v3534 = vmul.f32 %v3519, %v3531
      %v3536 = vsel %vm1706, %v3532, 0
      %v3539 = vsel %vm1706, %v3533, 0
      %v3542 = vsel %vm1706, %v3534, 0
      %v3545 = vsel %vm1750, %v3401, 0
      %3547 = vmatprep.subr.mxu0 0.0
      %3548 = vmatpush1.msra.mxu0 %v3391
      %3549 = vmatprep.subr.mxu0 0.0
      %3550 = vmatpush1.msra.mxu0 %v3396
      %3551 = vmatprep.subr.mxu0 0.0
      %3552 = vmatpush1.msra.mxu0 %v3545
      %3553 = vmatprep.subr.mxu0 0.0
      %3554 = vmatpush1.msra.mxu0 0.0
      %3555 = vmatprep.subr.mxu0 0.0
      %3556 = vmatpush1.msra.mxu0 0.0
      %3557 = vmatprep.subr.mxu0 0.0
      %3558 = vmatpush1.msra.mxu0 0.0
      %3559 = vmatprep.subr.mxu0 0.0
      %3560 = vmatpush1.msra.mxu0 0.0
      %3561 = vmatprep.subr.mxu0 0.0
      %3562 = vmatpush1.msra.mxu0 0.0
      %3563 = vmatprep.subr.mxu0 0.0
      %3564 = vmatpush1.msra.mxu0 0.0
      %3565 = vmatprep.subr.mxu0 0.0
      %3566 = vmatpush1.msra.mxu0 0.0
      %3567 = vmatprep.subr.mxu0 0.0
      %3568 = vmatpush1.msra.mxu0 0.0
      %3569 = vmatprep.subr.mxu0 0.0
      %3570 = vmatpush1.msra.mxu0 0.0
      %3571 = vmatprep.subr.mxu0 0.0
      %3572 = vmatpush1.msra.mxu0 0.0
      %3573 = vmatprep.subr.mxu0 0.0
      %3574 = vmatpush1.msra.mxu0 0.0
      %3575 = vmatprep.subr.mxu0 0.0
      %3576 = vmatpush1.msra.mxu0 0.0
      %3577 = vmatprep.subr.mxu0 0.0
      %3578 = vmatpush1.msra.mxu0 0.0
      %3579 = vmatprep.subr.mxu0 0.0
      %3580 = vmatpush1.msra.mxu0 0.0
      %3581 = vmatprep.subr.mxu0 0.0
      %3582 = vmatpush1.msra.mxu0 0.0
      %3583 = vmatprep.subr.mxu0 0.0
      %3584 = vmatpush1.msra.mxu0 0.0
      %3585 = vmatprep.subr.mxu0 0.0
      %3586 = vmatpush1.msra.mxu0 0.0
      %3587 = vmatprep.subr.mxu0 0.0
      %3588 = vmatpush1.msra.mxu0 0.0
      %3589 = vmatprep.subr.mxu0 0.0
      %3590 = vmatpush1.msra.mxu0 0.0
      %3591 = vmatprep.subr.mxu0 0.0
      %3592 = vmatpush1.msra.mxu0 0.0
      %3593 = vmatprep.subr.mxu0 0.0
      %3594 = vmatpush1.msra.mxu0 0.0
      %3595 = vmatprep.subr.mxu0 0.0
      %3596 = vmatpush1.msra.mxu0 0.0
      %3597 = vmatprep.subr.mxu0 0.0
      %3598 = vmatpush1.msra.mxu0 0.0
      %3599 = vmatprep.subr.mxu0 0.0
      %3600 = vmatpush1.msra.mxu0 0.0
      %3601 = vmatprep.subr.mxu0 0.0
      %3602 = vmatpush1.msra.mxu0 0.0
      %3603 = vmatprep.subr.mxu0 0.0
      %3604 = vmatpush1.msra.mxu0 0.0
      %3605 = vmatprep.subr.mxu0 0.0
      %3606 = vmatpush1.msra.mxu0 0.0
      %3607 = vmatprep.subr.mxu0 0.0
      %3608 = vmatpush1.msra.mxu0 0.0
      %3609 = vmatprep.subr.mxu0 0.0
      %3610 = vmatpush1.msra.mxu0 0.0
      %3611 = vmatprep.mubr.f32.mxu0 0.0
      %3612 = vmatmul.mubr.f32.gmra.mrb[0].mxu0 %v3536
      %v3613 = vpop.f32.mrb[0].mxu0
      %v3614 = vadd.f32 0.0, %v3613
      %v3615 = vpop.f32.mrb[0].mxu0
      %3616 = vmatprep.mubr.f32.mxu0 0.0
      %3617 = vmatmul.mubr.f32.gmra.mrb[0].mxu0 %v3539
      %v3618 = vpop.f32.mrb[0].mxu0
      %v3619 = vadd.f32 0.0, %v3618
      %v3620 = vpop.f32.mrb[0].mxu0
      %3621 = vmatprep.mubr.f32.mxu0 0.0
      %3622 = vmatmul.mubr.f32.gmra.mrb[0].mxu0 %v3542
      %v3623 = vpop.f32.mrb[0].mxu0
      %v3624 = vadd.f32 0.0, %v3623
      %v3625 = vpop.f32.mrb[0].mxu0
      %3626 = vdwg.mxu0
      %s3627 = scalar_lea.vmem %s1051, 24
      %v3628 = vld [vmem:[%s3627] sm:$0xff]
      %v3630 = vsel %vm1607, %v3614, 0
      %v3633 = vsel %vm1607, %v3619, 0
      %v3636 = vsel %vm1607, %v3624, 0
      %3638 = vmatprep.subr.mxu0 0.0
      %3639 = vmatpush1.msra.mxu0 %v3628
      %3640 = vmatprep.subr.mxu0 0.0
      %3641 = vmatpush1.msra.mxu0 0.0
      %3642 = vmatprep.subr.mxu0 0.0
      %3643 = vmatpush1.msra.mxu0 0.0
      %3644 = vmatprep.subr.mxu0 0.0
      %3645 = vmatpush1.msra.mxu0 0.0
      %3646 = vmatprep.subr.mxu0 0.0
      %3647 = vmatpush1.msra.mxu0 0.0
      %3648 = vmatprep.subr.mxu0 0.0
      %3649 = vmatpush1.msra.mxu0 0.0
      %3650 = vmatprep.subr.mxu0 0.0
      %3651 = vmatpush1.msra.mxu0 0.0
      %3652 = vmatprep.subr.mxu0 0.0
      %3653 = vmatpush1.msra.mxu0 0.0
      %3654 = vmatprep.subr.mxu0 0.0
      %3655 = vmatpush1.msra.mxu0 0.0
      %3656 = vmatprep.subr.mxu0 0.0
      %3657 = vmatpush1.msra.mxu0 0.0
      %3658 = vmatprep.subr.mxu0 0.0
      %3659 = vmatpush1.msra.mxu0 0.0
      %3660 = vmatprep.subr.mxu0 0.0
      %3661 = vmatpush1.msra.mxu0 0.0
      %3662 = vmatprep.subr.mxu0 0.0
      %3663 = vmatpush1.msra.mxu0 0.0
      %3664 = vmatprep.subr.mxu0 0.0
      %3665 = vmatpush1.msra.mxu0 0.0
      %3666 = vmatprep.subr.mxu0 0.0
      %3667 = vmatpush1.msra.mxu0 0.0
      %3668 = vmatprep.subr.mxu0 0.0
      %3669 = vmatpush1.msra.mxu0 0.0
      %3670 = vmatprep.subr.mxu0 0.0
      %3671 = vmatpush1.msra.mxu0 0.0
      %3672 = vmatprep.subr.mxu0 0.0
      %3673 = vmatpush1.msra.mxu0 0.0
      %3674 = vmatprep.subr.mxu0 0.0
      %3675 = vmatpush1.msra.mxu0 0.0
      %3676 = vmatprep.subr.mxu0 0.0
      %3677 = vmatpush1.msra.mxu0 0.0
      %3678 = vmatprep.subr.mxu0 0.0
      %3679 = vmatpush1.msra.mxu0 0.0
      %3680 = vmatprep.subr.mxu0 0.0
      %3681 = vmatpush1.msra.mxu0 0.0
      %3682 = vmatprep.subr.mxu0 0.0
      %3683 = vmatpush1.msra.mxu0 0.0
      %3684 = vmatprep.subr.mxu0 0.0
      %3685 = vmatpush1.msra.mxu0 0.0
      %3686 = vmatprep.subr.mxu0 0.0
      %3687 = vmatpush1.msra.mxu0 0.0
      %3688 = vmatprep.subr.mxu0 0.0
      %3689 = vmatpush1.msra.mxu0 0.0
      %3690 = vmatprep.subr.mxu0 0.0
      %3691 = vmatpush1.msra.mxu0 0.0
      %3692 = vmatprep.subr.mxu0 0.0
      %3693 = vmatpush1.msra.mxu0 0.0
      %3694 = vmatprep.subr.mxu0 0.0
      %3695 = vmatpush1.msra.mxu0 0.0
      %3696 = vmatprep.subr.mxu0 0.0
      %3697 = vmatpush1.msra.mxu0 0.0
      %3698 = vmatprep.subr.mxu0 0.0
      %3699 = vmatpush1.msra.mxu0 0.0
      %3700 = vmatprep.subr.mxu0 0.0
      %3701 = vmatpush1.msra.mxu0 0.0
      %3702 = vmatprep.mubr.f32.mxu0 0.0
      %3703 = vmatmul.mubr.f32.gmra.mrb[0].mxu0 %v3630
      %v3704 = vpop.f32.mrb[0].mxu0
      %v3705 = vadd.f32 0.0, %v3704
      %v3706 = vpop.f32.mrb[0].mxu0
      %3707 = vmatprep.mubr.f32.mxu0 0.0
      %3708 = vmatmul.mubr.f32.gmra.mrb[0].mxu0 %v3633
      %v3709 = vpop.f32.mrb[0].mxu0
      %v3710 = vadd.f32 0.0, %v3709
      %v3711 = vpop.f32.mrb[0].mxu0
      %3712 = vmatprep.mubr.f32.mxu0 0.0
      %3713 = vmatmul.mubr.f32.gmra.mrb[0].mxu0 %v3636
      %v3714 = vpop.f32.mrb[0].mxu0
      %v3715 = vadd.f32 0.0, %v3714
      %v3716 = vpop.f32.mrb[0].mxu0
      %3717 = vdwg.mxu0
      %v3718 = vadd.f32 %v3122, %v3705
      %v3719 = vadd.f32 %v3123, %v3710
      %v3720 = vadd.f32 %v3124, %v3715
      %v3721 = vadd.f32 %v1320, %v3718
      %v3722 = vadd.f32 %v1321, %v3719
      %v3723 = vadd.f32 %v1322, %v3720
      %v3724 = vld [vmem:[%s1059] sm:$0xff]
      %v3725 = vld [vmem:[%s1059 + $0x8] sm:$0xff]
      %v3726 = vld [vmem:[%s1059 + $0x10] sm:$0x1]
      %v3727 = vld [vmem:[%s1064] sm:$0xff]
      %v3728 = vld [vmem:[%s1064 + $0x8] sm:$0xff]
      %v3729 = vld [vmem:[%s1064 + $0x10] sm:$0x1]
      %v3730 = vsel %vm1335, %v3721, 0.0
      %v3731 = vsel %vm1335, %v3722, 0.0
      %v3732 = vadd.f32 %v3730, %v3731
      %vm3733 = vcmask 253952
      %v3734 = vsel %vm3733, %v3723, 0.0
      %v3735 = vadd.f32 %v3732, %v3734
      %3736 = vadd.xlane.f32.xlu0 %v3735
      %v3737 = vpop.xlane.xlu0 %3736
      %v3738 = vrot.slane %v3737, 4
      %v3739 = vadd.f32 %v3737, %v3738
      %v3740 = vrot.slane %v3739, 2
      %v3741 = vadd.f32 %v3739, %v3740
      %v3742 = vrot.slane %v3741, 1
      %v3743 = vadd.f32 %v3741, %v3742
      %s3744 = vtos %v3743
      %v3745 = vrcp.pop 544.0
      %s3746 = vtos %v3745
      %s3747 = smul.f32 %s3744, %s3746
      %v3748 = vstv %s3747
      %v3749 = vsub.f32 %v3721, %v3748
      %v3750 = vsub.f32 %v3722, %v3748
      %v3751 = vsub.f32 %v3723, %v3748
      %v3752 = vmul.f32 %v3749, %v3749
      %v3753 = vmul.f32 %v3750, %v3750
      %v3754 = vmul.f32 %v3751, %v3751
      %v3755 = vsel %vm1335, %v3752, 0.0
      %v3756 = vsel %vm1335, %v3753, 0.0
      %v3757 = vadd.f32 %v3755, %v3756
      %v3758 = vsel %vm3733, %v3754, 0.0
      %v3759 = vadd.f32 %v3757, %v3758
      %3760 = vadd.xlane.f32.xlu0 %v3759
      %v3761 = vpop.xlane.xlu0 %3760
      %v3762 = vrot.slane %v3761, 4
      %v3763 = vadd.f32 %v3761, %v3762
      %v3764 = vrot.slane %v3763, 2
      %v3765 = vadd.f32 %v3763, %v3764
      %v3766 = vrot.slane %v3765, 1
      %v3767 = vadd.f32 %v3765, %v3766
      %s3768 = vtos %v3767
      %v3769 = vrcp.pop 544.0
      %s3770 = vtos %v3769
      %s3771 = smul.f32 %s3768, %s3770
      %s3772 = sadd.f32 %s3771, 1e-05
      %v3773 = vstv %s3772
      %v3774 = vrsqrt.pop %v3773
      %s3775 = vtos %v3774
      %v3776 = vstv %s3775
      %v3777 = vmul.f32 %v3749, %v3776
      %v3778 = vmul.f32 %v3750, %v3776
      %v3779 = vmul.f32 %v3751, %v3776
      %3781 = vset.pattern.permute.xlu0 0
      %3782 = vperm.xlu0 %3781, %v3724
      %v3783 = vpop.permute.xlu0 %3782
      %3786 = vset.pattern.permute.xlu0 0
      %3787 = vperm.xlu0 %3786, %v3725
      %v3788 = vpop.permute.xlu0 %3787
      %3791 = vset.pattern.permute.xlu0 0
      %3792 = vperm.xlu0 %3791, %v3726
      %v3793 = vpop.permute.xlu0 %3792
      %v3795 = vmul.f32 %v3777, %v3783
      %v3796 = vmul.f32 %v3778, %v3788
      %v3797 = vmul.f32 %v3779, %v3793
      %3799 = vset.pattern.permute.xlu0 0
      %3800 = vperm.xlu0 %3799, %v3727
      %v3801 = vpop.permute.xlu0 %3800
      %3804 = vset.pattern.permute.xlu0 0
      %3805 = vperm.xlu0 %3804, %v3728
      %v3806 = vpop.permute.xlu0 %3805
      %3809 = vset.pattern.permute.xlu0 0
      %3810 = vperm.xlu0 %3809, %v3729
      %v3811 = vpop.permute.xlu0 %3810
      %v3813 = vadd.f32 %v3795, %v3801
      %v3814 = vadd.f32 %v3796, %v3806
      %v3815 = vadd.f32 %v3797, %v3811
      %v3816 = vld [vmem:[%s1069] sm:$0xff]
      %v3817 = vld [vmem:[%s1069 + $0x8] sm:$0xff]
      %v3818 = vld [vmem:[%s1069 + $0x10] sm:$0xff]
      %v3819 = vld [vmem:[%s1069 + $0x18] sm:$0xff]
      %v3820 = vld [vmem:[%s1072] sm:$0x1]
      %v3822 = vlaneseq
      %v3823 = vshrl.u32 %v3822, 7
      %v3824 = vsub.s32 0, %v3823
      %v3825 = vrot.slane %v3820, %v3824
      %v3828 = vsel %vm1335, %v3813, 0
      %v3831 = vsel %vm1335, %v3814, 0
      %v3834 = vsel %vm1335, %v3815, 0
      %3836 = vmatprep.subr.mxu0 0.0
      %3837 = vmatpush1.msra.mxu0 %v3816
      %3838 = vmatprep.subr.mxu0 0.0
      %3839 = vmatpush1.msra.mxu0 %v3817
      %3840 = vmatprep.subr.mxu0 0.0
      %3841 = vmatpush1.msra.mxu0 %v3818
      %3842 = vmatprep.subr.mxu0 0.0
      %3843 = vmatpush1.msra.mxu0 %v3819
      %3844 = vmatprep.subr.mxu0 0.0
      %3845 = vmatpush1.msra.mxu0 0.0
      %3846 = vmatprep.subr.mxu0 0.0
      %3847 = vmatpush1.msra.mxu0 0.0
      %3848 = vmatprep.subr.mxu0 0.0
      %3849 = vmatpush1.msra.mxu0 0.0
      %3850 = vmatprep.subr.mxu0 0.0
      %3851 = vmatpush1.msra.mxu0 0.0
      %3852 = vmatprep.subr.mxu0 0.0
      %3853 = vmatpush1.msra.mxu0 0.0
      %3854 = vmatprep.subr.mxu0 0.0
      %3855 = vmatpush1.msra.mxu0 0.0
      %3856 = vmatprep.subr.mxu0 0.0
      %3857 = vmatpush1.msra.mxu0 0.0
      %3858 = vmatprep.subr.mxu0 0.0
      %3859 = vmatpush1.msra.mxu0 0.0
      %3860 = vmatprep.subr.mxu0 0.0
      %3861 = vmatpush1.msra.mxu0 0.0
      %3862 = vmatprep.subr.mxu0 0.0
      %3863 = vmatpush1.msra.mxu0 0.0
      %3864 = vmatprep.subr.mxu0 0.0
      %3865 = vmatpush1.msra.mxu0 0.0
      %3866 = vmatprep.subr.mxu0 0.0
      %3867 = vmatpush1.msra.mxu0 0.0
      %3868 = vmatprep.subr.mxu0 0.0
      %3869 = vmatpush1.msra.mxu0 0.0
      %3870 = vmatprep.subr.mxu0 0.0
      %3871 = vmatpush1.msra.mxu0 0.0
      %3872 = vmatprep.subr.mxu0 0.0
      %3873 = vmatpush1.msra.mxu0 0.0
      %3874 = vmatprep.subr.mxu0 0.0
      %3875 = vmatpush1.msra.mxu0 0.0
      %3876 = vmatprep.subr.mxu0 0.0
      %3877 = vmatpush1.msra.mxu0 0.0
      %3878 = vmatprep.subr.mxu0 0.0
      %3879 = vmatpush1.msra.mxu0 0.0
      %3880 = vmatprep.subr.mxu0 0.0
      %3881 = vmatpush1.msra.mxu0 0.0
      %3882 = vmatprep.subr.mxu0 0.0
      %3883 = vmatpush1.msra.mxu0 0.0
      %3884 = vmatprep.subr.mxu0 0.0
      %3885 = vmatpush1.msra.mxu0 0.0
      %3886 = vmatprep.subr.mxu0 0.0
      %3887 = vmatpush1.msra.mxu0 0.0
      %3888 = vmatprep.subr.mxu0 0.0
      %3889 = vmatpush1.msra.mxu0 0.0
      %3890 = vmatprep.subr.mxu0 0.0
      %3891 = vmatpush1.msra.mxu0 0.0
      %3892 = vmatprep.subr.mxu0 0.0
      %3893 = vmatpush1.msra.mxu0 0.0
      %3894 = vmatprep.subr.mxu0 0.0
      %3895 = vmatpush1.msra.mxu0 0.0
      %3896 = vmatprep.subr.mxu0 0.0
      %3897 = vmatpush1.msra.mxu0 0.0
      %3898 = vmatprep.subr.mxu0 0.0
      %3899 = vmatpush1.msra.mxu0 0.0
      %3900 = vmatprep.mubr.f32.mxu0 0.0
      %3901 = vmatmul.mubr.f32.gmra.mrb[0].mxu0 %v3828
      %v3902 = vpop.f32.mrb[0].mxu0
      %v3903 = vadd.f32 %v3825, %v3902
      %v3904 = vpop.f32.mrb[0].mxu0
      %3905 = vmatprep.mubr.f32.mxu0 0.0
      %3906 = vmatmul.mubr.f32.gmra.mrb[0].mxu0 %v3831
      %v3907 = vpop.f32.mrb[0].mxu0
      %v3908 = vadd.f32 %v3825, %v3907
      %v3909 = vpop.f32.mrb[0].mxu0
      %3910 = vmatprep.mubr.f32.mxu0 0.0
      %3911 = vmatmul.mubr.f32.gmra.mrb[0].mxu0 %v3834
      %v3912 = vpop.f32.mrb[0].mxu0
      %v3913 = vadd.f32 %v3825, %v3912
      %v3914 = vpop.f32.mrb[0].mxu0
      %3915 = vdwg.mxu0
      %v3916 = vld [vmem:[%s1077] sm:$0xff]
      %v3917 = vld [vmem:[%s1077 + $0x8] sm:$0xff]
      %v3918 = vld [vmem:[%s1077 + $0x10] sm:$0xff]
      %v3919 = vld [vmem:[%s1077 + $0x18] sm:$0xff]
      %v3920 = vld [vmem:[%s1080] sm:$0x1]
      %v3922 = vlaneseq
      %v3923 = vshrl.u32 %v3922, 7
      %v3924 = vsub.s32 0, %v3923
      %v3925 = vrot.slane %v3920, %v3924
      %3927 = vmatprep.subr.mxu0 0.0
      %3928 = vmatpush1.msra.mxu0 %v3916
      %3929 = vmatprep.subr.mxu0 0.0
      %3930 = vmatpush1.msra.mxu0 %v3917
      %3931 = vmatprep.subr.mxu0 0.0
      %3932 = vmatpush1.msra.mxu0 %v3918
      %3933 = vmatprep.subr.mxu0 0.0
      %3934 = vmatpush1.msra.mxu0 %v3919
      %3935 = vmatprep.subr.mxu0 0.0
      %3936 = vmatpush1.msra.mxu0 0.0
      %3937 = vmatprep.subr.mxu0 0.0
      %3938 = vmatpush1.msra.mxu0 0.0
      %3939 = vmatprep.subr.mxu0 0.0
      %3940 = vmatpush1.msra.mxu0 0.0
      %3941 = vmatprep.subr.mxu0 0.0
      %3942 = vmatpush1.msra.mxu0 0.0
      %3943 = vmatprep.subr.mxu0 0.0
      %3944 = vmatpush1.msra.mxu0 0.0
      %3945 = vmatprep.subr.mxu0 0.0
      %3946 = vmatpush1.msra.mxu0 0.0
      %3947 = vmatprep.subr.mxu0 0.0
      %3948 = vmatpush1.msra.mxu0 0.0
      %3949 = vmatprep.subr.mxu0 0.0
      %3950 = vmatpush1.msra.mxu0 0.0
      %3951 = vmatprep.subr.mxu0 0.0
      %3952 = vmatpush1.msra.mxu0 0.0
      %3953 = vmatprep.subr.mxu0 0.0
      %3954 = vmatpush1.msra.mxu0 0.0
      %3955 = vmatprep.subr.mxu0 0.0
      %3956 = vmatpush1.msra.mxu0 0.0
      %3957 = vmatprep.subr.mxu0 0.0
      %3958 = vmatpush1.msra.mxu0 0.0
      %3959 = vmatprep.subr.mxu0 0.0
      %3960 = vmatpush1.msra.mxu0 0.0
      %3961 = vmatprep.subr.mxu0 0.0
      %3962 = vmatpush1.msra.mxu0 0.0
      %3963 = vmatprep.subr.mxu0 0.0
      %3964 = vmatpush1.msra.mxu0 0.0
      %3965 = vmatprep.subr.mxu0 0.0
      %3966 = vmatpush1.msra.mxu0 0.0
      %3967 = vmatprep.subr.mxu0 0.0
      %3968 = vmatpush1.msra.mxu0 0.0
      %3969 = vmatprep.subr.mxu0 0.0
      %3970 = vmatpush1.msra.mxu0 0.0
      %3971 = vmatprep.subr.mxu0 0.0
      %3972 = vmatpush1.msra.mxu0 0.0
      %3973 = vmatprep.subr.mxu0 0.0
      %3974 = vmatpush1.msra.mxu0 0.0
      %3975 = vmatprep.subr.mxu0 0.0
      %3976 = vmatpush1.msra.mxu0 0.0
      %3977 = vmatprep.subr.mxu0 0.0
      %3978 = vmatpush1.msra.mxu0 0.0
      %3979 = vmatprep.subr.mxu0 0.0
      %3980 = vmatpush1.msra.mxu0 0.0
      %3981 = vmatprep.subr.mxu0 0.0
      %3982 = vmatpush1.msra.mxu0 0.0
      %3983 = vmatprep.subr.mxu0 0.0
      %3984 = vmatpush1.msra.mxu0 0.0
      %3985 = vmatprep.subr.mxu0 0.0
      %3986 = vmatpush1.msra.mxu0 0.0
      %3987 = vmatprep.subr.mxu0 0.0
      %3988 = vmatpush1.msra.mxu0 0.0
      %3989 = vmatprep.subr.mxu0 0.0
      %3990 = vmatpush1.msra.mxu0 0.0
      %3991 = vmatprep.mubr.f32.mxu0 0.0
      %3992 = vmatmul.mubr.f32.gmra.mrb[0].mxu0 %v3828
      %v3993 = vpop.f32.mrb[0].mxu0
      %v3994 = vadd.f32 %v3925, %v3993
      %v3995 = vpop.f32.mrb[0].mxu0
      %3996 = vmatprep.mubr.f32.mxu0 0.0
      %3997 = vmatmul.mubr.f32.gmra.mrb[0].mxu0 %v3831
      %v3998 = vpop.f32.mrb[0].mxu0
      %v3999 = vadd.f32 %v3925, %v3998
      %v4000 = vpop.f32.mrb[0].mxu0
      %4001 = vmatprep.mubr.f32.mxu0 0.0
      %4002 = vmatmul.mubr.f32.gmra.mrb[0].mxu0 %v3834
      %v4003 = vpop.f32.mrb[0].mxu0
      %v4004 = vadd.f32 %v3925, %v4003
      %v4005 = vpop.f32.mrb[0].mxu0
      %4006 = vdwg.mxu0
      %v4007 = vxor.u32 %v3903, 2147483648
      %v4008 = vxor.u32 %v3908, 2147483648
      %v4009 = vxor.u32 %v3913, 2147483648
      %v4010 = vmul.f32 %v4007, 1.442695
      %v4011 = vpow.pop %v4010
      %v4012 = vmul.f32 %v4008, 1.442695
      %v4013 = vpow.pop %v4012
      %v4014 = vmul.f32 %v4009, 1.442695
      %v4015 = vpow.pop %v4014
      %v4016 = vadd.f32 %v4011, 1.0
      %v4017 = vadd.f32 %v4013, 1.0
      %v4018 = vadd.f32 %v4015, 1.0
      %v4019 = vrcp.pop %v4016
      %v4020 = vmul.f32 1.0, %v4019
      %v4021 = vrcp.pop %v4017
      %v4022 = vmul.f32 1.0, %v4021
      %v4023 = vrcp.pop %v4018
      %v4024 = vmul.f32 1.0, %v4023
      %v4025 = vmul.f32 %v3903, %v4020
      %v4026 = vmul.f32 %v3908, %v4022
      %v4027 = vmul.f32 %v3913, %v4024
      %v4028 = vmul.f32 %v4025, %v3994
      %v4029 = vmul.f32 %v4026, %v3999
      %v4030 = vmul.f32 %v4027, %v4004
      %v4031 = vld [vmem:[%s1085] sm:$0xff]
      %v4032 = vld [vmem:[%s1085 + $0x8] sm:$0xff]
      %v4033 = vld [vmem:[%s1085 + $0x10] sm:$0xff]
      %v4034 = vld [vmem:[%s1085 + $0x18] sm:$0xff]
      %v4035 = vld [vmem:[%s1085 + $0x20] sm:$0xff]
      %v4036 = vld [vmem:[%s1085 + $0x28] sm:$0xff]
      %v4037 = vld [vmem:[%s1085 + $0x30] sm:$0xff]
      %v4038 = vld [vmem:[%s1085 + $0x38] sm:$0xff]
      %v4039 = vld [vmem:[%s1085 + $0x40] sm:$0xff]
      %v4040 = vld [vmem:[%s1085 + $0x48] sm:$0xff]
      %v4041 = vld [vmem:[%s1085 + $0x50] sm:$0x1f]
      %v4042 = vld [vmem:[%s1088] sm:$0x1]
      %v4044 = vlaneseq
      %v4045 = vshrl.u32 %v4044, 7
      %v4046 = vsub.s32 0, %v4045
      %v4047 = vrot.slane %v4042, %v4046
      %vm4049 = vcmask 695296
      %v4051 = vsel %vm4049, %v4028, 0
      %v4054 = vsel %vm4049, %v4029, 0
      %v4057 = vsel %vm4049, %v4030, 0
      %vm4059 = vcmask 1044480
      %v4061 = vsel %vm4059, %v4041, 0
      %4063 = vmatprep.subr.mxu0 0.0
      %4064 = vmatpush1.msra.mxu0 %v4031
      %4065 = vmatprep.subr.mxu0 0.0
      %4066 = vmatpush1.msra.mxu0 %v4032
      %4067 = vmatprep.subr.mxu0 0.0
      %4068 = vmatpush1.msra.mxu0 %v4033
      %4069 = vmatprep.subr.mxu0 0.0
      %4070 = vmatpush1.msra.mxu0 %v4034
      %4071 = vmatprep.subr.mxu0 0.0
      %4072 = vmatpush1.msra.mxu0 %v4035
      %4073 = vmatprep.subr.mxu0 0.0
      %4074 = vmatpush1.msra.mxu0 %v4036
      %4075 = vmatprep.subr.mxu0 0.0
      %4076 = vmatpush1.msra.mxu0 %v4037
      %4077 = vmatprep.subr.mxu0 0.0
      %4078 = vmatpush1.msra.mxu0 %v4038
      %4079 = vmatprep.subr.mxu0 0.0
      %4080 = vmatpush1.msra.mxu0 %v4039
      %4081 = vmatprep.subr.mxu0 0.0
      %4082 = vmatpush1.msra.mxu0 %v4040
      %4083 = vmatprep.subr.mxu0 0.0
      %4084 = vmatpush1.msra.mxu0 %v4061
      %4085 = vmatprep.subr.mxu0 0.0
      %4086 = vmatpush1.msra.mxu0 0.0
      %4087 = vmatprep.subr.mxu0 0.0
      %4088 = vmatpush1.msra.mxu0 0.0
      %4089 = vmatprep.subr.mxu0 0.0
      %4090 = vmatpush1.msra.mxu0 0.0
      %4091 = vmatprep.subr.mxu0 0.0
      %4092 = vmatpush1.msra.mxu0 0.0
      %4093 = vmatprep.subr.mxu0 0.0
      %4094 = vmatpush1.msra.mxu0 0.0
      %4095 = vmatprep.subr.mxu0 0.0
      %4096 = vmatpush1.msra.mxu0 0.0
      %4097 = vmatprep.subr.mxu0 0.0
      %4098 = vmatpush1.msra.mxu0 0.0
      %4099 = vmatprep.subr.mxu0 0.0
      %4100 = vmatpush1.msra.mxu0 0.0
      %4101 = vmatprep.subr.mxu0 0.0
      %4102 = vmatpush1.msra.mxu0 0.0
      %4103 = vmatprep.subr.mxu0 0.0
      %4104 = vmatpush1.msra.mxu0 0.0
      %4105 = vmatprep.subr.mxu0 0.0
      %4106 = vmatpush1.msra.mxu0 0.0
      %4107 = vmatprep.subr.mxu0 0.0
      %4108 = vmatpush1.msra.mxu0 0.0
      %4109 = vmatprep.subr.mxu0 0.0
      %4110 = vmatpush1.msra.mxu0 0.0
      %4111 = vmatprep.subr.mxu0 0.0
      %4112 = vmatpush1.msra.mxu0 0.0
      %4113 = vmatprep.subr.mxu0 0.0
      %4114 = vmatpush1.msra.mxu0 0.0
      %4115 = vmatprep.subr.mxu0 0.0
      %4116 = vmatpush1.msra.mxu0 0.0
      %4117 = vmatprep.subr.mxu0 0.0
      %4118 = vmatpush1.msra.mxu0 0.0
      %4119 = vmatprep.subr.mxu0 0.0
      %4120 = vmatpush1.msra.mxu0 0.0
      %4121 = vmatprep.subr.mxu0 0.0
      %4122 = vmatpush1.msra.mxu0 0.0
      %4123 = vmatprep.subr.mxu0 0.0
      %4124 = vmatpush1.msra.mxu0 0.0
      %4125 = vmatprep.subr.mxu0 0.0
      %4126 = vmatpush1.msra.mxu0 0.0
      %4127 = vmatprep.mubr.f32.mxu0 0.0
      %4128 = vmatmul.mubr.f32.gmra.mrb[0].mxu0 %v4051
      %v4129 = vpop.f32.mrb[0].mxu0
      %v4130 = vadd.f32 %v4047, %v4129
      %v4131 = vpop.f32.mrb[0].mxu0
      %4132 = vmatprep.mubr.f32.mxu0 0.0
      %4133 = vmatmul.mubr.f32.gmra.mrb[0].mxu0 %v4054
      %v4134 = vpop.f32.mrb[0].mxu0
      %v4135 = vadd.f32 %v4047, %v4134
      %v4136 = vpop.f32.mrb[0].mxu0
      %4137 = vmatprep.mubr.f32.mxu0 0.0
      %4138 = vmatmul.mubr.f32.gmra.mrb[0].mxu0 %v4057
      %v4139 = vpop.f32.mrb[0].mxu0
      %v4140 = vadd.f32 %v4047, %v4139
      %v4141 = vpop.f32.mrb[0].mxu0
      %4142 = vdwg.mxu0
      %v4143 = vadd.f32 %v3813, %v4130
      %v4144 = vadd.f32 %v3814, %v4135
      %v4145 = vadd.f32 %v3815, %v4140
      %v4146 = vld [vmem:[%s1093] sm:$0xff]
      %v4147 = vld [vmem:[%s1093 + $0x8] sm:$0xff]
      %v4148 = vld [vmem:[%s1093 + $0x10] sm:$0x1]
      %v4149 = vld [vmem:[%s1098] sm:$0xff]
      %v4150 = vld [vmem:[%s1098 + $0x8] sm:$0xff]
      %v4151 = vld [vmem:[%s1098 + $0x10] sm:$0x1]
      %v4152 = vsel %vm1335, %v4143, 0.0
      %v4153 = vsel %vm1335, %v4144, 0.0
      %v4154 = vadd.f32 %v4152, %v4153
      %v4155 = vsel %vm3733, %v4145, 0.0
      %v4156 = vadd.f32 %v4154, %v4155
      %4157 = vadd.xlane.f32.xlu0 %v4156
      %v4158 = vpop.xlane.xlu0 %4157
      %v4159 = vrot.slane %v4158, 4
      %v4160 = vadd.f32 %v4158, %v4159
      %v4161 = vrot.slane %v4160, 2
      %v4162 = vadd.f32 %v4160, %v4161
      %v4163 = vrot.slane %v4162, 1
      %v4164 = vadd.f32 %v4162, %v4163
      %s4165 = vtos %v4164
      %v4166 = vrcp.pop 544.0
      %s4167 = vtos %v4166
      %s4168 = smul.f32 %s4165, %s4167
      %v4169 = vstv %s4168
      %v4170 = vsub.f32 %v4143, %v4169
      %v4171 = vsub.f32 %v4144, %v4169
      %v4172 = vsub.f32 %v4145, %v4169
      %v4173 = vmul.f32 %v4170, %v4170
      %v4174 = vmul.f32 %v4171, %v4171
      %v4175 = vmul.f32 %v4172, %v4172
      %v4176 = vsel %vm1335, %v4173, 0.0
      %v4177 = vsel %vm1335, %v4174, 0.0
      %v4178 = vadd.f32 %v4176, %v4177
      %v4179 = vsel %vm3733, %v4175, 0.0
      %v4180 = vadd.f32 %v4178, %v4179
      %4181 = vadd.xlane.f32.xlu0 %v4180
      %v4182 = vpop.xlane.xlu0 %4181
      %v4183 = vrot.slane %v4182, 4
      %v4184 = vadd.f32 %v4182, %v4183
      %v4185 = vrot.slane %v4184, 2
      %v4186 = vadd.f32 %v4184, %v4185
      %v4187 = vrot.slane %v4186, 1
      %v4188 = vadd.f32 %v4186, %v4187
      %s4189 = vtos %v4188
      %v4190 = vrcp.pop 544.0
      %s4191 = vtos %v4190
      %s4192 = smul.f32 %s4189, %s4191
      %s4193 = sadd.f32 %s4192, 1e-05
      %v4194 = vstv %s4193
      %v4195 = vrsqrt.pop %v4194
      %s4196 = vtos %v4195
      %v4197 = vstv %s4196
      %v4198 = vmul.f32 %v4170, %v4197
      %v4199 = vmul.f32 %v4171, %v4197
      %v4200 = vmul.f32 %v4172, %v4197
      %4202 = vset.pattern.permute.xlu0 0
      %4203 = vperm.xlu0 %4202, %v4146
      %v4204 = vpop.permute.xlu0 %4203
      %4207 = vset.pattern.permute.xlu0 0
      %4208 = vperm.xlu0 %4207, %v4147
      %v4209 = vpop.permute.xlu0 %4208
      %4212 = vset.pattern.permute.xlu0 0
      %4213 = vperm.xlu0 %4212, %v4148
      %v4214 = vpop.permute.xlu0 %4213
      %v4216 = vmul.f32 %v4198, %v4204
      %v4217 = vmul.f32 %v4199, %v4209
      %v4218 = vmul.f32 %v4200, %v4214
      %4220 = vset.pattern.permute.xlu0 0
      %4221 = vperm.xlu0 %4220, %v4149
      %v4222 = vpop.permute.xlu0 %4221
      %4225 = vset.pattern.permute.xlu0 0
      %4226 = vperm.xlu0 %4225, %v4150
      %v4227 = vpop.permute.xlu0 %4226
      %4230 = vset.pattern.permute.xlu0 0
      %4231 = vperm.xlu0 %4230, %v4151
      %v4232 = vpop.permute.xlu0 %4231
      %v4234 = vadd.f32 %v4216, %v4222
      %v4235 = vadd.f32 %v4217, %v4227
      %v4236 = vadd.f32 %v4218, %v4232
      %4237 = vst.msk [vmem:[#allocation2] sm:$0xff] %vm1335, %v4234
      %4238 = vst.msk [vmem:[#allocation2 + $0x8] sm:$0xff] %vm1335, %v4235
      %4239 = vst.msk [vmem:[#allocation2 + $0x10] sm:$0x1] %vm3733, %v4236
      %p4240 = scmp.eq.s32.totalorder %s41, 1
      // Predicated region
      $region125: #{forward.1} parent=119 // pred_check
        %p4241 = pneg %p4240
      $region126: #{forward.1} parent=119 // pred_check_branch
        %4243 = sbr.rel (%p4241) target = $region128
      $region127: #{forward.1} parent=119 // pred_region
        %v4244 = vld [vmem:[%s5] sm:$0xff]
        %v4245 = vld [vmem:[%s5 + $0x8] sm:$0xff]
        %v4246 = vld [vmem:[%s5 + $0x10] sm:$0xff]
        %v4247 = vld [vmem:[%s5 + $0x18] sm:$0xff]
        %v4248 = vld [vmem:[%s6] sm:$0x1]
        %v4250 = vlaneseq
        %v4251 = vshrl.u32 %v4250, 7
        %v4252 = vsub.s32 0, %v4251
        %v4253 = vrot.slane %v4248, %v4252
        %v4256 = vsel %vm1335, %v4234, 0
        %v4259 = vsel %vm1335, %v4235, 0
        %v4262 = vsel %vm1335, %v4236, 0
        %4264 = vmatprep.subr.mxu0 0.0
        %4265 = vmatpush1.msra.mxu0 %v4244
        %4266 = vmatprep.subr.mxu0 0.0
        %4267 = vmatpush1.msra.mxu0 %v4245
        %4268 = vmatprep.subr.mxu0 0.0
        %4269 = vmatpush1.msra.mxu0 %v4246
        %4270 = vmatprep.subr.mxu0 0.0
        %4271 = vmatpush1.msra.mxu0 %v4247
        %4272 = vmatprep.subr.mxu0 0.0
        %4273 = vmatpush1.msra.mxu0 0.0
        %4274 = vmatprep.subr.mxu0 0.0
        %4275 = vmatpush1.msra.mxu0 0.0
        %4276 = vmatprep.subr.mxu0 0.0
        %4277 = vmatpush1.msra.mxu0 0.0
        %4278 = vmatprep.subr.mxu0 0.0
        %4279 = vmatpush1.msra.mxu0 0.0
        %4280 = vmatprep.subr.mxu0 0.0
        %4281 = vmatpush1.msra.mxu0 0.0
        %4282 = vmatprep.subr.mxu0 0.0
        %4283 = vmatpush1.msra.mxu0 0.0
        %4284 = vmatprep.subr.mxu0 0.0
        %4285 = vmatpush1.msra.mxu0 0.0
        %4286 = vmatprep.subr.mxu0 0.0
        %4287 = vmatpush1.msra.mxu0 0.0
        %4288 = vmatprep.subr.mxu0 0.0
        %4289 = vmatpush1.msra.mxu0 0.0
        %4290 = vmatprep.subr.mxu0 0.0
        %4291 = vmatpush1.msra.mxu0 0.0
        %4292 = vmatprep.subr.mxu0 0.0
        %4293 = vmatpush1.msra.mxu0 0.0
        %4294 = vmatprep.subr.mxu0 0.0
        %4295 = vmatpush1.msra.mxu0 0.0
        %4296 = vmatprep.subr.mxu0 0.0
        %4297 = vmatpush1.msra.mxu0 0.0
        %4298 = vmatprep.subr.mxu0 0.0
        %4299 = vmatpush1.msra.mxu0 0.0
        %4300 = vmatprep.subr.mxu0 0.0
        %4301 = vmatpush1.msra.mxu0 0.0
        %4302 = vmatprep.subr.mxu0 0.0
        %4303 = vmatpush1.msra.mxu0 0.0
        %4304 = vmatprep.subr.mxu0 0.0
        %4305 = vmatpush1.msra.mxu0 0.0
        %4306 = vmatprep.subr.mxu0 0.0
        %4307 = vmatpush1.msra.mxu0 0.0
        %4308 = vmatprep.subr.mxu0 0.0
        %4309 = vmatpush1.msra.mxu0 0.0
        %4310 = vmatprep.subr.mxu0 0.0
        %4311 = vmatpush1.msra.mxu0 0.0
        %4312 = vmatprep.subr.mxu0 0.0
        %4313 = vmatpush1.msra.mxu0 0.0
        %4314 = vmatprep.subr.mxu0 0.0
        %4315 = vmatpush1.msra.mxu0 0.0
        %4316 = vmatprep.subr.mxu0 0.0
        %4317 = vmatpush1.msra.mxu0 0.0
        %4318 = vmatprep.subr.mxu0 0.0
        %4319 = vmatpush1.msra.mxu0 0.0
        %4320 = vmatprep.subr.mxu0 0.0
        %4321 = vmatpush1.msra.mxu0 0.0
        %4322 = vmatprep.subr.mxu0 0.0
        %4323 = vmatpush1.msra.mxu0 0.0
        %4324 = vmatprep.subr.mxu0 0.0
        %4325 = vmatpush1.msra.mxu0 0.0
        %4326 = vmatprep.subr.mxu0 0.0
        %4327 = vmatpush1.msra.mxu0 0.0
        %4328 = vmatprep.mubr.f32.mxu0 0.0
        %4329 = vmatmul.mubr.f32.gmra.mrb[0].mxu0 %v4256
        %v4330 = vpop.f32.mrb[0].mxu0
        %v4331 = vadd.f32 %v4253, %v4330
        %v4332 = vpop.f32.mrb[0].mxu0
        %4333 = vmatprep.mubr.f32.mxu0 0.0
        %4334 = vmatmul.mubr.f32.gmra.mrb[0].mxu0 %v4259
        %v4335 = vpop.f32.mrb[0].mxu0
        %v4336 = vadd.f32 %v4253, %v4335
        %v4337 = vpop.f32.mrb[0].mxu0
        %4338 = vmatprep.mubr.f32.mxu0 0.0
        %4339 = vmatmul.mubr.f32.gmra.mrb[0].mxu0 %v4262
        %v4340 = vpop.f32.mrb[0].mxu0
        %v4341 = vadd.f32 %v4253, %v4340
        %v4342 = vpop.f32.mrb[0].mxu0
        %4343 = vdwg.mxu0
        %vm4344 = vcmask 23552
        %4345 = vst.msk [vmem:[%s1103] sm:$0xff] %vm4344, %v4331
        %4346 = vst.msk [vmem:[%s1103 + $0x8] sm:$0xff] %vm4344, %v4336
        %vm4347 = vcmask 16384
        %4348 = vst.msk [vmem:[%s1103 + $0x10] sm:$0x1] %vm4347, %v4341
      $region128: #{forward.1} parent=119 // pred_fallthru
        _
      %p4349 = scmp.lt.s32.totalorder %s40, 1
      %s4350 = scalar_select %p4349, %s40, 1
      %s4351 = smul.addr %s4350, 3
      %s4352 = smul.addr %s4351, 8
      %s4353 = scalar_lea.vmem %s25, %s4352
      // Predicated region
      $region129: #{forward.1} parent=119 // pred_check
        %p4354 = pneg %p686
      $region130: #{forward.1} parent=119 // pred_check_branch
        %4356 = sbr.rel (%p4354) target = $region132
      $region131: #{forward.1} parent=119 // pred_region
        _
      $region132: #{forward.1} parent=119 // pred_fallthru
        _
    $region120: #{forward.1} parent=5 // pred_fallthru
      _
    %p4357 = scmp.le.s32.totalorder 2, %s31
    // Predicated region
    $region133: #{forward.1} parent=5 // pred_check
      %p4358 = pneg %p4357
    $region134: #{forward.1} parent=5 // pred_check_branch
      %4360 = sbr.rel (%p4358) target = $region136
    $region135: #{forward.1} parent=5 // pred_region
      %s4361 = ssub.s32 %s31, 2
      // Predicated region
      $region137: #{forward.1} parent=135 // pred_check
        %p4362 = pneg %p692
      $region138: #{forward.1} parent=135 // pred_check_branch
        %4364 = sbr.rel (%p4362) target = $region140
      $region139: #{forward.1} parent=135 // pred_region
        %p4365 = scmp.lt.s32.totalorder %s42, 1
        %s4366 = scalar_select %p4365, %s42, 1
        %s4367 = smul.addr %s4366, 3
        %s4368 = smul.addr %s4367, 8
        %s4369 = scalar_lea.vmem %s25, %s4368
      $region140: #{forward.1} parent=135 // pred_fallthru
        _
    $region136: #{forward.1} parent=5 // pred_fallthru
      _
  $region6: #{forward.1} parent=0 // loop_footer
    %s35 = sadd.s32 1, %s31
  $region7: #{forward.1} parent=0 // loop_footer_branch
    %30 = sbr.rel target = $region3
  $region8: #{forward.1} parent=0 // loop_exit
    _

</llo_original>
